<compile_context>
chip_gen: v7x
topology: tpu7x:2x2x1
jax: 0.10.0
libtpu: 0.0.40
codegen_flags: <defaults>
</compile_context>

<pallas_src>
import functools

import jax
import jax.numpy as jnp
from jax.experimental import pallas as pl
from jax.experimental.pallas import tpu as pltpu


def _group_butterfly(x, lane, group, op):
    """Lane-dense all-reduce of `op` within contiguous lane groups of size `group`.

    `group` must be a power of two.  log2(group) XLU rolls + VPU selects; never
    touches the MXU and never leaves the lane-dense (rows, NK) layout.
    """
    nk = x.shape[-1]
    s = 1
    while s < group:
        up = pltpu.roll(x, shift=nk - s, axis=x.ndim - 1)   # value from lane i+s
        dn = pltpu.roll(x, shift=s, axis=x.ndim - 1)        # value from lane i-s
        # Bit `s` of the in-group offset picks the partner; both choices stay
        # inside the same group of `group` lanes, so no cross-group mixing.
        x = op(x, jnp.where((lane & s) == 0, up, dn))
        s *= 2
    return x


def iwae_kernel(x_ref, g_ref,
                w1_ref, b1_ref, w2_ref, b2_ref, w3_ref, b3_ref,
                w4_ref, b4_ref, w5_ref, b5_ref, w6_ref, b6_ref,
                p_ref, z_ref, *, temp, categorical_dim):
    x = x_ref[...]                                   # bf16 (tile_m, Dp)

    # ---- encoder: Linear(D,512)+ReLU -> Linear(512,256)+ReLU -> Linear(256,N*K)
    h = jnp.dot(x, w1_ref[...], preferred_element_type=jnp.float32) + b1_ref[...]
    h = jnp.maximum(h, 0.0).astype(jnp.bfloat16)
    h = jnp.dot(h, w2_ref[...], preferred_element_type=jnp.float32) + b2_ref[...]
    h = jnp.maximum(h, 0.0).astype(jnp.bfloat16)
    logits = jnp.dot(h, w3_ref[...], preferred_element_type=jnp.float32) + b3_ref[...]

    # ---- gumbel-softmax over contiguous groups of K along the last axis
    # (identical to view(S,B,N,K) + softmax(dim=-1)).  All in f32, lane-dense.
    y = (logits + g_ref[...]) * (1.0 / temp)
    lane = jax.lax.broadcasted_iota(jnp.int32, y.shape, y.ndim - 1)
    gmax = _group_butterfly(y, lane, categorical_dim, jnp.maximum)   # per-group max
    e = jnp.exp(y - gmax)                                            # in (0, 1]
    denom = _group_butterfly(e, lane, categorical_dim, jnp.add)      # >= 1, exact f32
    inv = pl.reciprocal(denom, approx=True)       # EUP slot
    inv = inv * (2.0 - denom * inv)               # one Newton step -> ~1e-6 rel err
    z = jnp.minimum(e * inv, 1.0)
    z_ref[...] = z

    # ---- decoder: Linear(N*K,256)+ReLU -> Linear(256,512)+ReLU -> Linear(512,D)+Sigmoid
    d = jnp.dot(z.astype(jnp.bfloat16), w4_ref[...],
                preferred_element_type=jnp.float32) + b4_ref[...]
    d = jnp.maximum(d, 0.0).astype(jnp.bfloat16)
    d = jnp.dot(d, w5_ref[...], preferred_element_type=jnp.float32) + b5_ref[...]
    d = jnp.maximum(d, 0.0).astype(jnp.bfloat16)
    t = jnp.dot(d, w6_ref[...], preferred_element_type=jnp.float32) + b6_ref[...]
    # sigmoid with the divide on the EUP slot; clamp keeps p in [0, 1] despite the
    # approximate reciprocal.  p is stored as bf16 (halves the HBM writeback).
    p = jnp.minimum(pl.reciprocal(1.0 + jnp.exp(-t), approx=True), 1.0)
    p_ref[...] = p.astype(p_ref.dtype)


def _row_tiling(M, tile_m):
    """Pick (row_tile, padded_rows).

    Row tile is a multiple of 16 (bf16 sublane packing), never much larger than
    the data (no 8x zero-row waste at demo sizes), and medium workloads split
    into >=2 tiles so the 'parallel' grid axis can shard across v7x's two TCs.
    """
    m16 = max(16, pl.cdiv(M, 16) * 16)
    tile_m = max(16, (tile_m // 16) * 16)
    if m16 <= tile_m:
        tile = pl.cdiv(pl.cdiv(m16, 2), 16) * 16 if m16 >= 32 else m16
    else:
        tile = tile_m
    Mp = pl.cdiv(m16, tile) * tile
    return tile, Mp


def iwae_forward(x, gumbel_noise, params, temp, *,
                 dim_h1, categorical_dim, tile_m=256):
    """x: [S, B, D]; gumbel_noise: [S, B, N*K].
    Returns (p [S,B,D] bf16, z [S,B,N*K] f32)."""
    S, B, D = x.shape
    NK = dim_h1 * categorical_dim
    assert NK % 128 == 0, "N*K must be a multiple of 128 for lane-dense layout"
    assert categorical_dim & (categorical_dim - 1) == 0, \
        "categorical_dim must be a power of two for the butterfly group reduce"
    M = S * B

    tile, Mp = _row_tiling(M, tile_m)
    n_tiles = Mp // tile
    Dp = pl.cdiv(D, 128) * 128      # pad image dim to lane-dense width

    # Build padded inputs directly in their kernel dtypes (no padded f32 copies).
    xf = jnp.zeros((Mp, Dp), jnp.bfloat16).at[:M, :D].set(
        x.reshape(M, D).astype(jnp.bfloat16))
    gf = jnp.zeros((Mp, NK), jnp.float32).at[:M, :].set(
        gumbel_noise.reshape(M, NK).astype(jnp.float32))

    (w1, b1, w2, b2, w3, b3, w4, b4, w5, b5, w6, b6) = params

    # Zero-pad w1 rows / w6+b6 cols to the padded image dim (zeros are exact, so
    # results on the real D columns/rows are unchanged).
    w1p = jnp.zeros((Dp, w1.shape[1]), jnp.float32).at[:D, :].set(w1)
    w6p = jnp.zeros((w6.shape[0], Dp), jnp.float32).at[:, :D].set(w6)
    b6p = jnp.zeros((1, Dp), jnp.float32).at[:, :D].set(b6)

    # bf16 weights for the MXU; biases stay f32 (added post-accumulation).
    # TODO(synk): on v7x, w1/w6 (the two biggest layers) could be fp8 if the
    # accuracy budget allows; validate against the f32 reference first.
    w1b, w2b, w3b = (w.astype(jnp.bfloat16) for w in (w1p, w2, w3))
    w4b, w5b, w6b = (w.astype(jnp.bfloat16) for w in (w4, w5, w6p))

    def resident(a):
        # whole-array block, constant index across the row grid: DMA'd once and
        # resident in VMEM for every grid step (default buffering kept to stay
        # on the well-trodden lowering path; VMEM is not the binding resource).
        return pl.BlockSpec(a.shape, lambda i: (0, 0))

    def stream(cols):
        # Row-streamed tensors: deepen buffering to 3 only when there are enough
        # grid steps for it to matter (hides x prefetch / p writeback on v5e/v6e).
        if n_tiles >= 3:
            return pl.BlockSpec((tile, cols), lambda i: (i, 0),
                                pipeline_mode=pl.Buffered(3))
        return pl.BlockSpec((tile, cols), lambda i: (i, 0))

    kernel = functools.partial(iwae_kernel, temp=float(temp),
                               categorical_dim=categorical_dim)

    p_flat, z_flat = pl.pallas_call(
        kernel,
        out_shape=(jax.ShapeDtypeStruct((Mp, Dp), jnp.bfloat16),   # p in bf16
                   jax.ShapeDtypeStruct((Mp, NK), jnp.float32)),
        grid=(n_tiles,),
        in_specs=[stream(Dp), stream(NK),
                  resident(w1b), resident(b1), resident(w2b), resident(b2),
                  resident(w3b), resident(b3), resident(w4b), resident(b4),
                  resident(w5b), resident(b5), resident(w6b), resident(b6p)],
        out_specs=(pl.BlockSpec((tile, Dp), lambda i: (i, 0)),
                   pl.BlockSpec((tile, NK), lambda i: (i, 0))),
        compiler_params=pltpu.CompilerParams(
            dimension_semantics=("parallel",),   # row axis shardable across TCs
            vmem_limit_bytes=32 << 20),
    )(xf, gf,
      w1b, b1, w2b, b2, w3b, b3,
      w4b, b4, w5b, b5, w6b, b6p)

    # TODO(synk): for large M, return the padded (Mp, Dp) layout and fuse this
    # slice into the consumer to avoid an extra full-size HBM pass.
    p = p_flat[:M, :D].reshape(S, B, D)
    z = z_flat[:M, :].reshape(S, B, NK)
    return p, z


def iwae_reference(x, gumbel_noise, params, temp, *, dim_h1, categorical_dim):
    """Plain-JAX f32 forward matching IWAE_1.forward (for a loose parity check)."""
    S, B, D = x.shape
    (w1, b1, w2, b2, w3, b3, w4, b4, w5, b5, w6, b6) = params
    h = jax.nn.relu(x.reshape(S * B, D) @ w1 + b1)
    h = jax.nn.relu(h @ w2 + b2)
    logits = h @ w3 + b3
    y = (logits + gumbel_noise.reshape(S * B, -1)) / temp
    z = jax.nn.softmax(y.reshape(S * B, dim_h1, categorical_dim), axis=-1)
    z = z.reshape(S * B, dim_h1 * categorical_dim)
    d = jax.nn.relu(z @ w4 + b4)
    d = jax.nn.relu(d @ w5 + b5)
    p = jax.nn.sigmoid(d @ w6 + b6)
    return p.reshape(S, B, D), z.reshape(S, B, -1)


def init_params(key, dim_image_vars, dim_h1, categorical_dim):
    """Deterministic synthetic init matching the nn.Linear shapes in IWAE_1."""
    NK = dim_h1 * categorical_dim
    dims = [(dim_image_vars, 512), (512, 256), (256, NK),      # encoder
            (NK, 256), (256, 512), (512, dim_image_vars)]       # decoder
    params = []
    for (fan_in, fan_out) in dims:
        key, kw, kb = jax.random.split(key, 3)
        bound = 1.0 / jnp.sqrt(fan_in)
        w = jax.random.uniform(kw, (fan_in, fan_out), jnp.float32, -bound, bound)
        b = jax.random.uniform(kb, (1, fan_out), jnp.float32, -bound, bound)
        params += [w, b]
    return tuple(params)


def sample_gumbel(key, shape, eps=1e-20):
    u = jax.random.uniform(key, shape, jnp.float32, 0.0, 1.0)
    return -jnp.log(-jnp.log(u + eps) + eps)


if __name__ == "__main__":
    # small, module-consistent shapes
    S, B = 2, 8                      # num_sample, batch
    dim_image_vars = 784
    dim_h1, categorical_dim = 8, 16  # N, K  -> N*K = 128
    temp = 0.7

    root = jax.random.PRNGKey(0)
    k_x, k_g, k_p = jax.random.split(root, 3)

    x = jax.random.uniform(k_x, (S, B, dim_image_vars), jnp.float32, 0.0, 1.0)
    gnoise = sample_gumbel(k_g, (S, B, dim_h1 * categorical_dim))
    params = init_params(k_p, dim_image_vars, dim_h1, categorical_dim)

    p, z = iwae_forward(x, gnoise, params, temp,
                        dim_h1=dim_h1, categorical_dim=categorical_dim)
    jax.block_until_ready((p, z))

    assert p.shape == (S, B, dim_image_vars)
    assert z.shape == (S, B, dim_h1 * categorical_dim)

    # group softmax sums to 1 (exact butterfly denom + Newton-refined reciprocal)
    gsums = z.reshape(S, B, dim_h1, categorical_dim).sum(-1)
    assert bool(jnp.allclose(gsums, 1.0, atol=2e-3)), float(jnp.abs(gsums - 1).max())
    assert bool(jnp.all((z >= 0) & (z <= 1)))
    assert bool(jnp.all((p >= 0) & (p <= 1)))

    # loose parity with a plain-JAX f32 forward (kernel uses bf16 matmuls + bf16 p)
    p_jax, z_jax = iwae_reference(x, gnoise, params, temp,
                                  dim_h1=dim_h1, categorical_dim=categorical_dim)
    assert float(jnp.max(jnp.abs(z - z_jax))) < 5e-2
    assert float(jnp.max(jnp.abs(p.astype(jnp.float32) - p_jax))) < 5e-2

    print("KERNEL_OK")
</pallas_src>

<mosaic_0001>
module attributes {stable_mosaic.version = 11 : i64} {
  func.func @iwae_kernel(%arg0: i32, %arg1: memref<16x896xbf16, #tpu.memory_space<vmem>>, %arg2: memref<16x128xf32, #tpu.memory_space<vmem>>, %arg3: memref<896x512xbf16, #tpu.memory_space<vmem>>, %arg4: memref<1x512xf32, #tpu.memory_space<vmem>>, %arg5: memref<512x256xbf16, #tpu.memory_space<vmem>>, %arg6: memref<1x256xf32, #tpu.memory_space<vmem>>, %arg7: memref<256x128xbf16, #tpu.memory_space<vmem>>, %arg8: memref<1x128xf32, #tpu.memory_space<vmem>>, %arg9: memref<128x256xbf16, #tpu.memory_space<vmem>>, %arg10: memref<1x256xf32, #tpu.memory_space<vmem>>, %arg11: memref<256x512xbf16, #tpu.memory_space<vmem>>, %arg12: memref<1x512xf32, #tpu.memory_space<vmem>>, %arg13: memref<512x896xbf16, #tpu.memory_space<vmem>>, %arg14: memref<1x896xf32, #tpu.memory_space<vmem>>, %arg15: memref<16x896xbf16, #tpu.memory_space<vmem>>, %arg16: memref<16x128xf32, #tpu.memory_space<vmem>>) attributes {dimension_semantics = [#tpu.dimension_semantics<parallel>], iteration_bounds = array<i64: 1>, scalar_prefetch = 0 : i64, scratch_operands = 0 : i64, tpu.core_type = #tpu.core_type<tc>, window_params = [{transform_indices = @transform_0, window_bounds = array<i64: 16, 896>}, {transform_indices = @transform_1, window_bounds = array<i64: 16, 128>}, {pipeline_mode = #tpu.pipeline_mode<synchronous>, transform_indices = @transform_2, window_bounds = array<i64: 896, 512>}, {pipeline_mode = #tpu.pipeline_mode<synchronous>, transform_indices = @transform_3, window_bounds = array<i64: 1, 512>}, {pipeline_mode = #tpu.pipeline_mode<synchronous>, transform_indices = @transform_4, window_bounds = array<i64: 512, 256>}, {pipeline_mode = #tpu.pipeline_mode<synchronous>, transform_indices = @transform_5, window_bounds = array<i64: 1, 256>}, {pipeline_mode = #tpu.pipeline_mode<synchronous>, transform_indices = @transform_6, window_bounds = array<i64: 256, 128>}, {pipeline_mode = #tpu.pipeline_mode<synchronous>, transform_indices = @transform_7, window_bounds = array<i64: 1, 128>}, {pipeline_mode = #tpu.pipeline_mode<synchronous>, transform_indices = @transform_8, window_bounds = array<i64: 128, 256>}, {pipeline_mode = #tpu.pipeline_mode<synchronous>, transform_indices = @transform_9, window_bounds = array<i64: 1, 256>}, {pipeline_mode = #tpu.pipeline_mode<synchronous>, transform_indices = @transform_10, window_bounds = array<i64: 256, 512>}, {pipeline_mode = #tpu.pipeline_mode<synchronous>, transform_indices = @transform_11, window_bounds = array<i64: 1, 512>}, {pipeline_mode = #tpu.pipeline_mode<synchronous>, transform_indices = @transform_12, window_bounds = array<i64: 512, 896>}, {pipeline_mode = #tpu.pipeline_mode<synchronous>, transform_indices = @transform_13, window_bounds = array<i64: 1, 896>}, {transform_indices = @transform_14, window_bounds = array<i64: 16, 896>}, {transform_indices = @transform_15, window_bounds = array<i64: 16, 128>}]} {
    %c0 = arith.constant 0 : index
    %c0_0 = arith.constant 0 : index
    %0 = vector.load %arg1[%c0, %c0_0] : memref<16x896xbf16, #tpu.memory_space<vmem>>, vector<16x896xbf16>
    %c0_1 = arith.constant 0 : index
    %c0_2 = arith.constant 0 : index
    %1 = vector.load %arg3[%c0_1, %c0_2] : memref<896x512xbf16, #tpu.memory_space<vmem>>, vector<896x512xbf16>
    %cst = arith.constant dense<0.000000e+00> : vector<16x512xf32>
    %2 = tpu.matmul %0, %1, %cst {dimension_numbers = #tpu.dot_dimension_numbers<[1], [0], [0], [1], [0, 0, 1, 1], [], []>} : vector<16x896xbf16>, vector<896x512xbf16>, vector<16x512xf32> -> vector<16x512xf32>
    %c0_3 = arith.constant 0 : index
    %c0_4 = arith.constant 0 : index
    %3 = vector.load %arg4[%c0_3, %c0_4] : memref<1x512xf32, #tpu.memory_space<vmem>>, vector<1x512xf32>
    %4 = vector.broadcast %3 : vector<1x512xf32> to vector<16x512xf32>
    %5 = arith.addf %2, %4 : vector<16x512xf32>
    %cst_5 = arith.constant 0.000000e+00 : f32
    %6 = vector.broadcast %cst_5 : f32 to vector<16x512xf32>
    %7 = arith.maximumf %5, %6 : vector<16x512xf32>
    %8 = arith.truncf %7 : vector<16x512xf32> to vector<16x512xbf16>
    %c0_6 = arith.constant 0 : index
    %c0_7 = arith.constant 0 : index
    %9 = vector.load %arg5[%c0_6, %c0_7] : memref<512x256xbf16, #tpu.memory_space<vmem>>, vector<512x256xbf16>
    %cst_8 = arith.constant dense<0.000000e+00> : vector<16x256xf32>
    %10 = tpu.matmul %8, %9, %cst_8 {dimension_numbers = #tpu.dot_dimension_numbers<[1], [0], [0], [1], [0, 0, 1, 1], [], []>} : vector<16x512xbf16>, vector<512x256xbf16>, vector<16x256xf32> -> vector<16x256xf32>
    %c0_9 = arith.constant 0 : index
    %c0_10 = arith.constant 0 : index
    %11 = vector.load %arg6[%c0_9, %c0_10] : memref<1x256xf32, #tpu.memory_space<vmem>>, vector<1x256xf32>
    %12 = vector.broadcast %11 : vector<1x256xf32> to vector<16x256xf32>
    %13 = arith.addf %10, %12 : vector<16x256xf32>
    %cst_11 = arith.constant 0.000000e+00 : f32
    %14 = vector.broadcast %cst_11 : f32 to vector<16x256xf32>
    %15 = arith.maximumf %13, %14 : vector<16x256xf32>
    %16 = arith.truncf %15 : vector<16x256xf32> to vector<16x256xbf16>
    %c0_12 = arith.constant 0 : index
    %c0_13 = arith.constant 0 : index
    %17 = vector.load %arg7[%c0_12, %c0_13] : memref<256x128xbf16, #tpu.memory_space<vmem>>, vector<256x128xbf16>
    %cst_14 = arith.constant dense<0.000000e+00> : vector<16x128xf32>
    %18 = tpu.matmul %16, %17, %cst_14 {dimension_numbers = #tpu.dot_dimension_numbers<[1], [0], [0], [1], [0, 0, 1, 1], [], []>} : vector<16x256xbf16>, vector<256x128xbf16>, vector<16x128xf32> -> vector<16x128xf32>
    %c0_15 = arith.constant 0 : index
    %c0_16 = arith.constant 0 : index
    %19 = vector.load %arg8[%c0_15, %c0_16] : memref<1x128xf32, #tpu.memory_space<vmem>>, vector<1x128xf32>
    %20 = vector.broadcast %19 : vector<1x128xf32> to vector<16x128xf32>
    %21 = arith.addf %18, %20 : vector<16x128xf32>
    %c0_17 = arith.constant 0 : index
    %c0_18 = arith.constant 0 : index
    %22 = vector.load %arg2[%c0_17, %c0_18] : memref<16x128xf32, #tpu.memory_space<vmem>>, vector<16x128xf32>
    %23 = arith.addf %21, %22 : vector<16x128xf32>
    %cst_19 = arith.constant 1.42857146 : f32
    %24 = vector.broadcast %cst_19 : f32 to vector<16x128xf32>
    %25 = arith.mulf %23, %24 : vector<16x128xf32>
    %26 = tpu.iota {dimensions = array<i32: 1>} : vector<16x128xi32>
    %c127_i32 = arith.constant 127 : i32
    %27 = tpu.dynamic_rotate %25 by %c127_i32 dim 1 : vector<16x128xf32>, i32 -> vector<16x128xf32>
    %c1_i32 = arith.constant 1 : i32
    %28 = tpu.dynamic_rotate %25 by %c1_i32 dim 1 : vector<16x128xf32>, i32 -> vector<16x128xf32>
    %c1_i32_20 = arith.constant 1 : i32
    %29 = vector.broadcast %c1_i32_20 : i32 to vector<16x128xi32>
    %30 = arith.andi %26, %29 : vector<16x128xi32>
    %c0_i32 = arith.constant 0 : i32
    %31 = vector.broadcast %c0_i32 : i32 to vector<16x128xi32>
    %32 = arith.cmpi eq, %30, %31 : vector<16x128xi32>
    %33 = arith.select %32, %27, %28 : vector<16x128xi1>, vector<16x128xf32>
    %34 = arith.maximumf %25, %33 : vector<16x128xf32>
    %c126_i32 = arith.constant 126 : i32
    %35 = tpu.dynamic_rotate %34 by %c126_i32 dim 1 : vector<16x128xf32>, i32 -> vector<16x128xf32>
    %c2_i32 = arith.constant 2 : i32
    %36 = tpu.dynamic_rotate %34 by %c2_i32 dim 1 : vector<16x128xf32>, i32 -> vector<16x128xf32>
    %c2_i32_21 = arith.constant 2 : i32
    %37 = vector.broadcast %c2_i32_21 : i32 to vector<16x128xi32>
    %38 = arith.andi %26, %37 : vector<16x128xi32>
    %c0_i32_22 = arith.constant 0 : i32
    %39 = vector.broadcast %c0_i32_22 : i32 to vector<16x128xi32>
    %40 = arith.cmpi eq, %38, %39 : vector<16x128xi32>
    %41 = arith.select %40, %35, %36 : vector<16x128xi1>, vector<16x128xf32>
    %42 = arith.maximumf %34, %41 : vector<16x128xf32>
    %c124_i32 = arith.constant 124 : i32
    %43 = tpu.dynamic_rotate %42 by %c124_i32 dim 1 : vector<16x128xf32>, i32 -> vector<16x128xf32>
    %c4_i32 = arith.constant 4 : i32
    %44 = tpu.dynamic_rotate %42 by %c4_i32 dim 1 : vector<16x128xf32>, i32 -> vector<16x128xf32>
    %c4_i32_23 = arith.constant 4 : i32
    %45 = vector.broadcast %c4_i32_23 : i32 to vector<16x128xi32>
    %46 = arith.andi %26, %45 : vector<16x128xi32>
    %c0_i32_24 = arith.constant 0 : i32
    %47 = vector.broadcast %c0_i32_24 : i32 to vector<16x128xi32>
    %48 = arith.cmpi eq, %46, %47 : vector<16x128xi32>
    %49 = arith.select %48, %43, %44 : vector<16x128xi1>, vector<16x128xf32>
    %50 = arith.maximumf %42, %49 : vector<16x128xf32>
    %c120_i32 = arith.constant 120 : i32
    %51 = tpu.dynamic_rotate %50 by %c120_i32 dim 1 : vector<16x128xf32>, i32 -> vector<16x128xf32>
    %c8_i32 = arith.constant 8 : i32
    %52 = tpu.dynamic_rotate %50 by %c8_i32 dim 1 : vector<16x128xf32>, i32 -> vector<16x128xf32>
    %c8_i32_25 = arith.constant 8 : i32
    %53 = vector.broadcast %c8_i32_25 : i32 to vector<16x128xi32>
    %54 = arith.andi %26, %53 : vector<16x128xi32>
    %c0_i32_26 = arith.constant 0 : i32
    %55 = vector.broadcast %c0_i32_26 : i32 to vector<16x128xi32>
    %56 = arith.cmpi eq, %54, %55 : vector<16x128xi32>
    %57 = arith.select %56, %51, %52 : vector<16x128xi1>, vector<16x128xf32>
    %58 = arith.maximumf %50, %57 : vector<16x128xf32>
    %59 = arith.subf %25, %58 : vector<16x128xf32>
    %60 = math.exp %59 : vector<16x128xf32>
    %c127_i32_27 = arith.constant 127 : i32
    %61 = tpu.dynamic_rotate %60 by %c127_i32_27 dim 1 : vector<16x128xf32>, i32 -> vector<16x128xf32>
    %c1_i32_28 = arith.constant 1 : i32
    %62 = tpu.dynamic_rotate %60 by %c1_i32_28 dim 1 : vector<16x128xf32>, i32 -> vector<16x128xf32>
    %c1_i32_29 = arith.constant 1 : i32
    %63 = vector.broadcast %c1_i32_29 : i32 to vector<16x128xi32>
    %64 = arith.andi %26, %63 : vector<16x128xi32>
    %c0_i32_30 = arith.constant 0 : i32
    %65 = vector.broadcast %c0_i32_30 : i32 to vector<16x128xi32>
    %66 = arith.cmpi eq, %64, %65 : vector<16x128xi32>
    %67 = arith.select %66, %61, %62 : vector<16x128xi1>, vector<16x128xf32>
    %68 = arith.addf %60, %67 : vector<16x128xf32>
    %c126_i32_31 = arith.constant 126 : i32
    %69 = tpu.dynamic_rotate %68 by %c126_i32_31 dim 1 : vector<16x128xf32>, i32 -> vector<16x128xf32>
    %c2_i32_32 = arith.constant 2 : i32
    %70 = tpu.dynamic_rotate %68 by %c2_i32_32 dim 1 : vector<16x128xf32>, i32 -> vector<16x128xf32>
    %c2_i32_33 = arith.constant 2 : i32
    %71 = vector.broadcast %c2_i32_33 : i32 to vector<16x128xi32>
    %72 = arith.andi %26, %71 : vector<16x128xi32>
    %c0_i32_34 = arith.constant 0 : i32
    %73 = vector.broadcast %c0_i32_34 : i32 to vector<16x128xi32>
    %74 = arith.cmpi eq, %72, %73 : vector<16x128xi32>
    %75 = arith.select %74, %69, %70 : vector<16x128xi1>, vector<16x128xf32>
    %76 = arith.addf %68, %75 : vector<16x128xf32>
    %c124_i32_35 = arith.constant 124 : i32
    %77 = tpu.dynamic_rotate %76 by %c124_i32_35 dim 1 : vector<16x128xf32>, i32 -> vector<16x128xf32>
    %c4_i32_36 = arith.constant 4 : i32
    %78 = tpu.dynamic_rotate %76 by %c4_i32_36 dim 1 : vector<16x128xf32>, i32 -> vector<16x128xf32>
    %c4_i32_37 = arith.constant 4 : i32
    %79 = vector.broadcast %c4_i32_37 : i32 to vector<16x128xi32>
    %80 = arith.andi %26, %79 : vector<16x128xi32>
    %c0_i32_38 = arith.constant 0 : i32
    %81 = vector.broadcast %c0_i32_38 : i32 to vector<16x128xi32>
    %82 = arith.cmpi eq, %80, %81 : vector<16x128xi32>
    %83 = arith.select %82, %77, %78 : vector<16x128xi1>, vector<16x128xf32>
    %84 = arith.addf %76, %83 : vector<16x128xf32>
    %c120_i32_39 = arith.constant 120 : i32
    %85 = tpu.dynamic_rotate %84 by %c120_i32_39 dim 1 : vector<16x128xf32>, i32 -> vector<16x128xf32>
    %c8_i32_40 = arith.constant 8 : i32
    %86 = tpu.dynamic_rotate %84 by %c8_i32_40 dim 1 : vector<16x128xf32>, i32 -> vector<16x128xf32>
    %c8_i32_41 = arith.constant 8 : i32
    %87 = vector.broadcast %c8_i32_41 : i32 to vector<16x128xi32>
    %88 = arith.andi %26, %87 : vector<16x128xi32>
    %c0_i32_42 = arith.constant 0 : i32
    %89 = vector.broadcast %c0_i32_42 : i32 to vector<16x128xi32>
    %90 = arith.cmpi eq, %88, %89 : vector<16x128xi32>
    %91 = arith.select %90, %85, %86 : vector<16x128xi1>, vector<16x128xf32>
    %92 = arith.addf %84, %91 : vector<16x128xf32>
    %93 = tpu.reciprocal %92 {approx = true} : vector<16x128xf32> -> vector<16x128xf32>
    %94 = arith.mulf %92, %93 : vector<16x128xf32>
    %cst_43 = arith.constant 2.000000e+00 : f32
    %95 = vector.broadcast %cst_43 : f32 to vector<16x128xf32>
    %96 = arith.subf %95, %94 : vector<16x128xf32>
    %97 = arith.mulf %93, %96 : vector<16x128xf32>
    %98 = arith.mulf %60, %97 : vector<16x128xf32>
    %cst_44 = arith.constant 1.000000e+00 : f32
    %99 = vector.broadcast %cst_44 : f32 to vector<16x128xf32>
    %100 = arith.minimumf %98, %99 : vector<16x128xf32>
    %c0_45 = arith.constant 0 : index
    %c0_46 = arith.constant 0 : index
    %101 = vector.load %arg16[%c0_45, %c0_46] : memref<16x128xf32, #tpu.memory_space<vmem>>, vector<16x128xf32>
    tpu.vector_store %arg16[%c0_45, %c0_46], %100 {strides = array<i32>} : memref<16x128xf32, #tpu.memory_space<vmem>>, vector<16x128xf32>,
    %102 = arith.truncf %100 : vector<16x128xf32> to vector<16x128xbf16>
    %c0_47 = arith.constant 0 : index
    %c0_48 = arith.constant 0 : index
    %103 = vector.load %arg9[%c0_47, %c0_48] : memref<128x256xbf16, #tpu.memory_space<vmem>>, vector<128x256xbf16>
    %cst_49 = arith.constant dense<0.000000e+00> : vector<16x256xf32>
    %104 = tpu.matmul %102, %103, %cst_49 {dimension_numbers = #tpu.dot_dimension_numbers<[1], [0], [0], [1], [0, 0, 1, 1], [], []>} : vector<16x128xbf16>, vector<128x256xbf16>, vector<16x256xf32> -> vector<16x256xf32>
    %c0_50 = arith.constant 0 : index
    %c0_51 = arith.constant 0 : index
    %105 = vector.load %arg10[%c0_50, %c0_51] : memref<1x256xf32, #tpu.memory_space<vmem>>, vector<1x256xf32>
    %106 = vector.broadcast %105 : vector<1x256xf32> to vector<16x256xf32>
    %107 = arith.addf %104, %106 : vector<16x256xf32>
    %cst_52 = arith.constant 0.000000e+00 : f32
    %108 = vector.broadcast %cst_52 : f32 to vector<16x256xf32>
    %109 = arith.maximumf %107, %108 : vector<16x256xf32>
    %110 = arith.truncf %109 : vector<16x256xf32> to vector<16x256xbf16>
    %c0_53 = arith.constant 0 : index
    %c0_54 = arith.constant 0 : index
    %111 = vector.load %arg11[%c0_53, %c0_54] : memref<256x512xbf16, #tpu.memory_space<vmem>>, vector<256x512xbf16>
    %cst_55 = arith.constant dense<0.000000e+00> : vector<16x512xf32>
    %112 = tpu.matmul %110, %111, %cst_55 {dimension_numbers = #tpu.dot_dimension_numbers<[1], [0], [0], [1], [0, 0, 1, 1], [], []>} : vector<16x256xbf16>, vector<256x512xbf16>, vector<16x512xf32> -> vector<16x512xf32>
    %c0_56 = arith.constant 0 : index
    %c0_57 = arith.constant 0 : index
    %113 = vector.load %arg12[%c0_56, %c0_57] : memref<1x512xf32, #tpu.memory_space<vmem>>, vector<1x512xf32>
    %114 = vector.broadcast %113 : vector<1x512xf32> to vector<16x512xf32>
    %115 = arith.addf %112, %114 : vector<16x512xf32>
    %cst_58 = arith.constant 0.000000e+00 : f32
    %116 = vector.broadcast %cst_58 : f32 to vector<16x512xf32>
    %117 = arith.maximumf %115, %116 : vector<16x512xf32>
    %118 = arith.truncf %117 : vector<16x512xf32> to vector<16x512xbf16>
    %c0_59 = arith.constant 0 : index
    %c0_60 = arith.constant 0 : index
    %119 = vector.load %arg13[%c0_59, %c0_60] : memref<512x896xbf16, #tpu.memory_space<vmem>>, vector<512x896xbf16>
    %cst_61 = arith.constant dense<0.000000e+00> : vector<16x896xf32>
    %120 = tpu.matmul %118, %119, %cst_61 {dimension_numbers = #tpu.dot_dimension_numbers<[1], [0], [0], [1], [0, 0, 1, 1], [], []>} : vector<16x512xbf16>, vector<512x896xbf16>, vector<16x896xf32> -> vector<16x896xf32>
    %c0_62 = arith.constant 0 : index
    %c0_63 = arith.constant 0 : index
    %121 = vector.load %arg14[%c0_62, %c0_63] : memref<1x896xf32, #tpu.memory_space<vmem>>, vector<1x896xf32>
    %122 = vector.broadcast %121 : vector<1x896xf32> to vector<16x896xf32>
    %123 = arith.addf %120, %122 : vector<16x896xf32>
    %cst_64 = arith.constant 0.000000e+00 : f32
    %124 = vector.broadcast %cst_64 : f32 to vector<16x896xf32>
    %125 = arith.subf %124, %123 : vector<16x896xf32>
    %126 = math.exp %125 : vector<16x896xf32>
    %cst_65 = arith.constant 1.000000e+00 : f32
    %127 = vector.broadcast %cst_65 : f32 to vector<16x896xf32>
    %128 = arith.addf %127, %126 : vector<16x896xf32>
    %129 = tpu.reciprocal %128 {approx = true} : vector<16x896xf32> -> vector<16x896xf32>
    %cst_66 = arith.constant 1.000000e+00 : f32
    %130 = vector.broadcast %cst_66 : f32 to vector<16x896xf32>
    %131 = arith.minimumf %129, %130 : vector<16x896xf32>
    %132 = arith.truncf %131 : vector<16x896xf32> to vector<16x896xbf16>
    %c0_67 = arith.constant 0 : index
    %c0_68 = arith.constant 0 : index
    %133 = vector.load %arg15[%c0_67, %c0_68] : memref<16x896xbf16, #tpu.memory_space<vmem>>, vector<16x896xbf16>
    tpu.vector_store %arg15[%c0_67, %c0_68], %132 {strides = array<i32>} : memref<16x896xbf16, #tpu.memory_space<vmem>>, vector<16x896xbf16>,
    return
  }
  func.func @transform_0(%arg0: i32) -> (i32, i32) {
    %c0_i32 = arith.constant 0 : i32
    %c0_i32_0 = arith.constant 0 : i32
    return %arg0, %c0_i32 : i32, i32
  }
  func.func @transform_1(%arg0: i32) -> (i32, i32) {
    %c0_i32 = arith.constant 0 : i32
    %c0_i32_0 = arith.constant 0 : i32
    return %arg0, %c0_i32 : i32, i32
  }
  func.func @transform_2(%arg0: i32) -> (i32, i32) {
    %c0_i32 = arith.constant 0 : i32
    %c0_i32_0 = arith.constant 0 : i32
    %c0_i32_1 = arith.constant 0 : i32
    return %c0_i32, %c0_i32_0 : i32, i32
  }
  func.func @transform_3(%arg0: i32) -> (i32, i32) {
    %c0_i32 = arith.constant 0 : i32
    %c0_i32_0 = arith.constant 0 : i32
    %c0_i32_1 = arith.constant 0 : i32
    return %c0_i32, %c0_i32_0 : i32, i32
  }
  func.func @transform_4(%arg0: i32) -> (i32, i32) {
    %c0_i32 = arith.constant 0 : i32
    %c0_i32_0 = arith.constant 0 : i32
    %c0_i32_1 = arith.constant 0 : i32
    return %c0_i32, %c0_i32_0 : i32, i32
  }
  func.func @transform_5(%arg0: i32) -> (i32, i32) {
    %c0_i32 = arith.constant 0 : i32
    %c0_i32_0 = arith.constant 0 : i32
    %c0_i32_1 = arith.constant 0 : i32
    return %c0_i32, %c0_i32_0 : i32, i32
  }
  func.func @transform_6(%arg0: i32) -> (i32, i32) {
    %c0_i32 = arith.constant 0 : i32
    %c0_i32_0 = arith.constant 0 : i32
    %c0_i32_1 = arith.constant 0 : i32
    return %c0_i32, %c0_i32_0 : i32, i32
  }
  func.func @transform_7(%arg0: i32) -> (i32, i32) {
    %c0_i32 = arith.constant 0 : i32
    %c0_i32_0 = arith.constant 0 : i32
    %c0_i32_1 = arith.constant 0 : i32
    return %c0_i32, %c0_i32_0 : i32, i32
  }
  func.func @transform_8(%arg0: i32) -> (i32, i32) {
    %c0_i32 = arith.constant 0 : i32
    %c0_i32_0 = arith.constant 0 : i32
    %c0_i32_1 = arith.constant 0 : i32
    return %c0_i32, %c0_i32_0 : i32, i32
  }
  func.func @transform_9(%arg0: i32) -> (i32, i32) {
    %c0_i32 = arith.constant 0 : i32
    %c0_i32_0 = arith.constant 0 : i32
    %c0_i32_1 = arith.constant 0 : i32
    return %c0_i32, %c0_i32_0 : i32, i32
  }
  func.func @transform_10(%arg0: i32) -> (i32, i32) {
    %c0_i32 = arith.constant 0 : i32
    %c0_i32_0 = arith.constant 0 : i32
    %c0_i32_1 = arith.constant 0 : i32
    return %c0_i32, %c0_i32_0 : i32, i32
  }
  func.func @transform_11(%arg0: i32) -> (i32, i32) {
    %c0_i32 = arith.constant 0 : i32
    %c0_i32_0 = arith.constant 0 : i32
    %c0_i32_1 = arith.constant 0 : i32
    return %c0_i32, %c0_i32_0 : i32, i32
  }
  func.func @transform_12(%arg0: i32) -> (i32, i32) {
    %c0_i32 = arith.constant 0 : i32
    %c0_i32_0 = arith.constant 0 : i32
    %c0_i32_1 = arith.constant 0 : i32
    return %c0_i32, %c0_i32_0 : i32, i32
  }
  func.func @transform_13(%arg0: i32) -> (i32, i32) {
    %c0_i32 = arith.constant 0 : i32
    %c0_i32_0 = arith.constant 0 : i32
    %c0_i32_1 = arith.constant 0 : i32
    return %c0_i32, %c0_i32_0 : i32, i32
  }
  func.func @transform_14(%arg0: i32) -> (i32, i32) {
    %c0_i32 = arith.constant 0 : i32
    %c0_i32_0 = arith.constant 0 : i32
    return %arg0, %c0_i32 : i32, i32
  }
  func.func @transform_15(%arg0: i32) -> (i32, i32) {
    %c0_i32 = arith.constant 0 : i32
    %c0_i32_0 = arith.constant 0 : i32
    return %arg0, %c0_i32 : i32, i32
  }
}

</mosaic_0001>

<llo_original>
// kernel: tpu_custom_call.1
$region0: #{tpu_custom_call.1}
  #allocation0 [shape = 'u32[]', space=smem, size = 0x4, offset = 0x4, fixed_abs, tag = 'smem constant byte address 0x4 - core index']
  #allocation1 [shape = 'u32[144,128]{1,0:T(1,128)}', space=vmem, size = 0x12000, scoped, tag = 'internal scratch']
  %s0 = inlined_call_operand.hbm [shape: bf16[16,896], index: 0, kind: input, shape index: {}]
  %s1 = inlined_call_operand.hbm [shape: f32[16,128], index: 1, kind: input, shape index: {}]
  %s2 = inlined_call_operand.hbm [shape: bf16[896,512], index: 2, kind: input, shape index: {}]
  %s3 = inlined_call_operand.vmem [shape: f32[1,512], index: 3, kind: input, shape index: {}]
  %s4 = inlined_call_operand.hbm [shape: bf16[512,256], index: 4, kind: input, shape index: {}]
  %s5 = inlined_call_operand.vmem [shape: f32[1,256], index: 5, kind: input, shape index: {}]
  %s6 = inlined_call_operand.hbm [shape: bf16[256,128], index: 6, kind: input, shape index: {}]
  %s7 = inlined_call_operand.vmem [shape: f32[1,128], index: 7, kind: input, shape index: {}]
  %s8 = inlined_call_operand.hbm [shape: bf16[128,256], index: 8, kind: input, shape index: {}]
  %s9 = inlined_call_operand.vmem [shape: f32[1,256], index: 9, kind: input, shape index: {}]
  %s10 = inlined_call_operand.hbm [shape: bf16[256,512], index: 10, kind: input, shape index: {}]
  %s11 = inlined_call_operand.vmem [shape: f32[1,512], index: 11, kind: input, shape index: {}]
  %s12 = inlined_call_operand.hbm [shape: bf16[512,896], index: 12, kind: input, shape index: {}]
  %s13 = inlined_call_operand.vmem [shape: f32[1,896], index: 13, kind: input, shape index: {}]
  %s14 = inlined_call_operand.hbm [shape: bf16[16,896], index: 14, kind: output, shape index: {0}]
  %s15 = inlined_call_operand.hbm [shape: f32[16,128], index: 15, kind: output, shape index: {1}]
  %16 = xla_tuple %s14, %s15
  %s17 = sld [smem:[#allocation0]]
  $region106: #{tpu_custom_call.1} parent=0
    _
  %s19 = ssub.s32 1, %s17
  %s20 = scalar_select 0, %s19, %s17
  $region1: #{tpu_custom_call.1} parent=0
    #allocation2 [shape = 'u8[28672]{0}', space=vmem, size = 0x7000, scoped, tag = 'input window, operand 0, single buffered']
    #allocation3 [shape = 's32[1]{0}', space=sflag, size = 0x4, scoped, tag = 'scoped memory for tpu_custom_call.1']
    #allocation4 [shape = 's32[1]{0}', space=sflag, size = 0x4, scoped, tag = 'scoped memory for tpu_custom_call.1']
    #allocation5 [shape = 'u8[8192]{0}', space=vmem, size = 0x2000, scoped, tag = 'input window, operand 1, single buffered']
    #allocation6 [shape = 's32[1]{0}', space=sflag, size = 0x4, scoped, tag = 'scoped memory for tpu_custom_call.1']
    #allocation7 [shape = 'u8[917504]{0}', space=vmem, size = 0xe0000, scoped, tag = 'input window, operand 2, single buffered']
    #allocation8 [shape = 'u8[262144]{0}', space=vmem, size = 0x40000, scoped, tag = 'input window, operand 4, single buffered']
    #allocation9 [shape = 's32[1]{0}', space=sflag, size = 0x4, scoped, tag = 'scoped memory for tpu_custom_call.1']
    #allocation10 [shape = 'u8[65536]{0}', space=vmem, size = 0x10000, scoped, tag = 'input window, operand 6, single buffered']
    #allocation11 [shape = 'u8[65536]{0}', space=vmem, size = 0x10000, scoped, tag = 'input window, operand 8, single buffered']
    #allocation12 [shape = 's32[1]{0}', space=sflag, size = 0x4, scoped, tag = 'scoped memory for tpu_custom_call.1']
    #allocation13 [shape = 'u8[262144]{0}', space=vmem, size = 0x40000, scoped, tag = 'input window, operand 10, single buffered']
    #allocation14 [shape = 'u8[917504]{0}', space=vmem, size = 0xe0000, scoped, tag = 'input window, operand 12, single buffered']
    #allocation15 [shape = 's32[1]{0}', space=sflag, size = 0x4, scoped, tag = 'scoped memory for tpu_custom_call.1']
    #allocation16 [shape = 'u8[28672]{0}', space=vmem, size = 0x7000, scoped, tag = 'output window, operand 0, single buffered']
    #allocation17 [shape = 'u8[8192]{0}', space=vmem, size = 0x2000, scoped, tag = 'output window, operand 1, single buffered']
    #allocation18 [shape = 's32[1]{0}', space=sflag, size = 0x4, scoped, tag = 'scoped memory for tpu_custom_call.1']
    %21 = vsyncpa [#allocation3], 0
    %22 = vsyncpa [#allocation6], 0
    %23 = vsyncpa [#allocation9], 0
    %24 = vsyncpa [#allocation12], 0
    %25 = vsyncpa [#allocation15], 0
    %26 = vsyncpa [#allocation4], 0
    %27 = vsyncpa [#allocation18], 0
    // Predicated region
    $region2: #{tpu_custom_call.1} parent=1 // pred_check
      _
    $region3: #{tpu_custom_call.1} parent=1 // pred_check_branch
      %29 = sbr.rel (0) target = $region5
    $region4: #{tpu_custom_call.1} parent=1 // pred_region
      %s31 = ssub.s32 896, 896
      %32 = vsyncadd [#allocation3], %s31
      %s33 = sshll.u32 [#allocation2], 4
      %s34 = int_to_ptr.vmem [resolvable:$true] %s33
      %39 = dma.hbm_to_vmem [thread:$0]  %s0, 896, %s34, [#allocation3], 448, 448, 28
    $region5: #{tpu_custom_call.1} parent=1 // pred_fallthru
      _
    // Predicated region
    $region6: #{tpu_custom_call.1} parent=1 // pred_check
      _
    $region7: #{tpu_custom_call.1} parent=1 // pred_check_branch
      %41 = sbr.rel (0) target = $region9
    $region8: #{tpu_custom_call.1} parent=1 // pred_region
      %s43 = ssub.s32 256, 256
      %44 = vsyncadd [#allocation6], %s43
      %s45 = sshll.u32 [#allocation5], 4
      %s46 = int_to_ptr.vmem [resolvable:$true] %s45
      %51 = dma.hbm_to_vmem [thread:$0]  %s1, 256, %s46, [#allocation6], 128, 128, 8
    $region9: #{tpu_custom_call.1} parent=1 // pred_fallthru
      _
    // Predicated region
    $region10: #{tpu_custom_call.1} parent=1 // pred_check
      _
    $region11: #{tpu_custom_call.1} parent=1 // pred_check_branch
      %53 = sbr.rel (0) target = $region13
    $region12: #{tpu_custom_call.1} parent=1 // pred_region
      %s55 = ssub.s32 28672, 28672
      %56 = vsyncadd [#allocation6], %s55
      %s57 = sshll.u32 [#allocation7], 4
      %s58 = int_to_ptr.vmem [resolvable:$true] %s57
      %63 = dma.hbm_to_vmem [thread:$0]  %s2, 28672, %s58, [#allocation6], 256, 256, 16
    $region13: #{tpu_custom_call.1} parent=1 // pred_fallthru
      _
    // Predicated region
    $region14: #{tpu_custom_call.1} parent=1 // pred_check
      _
    $region15: #{tpu_custom_call.1} parent=1 // pred_check_branch
      %65 = sbr.rel (0) target = $region17
    $region16: #{tpu_custom_call.1} parent=1 // pred_region
      _
    $region17: #{tpu_custom_call.1} parent=1 // pred_fallthru
      _
    // Predicated region
    $region18: #{tpu_custom_call.1} parent=1 // pred_check
      _
    $region19: #{tpu_custom_call.1} parent=1 // pred_check_branch
      %67 = sbr.rel (0) target = $region21
    $region20: #{tpu_custom_call.1} parent=1 // pred_region
      %s69 = ssub.s32 8192, 8192
      %70 = vsyncadd [#allocation9], %s69
      %s71 = sshll.u32 [#allocation8], 4
      %s72 = int_to_ptr.vmem [resolvable:$true] %s71
      %77 = dma.hbm_to_vmem [thread:$0]  %s4, 8192, %s72, [#allocation9], 128, 128, 8
    $region21: #{tpu_custom_call.1} parent=1 // pred_fallthru
      _
    // Predicated region
    $region22: #{tpu_custom_call.1} parent=1 // pred_check
      _
    $region23: #{tpu_custom_call.1} parent=1 // pred_check_branch
      %79 = sbr.rel (0) target = $region25
    $region24: #{tpu_custom_call.1} parent=1 // pred_region
      _
    $region25: #{tpu_custom_call.1} parent=1 // pred_fallthru
      _
    // Predicated region
    $region26: #{tpu_custom_call.1} parent=1 // pred_check
      _
    $region27: #{tpu_custom_call.1} parent=1 // pred_check_branch
      %81 = sbr.rel (0) target = $region29
    $region28: #{tpu_custom_call.1} parent=1 // pred_region
      %s83 = ssub.s32 2048, 2048
      %84 = vsyncadd [#allocation9], %s83
      %s85 = sshll.u32 [#allocation10], 4
      %s86 = int_to_ptr.vmem [resolvable:$true] %s85
      %91 = dma.hbm_to_vmem [thread:$0]  %s6, 2048, %s86, [#allocation9], 64, 64, 4
    $region29: #{tpu_custom_call.1} parent=1 // pred_fallthru
      _
    // Predicated region
    $region30: #{tpu_custom_call.1} parent=1 // pred_check
      _
    $region31: #{tpu_custom_call.1} parent=1 // pred_check_branch
      %93 = sbr.rel (0) target = $region33
    $region32: #{tpu_custom_call.1} parent=1 // pred_region
      _
    $region33: #{tpu_custom_call.1} parent=1 // pred_fallthru
      _
    // Predicated region
    $region34: #{tpu_custom_call.1} parent=1 // pred_check
      _
    $region35: #{tpu_custom_call.1} parent=1 // pred_check_branch
      %95 = sbr.rel (0) target = $region37
    $region36: #{tpu_custom_call.1} parent=1 // pred_region
      %s97 = ssub.s32 2048, 2048
      %98 = vsyncadd [#allocation12], %s97
      %s99 = sshll.u32 [#allocation11], 4
      %s100 = int_to_ptr.vmem [resolvable:$true] %s99
      %105 = dma.hbm_to_vmem [thread:$0]  %s8, 2048, %s100, [#allocation12], 128, 128, 8
    $region37: #{tpu_custom_call.1} parent=1 // pred_fallthru
      _
    // Predicated region
    $region38: #{tpu_custom_call.1} parent=1 // pred_check
      _
    $region39: #{tpu_custom_call.1} parent=1 // pred_check_branch
      %107 = sbr.rel (0) target = $region41
    $region40: #{tpu_custom_call.1} parent=1 // pred_region
      _
    $region41: #{tpu_custom_call.1} parent=1 // pred_fallthru
      _
    // Predicated region
    $region42: #{tpu_custom_call.1} parent=1 // pred_check
      _
    $region43: #{tpu_custom_call.1} parent=1 // pred_check_branch
      %109 = sbr.rel (0) target = $region45
    $region44: #{tpu_custom_call.1} parent=1 // pred_region
      %s111 = ssub.s32 8192, 8192
      %112 = vsyncadd [#allocation12], %s111
      %s113 = sshll.u32 [#allocation13], 4
      %s114 = int_to_ptr.vmem [resolvable:$true] %s113
      %119 = dma.hbm_to_vmem [thread:$0]  %s10, 8192, %s114, [#allocation12], 256, 256, 16
    $region45: #{tpu_custom_call.1} parent=1 // pred_fallthru
      _
    // Predicated region
    $region46: #{tpu_custom_call.1} parent=1 // pred_check
      _
    $region47: #{tpu_custom_call.1} parent=1 // pred_check_branch
      %121 = sbr.rel (0) target = $region49
    $region48: #{tpu_custom_call.1} parent=1 // pred_region
      _
    $region49: #{tpu_custom_call.1} parent=1 // pred_fallthru
      _
    // Predicated region
    $region50: #{tpu_custom_call.1} parent=1 // pred_check
      _
    $region51: #{tpu_custom_call.1} parent=1 // pred_check_branch
      %123 = sbr.rel (0) target = $region53
    $region52: #{tpu_custom_call.1} parent=1 // pred_region
      %s125 = ssub.s32 28672, 28672
      %126 = vsyncadd [#allocation15], %s125
      %s127 = sshll.u32 [#allocation14], 4
      %s128 = int_to_ptr.vmem [resolvable:$true] %s127
      %133 = dma.hbm_to_vmem [thread:$0]  %s12, 28672, %s128, [#allocation15], 448, 448, 28
    $region53: #{tpu_custom_call.1} parent=1 // pred_fallthru
      _
    // Predicated region
    $region54: #{tpu_custom_call.1} parent=1 // pred_check
      _
    $region55: #{tpu_custom_call.1} parent=1 // pred_check_branch
      %135 = sbr.rel (0) target = $region57
    $region56: #{tpu_custom_call.1} parent=1 // pred_region
      _
    $region57: #{tpu_custom_call.1} parent=1 // pred_fallthru
      _
    // Predicated region
    $region58: #{tpu_custom_call.1} parent=1 // pred_check
      _
    $region59: #{tpu_custom_call.1} parent=1 // pred_check_branch
      %137 = sbr.rel (0) target = $region61
    $region60: #{tpu_custom_call.1} parent=1 // pred_region
      %138 = dma.done [#allocation3], 896
    $region61: #{tpu_custom_call.1} parent=1 // pred_fallthru
      _
    // Predicated region
    $region62: #{tpu_custom_call.1} parent=1 // pred_check
      _
    $region63: #{tpu_custom_call.1} parent=1 // pred_check_branch
      %140 = sbr.rel (0) target = $region65
    $region64: #{tpu_custom_call.1} parent=1 // pred_region
      %141 = dma.done [#allocation6], 256
    $region65: #{tpu_custom_call.1} parent=1 // pred_fallthru
      _
    // Predicated region
    $region66: #{tpu_custom_call.1} parent=1 // pred_check
      _
    $region67: #{tpu_custom_call.1} parent=1 // pred_check_branch
      %143 = sbr.rel (0) target = $region69
    $region68: #{tpu_custom_call.1} parent=1 // pred_region
      %144 = dma.done [#allocation6], 28672
    $region69: #{tpu_custom_call.1} parent=1 // pred_fallthru
      _
    // Predicated region
    $region70: #{tpu_custom_call.1} parent=1 // pred_check
      _
    $region71: #{tpu_custom_call.1} parent=1 // pred_check_branch
      %146 = sbr.rel (0) target = $region73
    $region72: #{tpu_custom_call.1} parent=1 // pred_region
      %147 = dma.done [#allocation9], 8192
    $region73: #{tpu_custom_call.1} parent=1 // pred_fallthru
      _
    // Predicated region
    $region74: #{tpu_custom_call.1} parent=1 // pred_check
      _
    $region75: #{tpu_custom_call.1} parent=1 // pred_check_branch
      %149 = sbr.rel (0) target = $region77
    $region76: #{tpu_custom_call.1} parent=1 // pred_region
      %150 = dma.done [#allocation9], 2048
    $region77: #{tpu_custom_call.1} parent=1 // pred_fallthru
      _
    // Predicated region
    $region78: #{tpu_custom_call.1} parent=1 // pred_check
      _
    $region79: #{tpu_custom_call.1} parent=1 // pred_check_branch
      %152 = sbr.rel (0) target = $region81
    $region80: #{tpu_custom_call.1} parent=1 // pred_region
      %153 = dma.done [#allocation12], 2048
    $region81: #{tpu_custom_call.1} parent=1 // pred_fallthru
      _
    // Predicated region
    $region82: #{tpu_custom_call.1} parent=1 // pred_check
      _
    $region83: #{tpu_custom_call.1} parent=1 // pred_check_branch
      %155 = sbr.rel (0) target = $region85
    $region84: #{tpu_custom_call.1} parent=1 // pred_region
      %156 = dma.done [#allocation12], 8192
    $region85: #{tpu_custom_call.1} parent=1 // pred_fallthru
      _
    // Predicated region
    $region86: #{tpu_custom_call.1} parent=1 // pred_check
      _
    $region87: #{tpu_custom_call.1} parent=1 // pred_check_branch
      %158 = sbr.rel (0) target = $region89
    $region88: #{tpu_custom_call.1} parent=1 // pred_region
      %159 = dma.done [#allocation15], 28672
    $region89: #{tpu_custom_call.1} parent=1 // pred_fallthru
      _
    %v161 = vld [vmem:[#allocation2] sm:$0xff]
    %v162 = vld [vmem:[#allocation2 + $0x8] sm:$0xff]
    %v163 = vld [vmem:[#allocation2 + $0x10] sm:$0xff]
    %v164 = vld [vmem:[#allocation2 + $0x18] sm:$0xf]
    %v165 = vld [vmem:[#allocation2 + $0x1c] sm:$0xff]
    %v166 = vld [vmem:[#allocation2 + $0x24] sm:$0xff]
    %v167 = vld [vmem:[#allocation2 + $0x2c] sm:$0xff]
    %v168 = vld [vmem:[#allocation2 + $0x34] sm:$0xf]
    %v169 = vld [vmem:[#allocation7] sm:$0xff]
    %v170 = vld [vmem:[#allocation7 + $0x8] sm:$0xff]
    %v171 = vld [vmem:[#allocation7 + $0x10] sm:$0xff]
    %v172 = vld [vmem:[#allocation7 + $0x18] sm:$0xff]
    %v173 = vld [vmem:[#allocation7 + $0x20] sm:$0xff]
    %v174 = vld [vmem:[#allocation7 + $0x28] sm:$0xff]
    %v175 = vld [vmem:[#allocation7 + $0x30] sm:$0xff]
    %v176 = vld [vmem:[#allocation7 + $0x38] sm:$0xff]
    %v177 = vld [vmem:[#allocation7 + $0x40] sm:$0xff]
    %v178 = vld [vmem:[#allocation7 + $0x48] sm:$0xff]
    %v179 = vld [vmem:[#allocation7 + $0x50] sm:$0xff]
    %v180 = vld [vmem:[#allocation7 + $0x58] sm:$0xff]
    %v181 = vld [vmem:[#allocation7 + $0x60] sm:$0xff]
    %v182 = vld [vmem:[#allocation7 + $0x68] sm:$0xff]
    %v183 = vld [vmem:[#allocation7 + $0x70] sm:$0xff]
    %v184 = vld [vmem:[#allocation7 + $0x78] sm:$0xff]
    %v185 = vld [vmem:[#allocation7 + $0x80] sm:$0xff]
    %v186 = vld [vmem:[#allocation7 + $0x88] sm:$0xff]
    %v187 = vld [vmem:[#allocation7 + $0x90] sm:$0xff]
    %v188 = vld [vmem:[#allocation7 + $0x98] sm:$0xff]
    %v189 = vld [vmem:[#allocation7 + $0xa0] sm:$0xff]
    %v190 = vld [vmem:[#allocation7 + $0xa8] sm:$0xff]
    %v191 = vld [vmem:[#allocation7 + $0xb0] sm:$0xff]
    %v192 = vld [vmem:[#allocation7 + $0xb8] sm:$0xff]
    %v193 = vld [vmem:[#allocation7 + $0xc0] sm:$0xff]
    %v194 = vld [vmem:[#allocation7 + $0xc8] sm:$0xff]
    %v195 = vld [vmem:[#allocation7 + $0xd0] sm:$0xff]
    %v196 = vld [vmem:[#allocation7 + $0xd8] sm:$0xff]
    %v197 = vld [vmem:[#allocation7 + $0xe0] sm:$0xff]
    %v198 = vld [vmem:[#allocation7 + $0xe8] sm:$0xff]
    %v199 = vld [vmem:[#allocation7 + $0xf0] sm:$0xff]
    %v200 = vld [vmem:[#allocation7 + $0xf8] sm:$0xff]
    %v201 = vld [vmem:[#allocation7 + $0x100] sm:$0xff]
    %v202 = vld [vmem:[#allocation7 + $0x108] sm:$0xff]
    %v203 = vld [vmem:[#allocation7 + $0x110] sm:$0xff]
    %v204 = vld [vmem:[#allocation7 + $0x118] sm:$0xff]
    %v205 = vld [vmem:[#allocation7 + $0x120] sm:$0xff]
    %v206 = vld [vmem:[#allocation7 + $0x128] sm:$0xff]
    %v207 = vld [vmem:[#allocation7 + $0x130] sm:$0xff]
    %v208 = vld [vmem:[#allocation7 + $0x138] sm:$0xff]
    %v209 = vld [vmem:[#allocation7 + $0x140] sm:$0xff]
    %v210 = vld [vmem:[#allocation7 + $0x148] sm:$0xff]
    %v211 = vld [vmem:[#allocation7 + $0x150] sm:$0xff]
    %v212 = vld [vmem:[#allocation7 + $0x158] sm:$0xff]
    %v213 = vld [vmem:[#allocation7 + $0x160] sm:$0xff]
    %v214 = vld [vmem:[#allocation7 + $0x168] sm:$0xff]
    %v215 = vld [vmem:[#allocation7 + $0x170] sm:$0xff]
    %v216 = vld [vmem:[#allocation7 + $0x178] sm:$0xff]
    %v217 = vld [vmem:[#allocation7 + $0x180] sm:$0xff]
    %v218 = vld [vmem:[#allocation7 + $0x188] sm:$0xff]
    %v219 = vld [vmem:[#allocation7 + $0x190] sm:$0xff]
    %v220 = vld [vmem:[#allocation7 + $0x198] sm:$0xff]
    %v221 = vld [vmem:[#allocation7 + $0x1a0] sm:$0xff]
    %v222 = vld [vmem:[#allocation7 + $0x1a8] sm:$0xff]
    %v223 = vld [vmem:[#allocation7 + $0x1b0] sm:$0xff]
    %v224 = vld [vmem:[#allocation7 + $0x1b8] sm:$0xff]
    %v225 = vld [vmem:[#allocation7 + $0x1c0] sm:$0xff]
    %v226 = vld [vmem:[#allocation7 + $0x1c8] sm:$0xff]
    %v227 = vld [vmem:[#allocation7 + $0x1d0] sm:$0xff]
    %v228 = vld [vmem:[#allocation7 + $0x1d8] sm:$0xff]
    %v229 = vld [vmem:[#allocation7 + $0x1e0] sm:$0xff]
    %v230 = vld [vmem:[#allocation7 + $0x1e8] sm:$0xff]
    %v231 = vld [vmem:[#allocation7 + $0x1f0] sm:$0xff]
    %v232 = vld [vmem:[#allocation7 + $0x1f8] sm:$0xff]
    %v233 = vld [vmem:[#allocation7 + $0x200] sm:$0xff]
    %v234 = vld [vmem:[#allocation7 + $0x208] sm:$0xff]
    %v235 = vld [vmem:[#allocation7 + $0x210] sm:$0xff]
    %v236 = vld [vmem:[#allocation7 + $0x218] sm:$0xff]
    %v237 = vld [vmem:[#allocation7 + $0x220] sm:$0xff]
    %v238 = vld [vmem:[#allocation7 + $0x228] sm:$0xff]
    %v239 = vld [vmem:[#allocation7 + $0x230] sm:$0xff]
    %v240 = vld [vmem:[#allocation7 + $0x238] sm:$0xff]
    %v241 = vld [vmem:[#allocation7 + $0x240] sm:$0xff]
    %v242 = vld [vmem:[#allocation7 + $0x248] sm:$0xff]
    %v243 = vld [vmem:[#allocation7 + $0x250] sm:$0xff]
    %v244 = vld [vmem:[#allocation7 + $0x258] sm:$0xff]
    %v245 = vld [vmem:[#allocation7 + $0x260] sm:$0xff]
    %v246 = vld [vmem:[#allocation7 + $0x268] sm:$0xff]
    %v247 = vld [vmem:[#allocation7 + $0x270] sm:$0xff]
    %v248 = vld [vmem:[#allocation7 + $0x278] sm:$0xff]
    %v249 = vld [vmem:[#allocation7 + $0x280] sm:$0xff]
    %v250 = vld [vmem:[#allocation7 + $0x288] sm:$0xff]
    %v251 = vld [vmem:[#allocation7 + $0x290] sm:$0xff]
    %v252 = vld [vmem:[#allocation7 + $0x298] sm:$0xff]
    %v253 = vld [vmem:[#allocation7 + $0x2a0] sm:$0xff]
    %v254 = vld [vmem:[#allocation7 + $0x2a8] sm:$0xff]
    %v255 = vld [vmem:[#allocation7 + $0x2b0] sm:$0xff]
    %v256 = vld [vmem:[#allocation7 + $0x2b8] sm:$0xff]
    %v257 = vld [vmem:[#allocation7 + $0x2c0] sm:$0xff]
    %v258 = vld [vmem:[#allocation7 + $0x2c8] sm:$0xff]
    %v259 = vld [vmem:[#allocation7 + $0x2d0] sm:$0xff]
    %v260 = vld [vmem:[#allocation7 + $0x2d8] sm:$0xff]
    %v261 = vld [vmem:[#allocation7 + $0x2e0] sm:$0xff]
    %v262 = vld [vmem:[#allocation7 + $0x2e8] sm:$0xff]
    %v263 = vld [vmem:[#allocation7 + $0x2f0] sm:$0xff]
    %v264 = vld [vmem:[#allocation7 + $0x2f8] sm:$0xff]
    %v265 = vld [vmem:[#allocation7 + $0x300] sm:$0xff]
    %v266 = vld [vmem:[#allocation7 + $0x308] sm:$0xff]
    %v267 = vld [vmem:[#allocation7 + $0x310] sm:$0xff]
    %v268 = vld [vmem:[#allocation7 + $0x318] sm:$0xff]
    %v269 = vld [vmem:[#allocation7 + $0x320] sm:$0xff]
    %v270 = vld [vmem:[#allocation7 + $0x328] sm:$0xff]
    %v271 = vld [vmem:[#allocation7 + $0x330] sm:$0xff]
    %v272 = vld [vmem:[#allocation7 + $0x338] sm:$0xff]
    %v273 = vld [vmem:[#allocation7 + $0x340] sm:$0xff]
    %v274 = vld [vmem:[#allocation7 + $0x348] sm:$0xff]
    %v275 = vld [vmem:[#allocation7 + $0x350] sm:$0xff]
    %v276 = vld [vmem:[#allocation7 + $0x358] sm:$0xff]
    %v277 = vld [vmem:[#allocation7 + $0x360] sm:$0xff]
    %v278 = vld [vmem:[#allocation7 + $0x368] sm:$0xff]
    %v279 = vld [vmem:[#allocation7 + $0x370] sm:$0xff]
    %v280 = vld [vmem:[#allocation7 + $0x378] sm:$0xff]
    %v281 = vld [vmem:[#allocation7 + $0x380] sm:$0xff]
    %v282 = vld [vmem:[#allocation7 + $0x388] sm:$0xff]
    %v283 = vld [vmem:[#allocation7 + $0x390] sm:$0xff]
    %v284 = vld [vmem:[#allocation7 + $0x398] sm:$0xff]
    %v285 = vld [vmem:[#allocation7 + $0x3a0] sm:$0xff]
    %v286 = vld [vmem:[#allocation7 + $0x3a8] sm:$0xff]
    %v287 = vld [vmem:[#allocation7 + $0x3b0] sm:$0xff]
    %v288 = vld [vmem:[#allocation7 + $0x3b8] sm:$0xff]
    %v289 = vld [vmem:[#allocation7 + $0x3c0] sm:$0xff]
    %v290 = vld [vmem:[#allocation7 + $0x3c8] sm:$0xff]
    %v291 = vld [vmem:[#allocation7 + $0x3d0] sm:$0xff]
    %v292 = vld [vmem:[#allocation7 + $0x3d8] sm:$0xff]
    %v293 = vld [vmem:[#allocation7 + $0x3e0] sm:$0xff]
    %v294 = vld [vmem:[#allocation7 + $0x3e8] sm:$0xff]
    %v295 = vld [vmem:[#allocation7 + $0x3f0] sm:$0xff]
    %v296 = vld [vmem:[#allocation7 + $0x3f8] sm:$0xff]
    %v297 = vld [vmem:[#allocation7 + $0x400] sm:$0xff]
    %v298 = vld [vmem:[#allocation7 + $0x408] sm:$0xff]
    %v299 = vld [vmem:[#allocation7 + $0x410] sm:$0xff]
    %v300 = vld [vmem:[#allocation7 + $0x418] sm:$0xff]
    %v301 = vld [vmem:[#allocation7 + $0x420] sm:$0xff]
    %v302 = vld [vmem:[#allocation7 + $0x428] sm:$0xff]
    %v303 = vld [vmem:[#allocation7 + $0x430] sm:$0xff]
    %v304 = vld [vmem:[#allocation7 + $0x438] sm:$0xff]
    %v305 = vld [vmem:[#allocation7 + $0x440] sm:$0xff]
    %v306 = vld [vmem:[#allocation7 + $0x448] sm:$0xff]
    %v307 = vld [vmem:[#allocation7 + $0x450] sm:$0xff]
    %v308 = vld [vmem:[#allocation7 + $0x458] sm:$0xff]
    %v309 = vld [vmem:[#allocation7 + $0x460] sm:$0xff]
    %v310 = vld [vmem:[#allocation7 + $0x468] sm:$0xff]
    %v311 = vld [vmem:[#allocation7 + $0x470] sm:$0xff]
    %v312 = vld [vmem:[#allocation7 + $0x478] sm:$0xff]
    %v313 = vld [vmem:[#allocation7 + $0x480] sm:$0xff]
    %v314 = vld [vmem:[#allocation7 + $0x488] sm:$0xff]
    %v315 = vld [vmem:[#allocation7 + $0x490] sm:$0xff]
    %v316 = vld [vmem:[#allocation7 + $0x498] sm:$0xff]
    %v317 = vld [vmem:[#allocation7 + $0x4a0] sm:$0xff]
    %v318 = vld [vmem:[#allocation7 + $0x4a8] sm:$0xff]
    %v319 = vld [vmem:[#allocation7 + $0x4b0] sm:$0xff]
    %v320 = vld [vmem:[#allocation7 + $0x4b8] sm:$0xff]
    %v321 = vld [vmem:[#allocation7 + $0x4c0] sm:$0xff]
    %v322 = vld [vmem:[#allocation7 + $0x4c8] sm:$0xff]
    %v323 = vld [vmem:[#allocation7 + $0x4d0] sm:$0xff]
    %v324 = vld [vmem:[#allocation7 + $0x4d8] sm:$0xff]
    %v325 = vld [vmem:[#allocation7 + $0x4e0] sm:$0xff]
    %v326 = vld [vmem:[#allocation7 + $0x4e8] sm:$0xff]
    %v327 = vld [vmem:[#allocation7 + $0x4f0] sm:$0xff]
    %v328 = vld [vmem:[#allocation7 + $0x4f8] sm:$0xff]
    %v329 = vld [vmem:[#allocation7 + $0x500] sm:$0xff]
    %v330 = vld [vmem:[#allocation7 + $0x508] sm:$0xff]
    %v331 = vld [vmem:[#allocation7 + $0x510] sm:$0xff]
    %v332 = vld [vmem:[#allocation7 + $0x518] sm:$0xff]
    %v333 = vld [vmem:[#allocation7 + $0x520] sm:$0xff]
    %v334 = vld [vmem:[#allocation7 + $0x528] sm:$0xff]
    %v335 = vld [vmem:[#allocation7 + $0x530] sm:$0xff]
    %v336 = vld [vmem:[#allocation7 + $0x538] sm:$0xff]
    %v337 = vld [vmem:[#allocation7 + $0x540] sm:$0xff]
    %v338 = vld [vmem:[#allocation7 + $0x548] sm:$0xff]
    %v339 = vld [vmem:[#allocation7 + $0x550] sm:$0xff]
    %v340 = vld [vmem:[#allocation7 + $0x558] sm:$0xff]
    %v341 = vld [vmem:[#allocation7 + $0x560] sm:$0xff]
    %v342 = vld [vmem:[#allocation7 + $0x568] sm:$0xff]
    %v343 = vld [vmem:[#allocation7 + $0x570] sm:$0xff]
    %v344 = vld [vmem:[#allocation7 + $0x578] sm:$0xff]
    %v345 = vld [vmem:[#allocation7 + $0x580] sm:$0xff]
    %v346 = vld [vmem:[#allocation7 + $0x588] sm:$0xff]
    %v347 = vld [vmem:[#allocation7 + $0x590] sm:$0xff]
    %v348 = vld [vmem:[#allocation7 + $0x598] sm:$0xff]
    %v349 = vld [vmem:[#allocation7 + $0x5a0] sm:$0xff]
    %v350 = vld [vmem:[#allocation7 + $0x5a8] sm:$0xff]
    %v351 = vld [vmem:[#allocation7 + $0x5b0] sm:$0xff]
    %v352 = vld [vmem:[#allocation7 + $0x5b8] sm:$0xff]
    %v353 = vld [vmem:[#allocation7 + $0x5c0] sm:$0xff]
    %v354 = vld [vmem:[#allocation7 + $0x5c8] sm:$0xff]
    %v355 = vld [vmem:[#allocation7 + $0x5d0] sm:$0xff]
    %v356 = vld [vmem:[#allocation7 + $0x5d8] sm:$0xff]
    %v357 = vld [vmem:[#allocation7 + $0x5e0] sm:$0xff]
    %v358 = vld [vmem:[#allocation7 + $0x5e8] sm:$0xff]
    %v359 = vld [vmem:[#allocation7 + $0x5f0] sm:$0xff]
    %v360 = vld [vmem:[#allocation7 + $0x5f8] sm:$0xff]
    %v361 = vld [vmem:[#allocation7 + $0x600] sm:$0xff]
    %v362 = vld [vmem:[#allocation7 + $0x608] sm:$0xff]
    %v363 = vld [vmem:[#allocation7 + $0x610] sm:$0xff]
    %v364 = vld [vmem:[#allocation7 + $0x618] sm:$0xff]
    %v365 = vld [vmem:[#allocation7 + $0x620] sm:$0xff]
    %v366 = vld [vmem:[#allocation7 + $0x628] sm:$0xff]
    %v367 = vld [vmem:[#allocation7 + $0x630] sm:$0xff]
    %v368 = vld [vmem:[#allocation7 + $0x638] sm:$0xff]
    %v369 = vld [vmem:[#allocation7 + $0x640] sm:$0xff]
    %v370 = vld [vmem:[#allocation7 + $0x648] sm:$0xff]
    %v371 = vld [vmem:[#allocation7 + $0x650] sm:$0xff]
    %v372 = vld [vmem:[#allocation7 + $0x658] sm:$0xff]
    %v373 = vld [vmem:[#allocation7 + $0x660] sm:$0xff]
    %v374 = vld [vmem:[#allocation7 + $0x668] sm:$0xff]
    %v375 = vld [vmem:[#allocation7 + $0x670] sm:$0xff]
    %v376 = vld [vmem:[#allocation7 + $0x678] sm:$0xff]
    %v377 = vld [vmem:[#allocation7 + $0x680] sm:$0xff]
    %v378 = vld [vmem:[#allocation7 + $0x688] sm:$0xff]
    %v379 = vld [vmem:[#allocation7 + $0x690] sm:$0xff]
    %v380 = vld [vmem:[#allocation7 + $0x698] sm:$0xff]
    %v381 = vld [vmem:[#allocation7 + $0x6a0] sm:$0xff]
    %v382 = vld [vmem:[#allocation7 + $0x6a8] sm:$0xff]
    %v383 = vld [vmem:[#allocation7 + $0x6b0] sm:$0xff]
    %v384 = vld [vmem:[#allocation7 + $0x6b8] sm:$0xff]
    %v385 = vld [vmem:[#allocation7 + $0x6c0] sm:$0xff]
    %v386 = vld [vmem:[#allocation7 + $0x6c8] sm:$0xff]
    %v387 = vld [vmem:[#allocation7 + $0x6d0] sm:$0xff]
    %v388 = vld [vmem:[#allocation7 + $0x6d8] sm:$0xff]
    %v389 = vld [vmem:[#allocation7 + $0x6e0] sm:$0xff]
    %v390 = vld [vmem:[#allocation7 + $0x6e8] sm:$0xff]
    %v391 = vld [vmem:[#allocation7 + $0x6f0] sm:$0xff]
    %v392 = vld [vmem:[#allocation7 + $0x6f8] sm:$0xff]
    %v393 = vld [vmem:[%s3] sm:$0xf]
    %v395 = vlaneseq
    %v396 = vshrl.u32 %v395, 7
    %v397 = vsub.s32 0, %v396
    %v398 = vrot.slane %v393, %v397
    %v399 = vlaneseq
    %v400 = vshrl.u32 %v399, 7
    %v401 = vsub.s32 1, %v400
    %v402 = vrot.slane %v393, %v401
    %v403 = vlaneseq
    %v404 = vshrl.u32 %v403, 7
    %v405 = vsub.s32 2, %v404
    %v406 = vrot.slane %v393, %v405
    %v407 = vlaneseq
    %v408 = vshrl.u32 %v407, 7
    %v409 = vsub.s32 3, %v408
    %v410 = vrot.slane %v393, %v409
    %v423 = vunpack.c.l.b16 %v161
    %v424 = vunpack.c.h.b16 %v161
    %v425 = vunpack.c.l.b16 %v162
    %v426 = vunpack.c.h.b16 %v162
    %v427 = vunpack.c.l.b16 %v163
    %v428 = vunpack.c.h.b16 %v163
    %v429 = vunpack.c.l.b16 %v164
    %v430 = vunpack.c.l.b16 %v165
    %v431 = vunpack.c.h.b16 %v165
    %v432 = vunpack.c.l.b16 %v166
    %v433 = vunpack.c.h.b16 %v166
    %v434 = vunpack.c.l.b16 %v167
    %v435 = vunpack.c.h.b16 %v167
    %v436 = vunpack.c.l.b16 %v168
    %v437 = vpack.c.b16 %v430, %v423
    %v438 = vpack.c.b16 %v431, %v424
    %v439 = vpack.c.b16 %v432, %v425
    %v440 = vpack.c.b16 %v433, %v426
    %v441 = vpack.c.b16 %v434, %v427
    %v442 = vpack.c.b16 %v435, %v428
    %v443 = vpack.c.b16 %v436, %v429
    %v675 = vunpack.c.l.b16 %v169
    %v676 = vunpack.c.h.b16 %v169
    %v677 = vunpack.c.l.b16 %v170
    %v678 = vunpack.c.h.b16 %v170
    %v679 = vunpack.c.l.b16 %v171
    %v680 = vunpack.c.h.b16 %v171
    %v681 = vunpack.c.l.b16 %v172
    %v682 = vunpack.c.h.b16 %v172
    %v683 = vunpack.c.l.b16 %v173
    %v684 = vunpack.c.h.b16 %v173
    %v685 = vunpack.c.l.b16 %v174
    %v686 = vunpack.c.h.b16 %v174
    %v687 = vunpack.c.l.b16 %v175
    %v688 = vunpack.c.h.b16 %v175
    %v689 = vunpack.c.l.b16 %v176
    %v690 = vunpack.c.h.b16 %v176
    %v691 = vunpack.c.l.b16 %v177
    %v692 = vunpack.c.h.b16 %v177
    %v693 = vunpack.c.l.b16 %v178
    %v694 = vunpack.c.h.b16 %v178
    %v695 = vunpack.c.l.b16 %v179
    %v696 = vunpack.c.h.b16 %v179
    %v697 = vunpack.c.l.b16 %v180
    %v698 = vunpack.c.h.b16 %v180
    %v699 = vunpack.c.l.b16 %v181
    %v700 = vunpack.c.h.b16 %v181
    %v701 = vunpack.c.l.b16 %v182
    %v702 = vunpack.c.h.b16 %v182
    %v703 = vunpack.c.l.b16 %v183
    %v704 = vunpack.c.h.b16 %v183
    %v705 = vunpack.c.l.b16 %v184
    %v706 = vunpack.c.h.b16 %v184
    %v707 = vunpack.c.l.b16 %v185
    %v708 = vunpack.c.h.b16 %v185
    %v709 = vunpack.c.l.b16 %v186
    %v710 = vunpack.c.h.b16 %v186
    %v711 = vunpack.c.l.b16 %v187
    %v712 = vunpack.c.h.b16 %v187
    %v713 = vunpack.c.l.b16 %v188
    %v714 = vunpack.c.h.b16 %v188
    %v715 = vunpack.c.l.b16 %v189
    %v716 = vunpack.c.h.b16 %v189
    %v717 = vunpack.c.l.b16 %v190
    %v718 = vunpack.c.h.b16 %v190
    %v719 = vunpack.c.l.b16 %v191
    %v720 = vunpack.c.h.b16 %v191
    %v721 = vunpack.c.l.b16 %v192
    %v722 = vunpack.c.h.b16 %v192
    %v723 = vunpack.c.l.b16 %v193
    %v724 = vunpack.c.h.b16 %v193
    %v725 = vunpack.c.l.b16 %v194
    %v726 = vunpack.c.h.b16 %v194
    %v727 = vunpack.c.l.b16 %v195
    %v728 = vunpack.c.h.b16 %v195
    %v729 = vunpack.c.l.b16 %v196
    %v730 = vunpack.c.h.b16 %v196
    %v731 = vunpack.c.l.b16 %v197
    %v732 = vunpack.c.h.b16 %v197
    %v733 = vunpack.c.l.b16 %v198
    %v734 = vunpack.c.h.b16 %v198
    %v735 = vunpack.c.l.b16 %v199
    %v736 = vunpack.c.h.b16 %v199
    %v737 = vunpack.c.l.b16 %v200
    %v738 = vunpack.c.h.b16 %v200
    %v739 = vunpack.c.l.b16 %v201
    %v740 = vunpack.c.h.b16 %v201
    %v741 = vunpack.c.l.b16 %v202
    %v742 = vunpack.c.h.b16 %v202
    %v743 = vunpack.c.l.b16 %v203
    %v744 = vunpack.c.h.b16 %v203
    %v745 = vunpack.c.l.b16 %v204
    %v746 = vunpack.c.h.b16 %v204
    %v747 = vunpack.c.l.b16 %v205
    %v748 = vunpack.c.h.b16 %v205
    %v749 = vunpack.c.l.b16 %v206
    %v750 = vunpack.c.h.b16 %v206
    %v751 = vunpack.c.l.b16 %v207
    %v752 = vunpack.c.h.b16 %v207
    %v753 = vunpack.c.l.b16 %v208
    %v754 = vunpack.c.h.b16 %v208
    %v755 = vunpack.c.l.b16 %v209
    %v756 = vunpack.c.h.b16 %v209
    %v757 = vunpack.c.l.b16 %v210
    %v758 = vunpack.c.h.b16 %v210
    %v759 = vunpack.c.l.b16 %v211
    %v760 = vunpack.c.h.b16 %v211
    %v761 = vunpack.c.l.b16 %v212
    %v762 = vunpack.c.h.b16 %v212
    %v763 = vunpack.c.l.b16 %v213
    %v764 = vunpack.c.h.b16 %v213
    %v765 = vunpack.c.l.b16 %v214
    %v766 = vunpack.c.h.b16 %v214
    %v767 = vunpack.c.l.b16 %v215
    %v768 = vunpack.c.h.b16 %v215
    %v769 = vunpack.c.l.b16 %v216
    %v770 = vunpack.c.h.b16 %v216
    %v771 = vunpack.c.l.b16 %v217
    %v772 = vunpack.c.h.b16 %v217
    %v773 = vunpack.c.l.b16 %v218
    %v774 = vunpack.c.h.b16 %v218
    %v775 = vunpack.c.l.b16 %v219
    %v776 = vunpack.c.h.b16 %v219
    %v777 = vunpack.c.l.b16 %v220
    %v778 = vunpack.c.h.b16 %v220
    %v779 = vunpack.c.l.b16 %v221
    %v780 = vunpack.c.h.b16 %v221
    %v781 = vunpack.c.l.b16 %v222
    %v782 = vunpack.c.h.b16 %v222
    %v783 = vunpack.c.l.b16 %v223
    %v784 = vunpack.c.h.b16 %v223
    %v785 = vunpack.c.l.b16 %v224
    %v786 = vunpack.c.h.b16 %v224
    %v787 = vunpack.c.l.b16 %v225
    %v788 = vunpack.c.h.b16 %v225
    %v789 = vunpack.c.l.b16 %v226
    %v790 = vunpack.c.h.b16 %v226
    %v791 = vunpack.c.l.b16 %v227
    %v792 = vunpack.c.h.b16 %v227
    %v793 = vunpack.c.l.b16 %v228
    %v794 = vunpack.c.h.b16 %v228
    %v795 = vunpack.c.l.b16 %v229
    %v796 = vunpack.c.h.b16 %v229
    %v797 = vunpack.c.l.b16 %v230
    %v798 = vunpack.c.h.b16 %v230
    %v799 = vunpack.c.l.b16 %v231
    %v800 = vunpack.c.h.b16 %v231
    %v801 = vunpack.c.l.b16 %v232
    %v802 = vunpack.c.h.b16 %v232
    %v803 = vunpack.c.l.b16 %v233
    %v804 = vunpack.c.h.b16 %v233
    %v805 = vunpack.c.l.b16 %v234
    %v806 = vunpack.c.h.b16 %v234
    %v807 = vunpack.c.l.b16 %v235
    %v808 = vunpack.c.h.b16 %v235
    %v809 = vunpack.c.l.b16 %v236
    %v810 = vunpack.c.h.b16 %v236
    %v811 = vunpack.c.l.b16 %v237
    %v812 = vunpack.c.h.b16 %v237
    %v813 = vunpack.c.l.b16 %v238
    %v814 = vunpack.c.h.b16 %v238
    %v815 = vunpack.c.l.b16 %v239
    %v816 = vunpack.c.h.b16 %v239
    %v817 = vunpack.c.l.b16 %v240
    %v818 = vunpack.c.h.b16 %v240
    %v819 = vunpack.c.l.b16 %v241
    %v820 = vunpack.c.h.b16 %v241
    %v821 = vunpack.c.l.b16 %v242
    %v822 = vunpack.c.h.b16 %v242
    %v823 = vunpack.c.l.b16 %v243
    %v824 = vunpack.c.h.b16 %v243
    %v825 = vunpack.c.l.b16 %v244
    %v826 = vunpack.c.h.b16 %v244
    %v827 = vunpack.c.l.b16 %v245
    %v828 = vunpack.c.h.b16 %v245
    %v829 = vunpack.c.l.b16 %v246
    %v830 = vunpack.c.h.b16 %v246
    %v831 = vunpack.c.l.b16 %v247
    %v832 = vunpack.c.h.b16 %v247
    %v833 = vunpack.c.l.b16 %v248
    %v834 = vunpack.c.h.b16 %v248
    %v835 = vunpack.c.l.b16 %v249
    %v836 = vunpack.c.h.b16 %v249
    %v837 = vunpack.c.l.b16 %v250
    %v838 = vunpack.c.h.b16 %v250
    %v839 = vunpack.c.l.b16 %v251
    %v840 = vunpack.c.h.b16 %v251
    %v841 = vunpack.c.l.b16 %v252
    %v842 = vunpack.c.h.b16 %v252
    %v843 = vunpack.c.l.b16 %v253
    %v844 = vunpack.c.h.b16 %v253
    %v845 = vunpack.c.l.b16 %v254
    %v846 = vunpack.c.h.b16 %v254
    %v847 = vunpack.c.l.b16 %v255
    %v848 = vunpack.c.h.b16 %v255
    %v849 = vunpack.c.l.b16 %v256
    %v850 = vunpack.c.h.b16 %v256
    %v851 = vunpack.c.l.b16 %v257
    %v852 = vunpack.c.h.b16 %v257
    %v853 = vunpack.c.l.b16 %v258
    %v854 = vunpack.c.h.b16 %v258
    %v855 = vunpack.c.l.b16 %v259
    %v856 = vunpack.c.h.b16 %v259
    %v857 = vunpack.c.l.b16 %v260
    %v858 = vunpack.c.h.b16 %v260
    %v859 = vunpack.c.l.b16 %v261
    %v860 = vunpack.c.h.b16 %v261
    %v861 = vunpack.c.l.b16 %v262
    %v862 = vunpack.c.h.b16 %v262
    %v863 = vunpack.c.l.b16 %v263
    %v864 = vunpack.c.h.b16 %v263
    %v865 = vunpack.c.l.b16 %v264
    %v866 = vunpack.c.h.b16 %v264
    %v867 = vunpack.c.l.b16 %v265
    %v868 = vunpack.c.h.b16 %v265
    %v869 = vunpack.c.l.b16 %v266
    %v870 = vunpack.c.h.b16 %v266
    %v871 = vunpack.c.l.b16 %v267
    %v872 = vunpack.c.h.b16 %v267
    %v873 = vunpack.c.l.b16 %v268
    %v874 = vunpack.c.h.b16 %v268
    %v875 = vunpack.c.l.b16 %v269
    %v876 = vunpack.c.h.b16 %v269
    %v877 = vunpack.c.l.b16 %v270
    %v878 = vunpack.c.h.b16 %v270
    %v879 = vunpack.c.l.b16 %v271
    %v880 = vunpack.c.h.b16 %v271
    %v881 = vunpack.c.l.b16 %v272
    %v882 = vunpack.c.h.b16 %v272
    %v883 = vunpack.c.l.b16 %v273
    %v884 = vunpack.c.h.b16 %v273
    %v885 = vunpack.c.l.b16 %v274
    %v886 = vunpack.c.h.b16 %v274
    %v887 = vunpack.c.l.b16 %v275
    %v888 = vunpack.c.h.b16 %v275
    %v889 = vunpack.c.l.b16 %v276
    %v890 = vunpack.c.h.b16 %v276
    %v891 = vunpack.c.l.b16 %v277
    %v892 = vunpack.c.h.b16 %v277
    %v893 = vunpack.c.l.b16 %v278
    %v894 = vunpack.c.h.b16 %v278
    %v895 = vunpack.c.l.b16 %v279
    %v896 = vunpack.c.h.b16 %v279
    %v897 = vunpack.c.l.b16 %v280
    %v898 = vunpack.c.h.b16 %v280
    %v899 = vunpack.c.l.b16 %v281
    %v900 = vunpack.c.h.b16 %v281
    %v901 = vunpack.c.l.b16 %v282
    %v902 = vunpack.c.h.b16 %v282
    %v903 = vunpack.c.l.b16 %v283
    %v904 = vunpack.c.h.b16 %v283
    %v905 = vunpack.c.l.b16 %v284
    %v906 = vunpack.c.h.b16 %v284
    %v907 = vunpack.c.l.b16 %v285
    %v908 = vunpack.c.h.b16 %v285
    %v909 = vunpack.c.l.b16 %v286
    %v910 = vunpack.c.h.b16 %v286
    %v911 = vunpack.c.l.b16 %v287
    %v912 = vunpack.c.h.b16 %v287
    %v913 = vunpack.c.l.b16 %v288
    %v914 = vunpack.c.h.b16 %v288
    %v915 = vunpack.c.l.b16 %v289
    %v916 = vunpack.c.h.b16 %v289
    %v917 = vunpack.c.l.b16 %v290
    %v918 = vunpack.c.h.b16 %v290
    %v919 = vunpack.c.l.b16 %v291
    %v920 = vunpack.c.h.b16 %v291
    %v921 = vunpack.c.l.b16 %v292
    %v922 = vunpack.c.h.b16 %v292
    %v923 = vunpack.c.l.b16 %v293
    %v924 = vunpack.c.h.b16 %v293
    %v925 = vunpack.c.l.b16 %v294
    %v926 = vunpack.c.h.b16 %v294
    %v927 = vunpack.c.l.b16 %v295
    %v928 = vunpack.c.h.b16 %v295
    %v929 = vunpack.c.l.b16 %v296
    %v930 = vunpack.c.h.b16 %v296
    %v931 = vunpack.c.l.b16 %v297
    %v932 = vunpack.c.h.b16 %v297
    %v933 = vunpack.c.l.b16 %v298
    %v934 = vunpack.c.h.b16 %v298
    %v935 = vunpack.c.l.b16 %v299
    %v936 = vunpack.c.h.b16 %v299
    %v937 = vunpack.c.l.b16 %v300
    %v938 = vunpack.c.h.b16 %v300
    %v939 = vunpack.c.l.b16 %v301
    %v940 = vunpack.c.h.b16 %v301
    %v941 = vunpack.c.l.b16 %v302
    %v942 = vunpack.c.h.b16 %v302
    %v943 = vunpack.c.l.b16 %v303
    %v944 = vunpack.c.h.b16 %v303
    %v945 = vunpack.c.l.b16 %v304
    %v946 = vunpack.c.h.b16 %v304
    %v947 = vunpack.c.l.b16 %v305
    %v948 = vunpack.c.h.b16 %v305
    %v949 = vunpack.c.l.b16 %v306
    %v950 = vunpack.c.h.b16 %v306
    %v951 = vunpack.c.l.b16 %v307
    %v952 = vunpack.c.h.b16 %v307
    %v953 = vunpack.c.l.b16 %v308
    %v954 = vunpack.c.h.b16 %v308
    %v955 = vunpack.c.l.b16 %v309
    %v956 = vunpack.c.h.b16 %v309
    %v957 = vunpack.c.l.b16 %v310
    %v958 = vunpack.c.h.b16 %v310
    %v959 = vunpack.c.l.b16 %v311
    %v960 = vunpack.c.h.b16 %v311
    %v961 = vunpack.c.l.b16 %v312
    %v962 = vunpack.c.h.b16 %v312
    %v963 = vunpack.c.l.b16 %v313
    %v964 = vunpack.c.h.b16 %v313
    %v965 = vunpack.c.l.b16 %v314
    %v966 = vunpack.c.h.b16 %v314
    %v967 = vunpack.c.l.b16 %v315
    %v968 = vunpack.c.h.b16 %v315
    %v969 = vunpack.c.l.b16 %v316
    %v970 = vunpack.c.h.b16 %v316
    %v971 = vunpack.c.l.b16 %v317
    %v972 = vunpack.c.h.b16 %v317
    %v973 = vunpack.c.l.b16 %v318
    %v974 = vunpack.c.h.b16 %v318
    %v975 = vunpack.c.l.b16 %v319
    %v976 = vunpack.c.h.b16 %v319
    %v977 = vunpack.c.l.b16 %v320
    %v978 = vunpack.c.h.b16 %v320
    %v979 = vunpack.c.l.b16 %v321
    %v980 = vunpack.c.h.b16 %v321
    %v981 = vunpack.c.l.b16 %v322
    %v982 = vunpack.c.h.b16 %v322
    %v983 = vunpack.c.l.b16 %v323
    %v984 = vunpack.c.h.b16 %v323
    %v985 = vunpack.c.l.b16 %v324
    %v986 = vunpack.c.h.b16 %v324
    %v987 = vunpack.c.l.b16 %v325
    %v988 = vunpack.c.h.b16 %v325
    %v989 = vunpack.c.l.b16 %v326
    %v990 = vunpack.c.h.b16 %v326
    %v991 = vunpack.c.l.b16 %v327
    %v992 = vunpack.c.h.b16 %v327
    %v993 = vunpack.c.l.b16 %v328
    %v994 = vunpack.c.h.b16 %v328
    %v995 = vunpack.c.l.b16 %v329
    %v996 = vunpack.c.h.b16 %v329
    %v997 = vunpack.c.l.b16 %v330
    %v998 = vunpack.c.h.b16 %v330
    %v999 = vunpack.c.l.b16 %v331
    %v1000 = vunpack.c.h.b16 %v331
    %v1001 = vunpack.c.l.b16 %v332
    %v1002 = vunpack.c.h.b16 %v332
    %v1003 = vunpack.c.l.b16 %v333
    %v1004 = vunpack.c.h.b16 %v333
    %v1005 = vunpack.c.l.b16 %v334
    %v1006 = vunpack.c.h.b16 %v334
    %v1007 = vunpack.c.l.b16 %v335
    %v1008 = vunpack.c.h.b16 %v335
    %v1009 = vunpack.c.l.b16 %v336
    %v1010 = vunpack.c.h.b16 %v336
    %v1011 = vunpack.c.l.b16 %v337
    %v1012 = vunpack.c.h.b16 %v337
    %v1013 = vunpack.c.l.b16 %v338
    %v1014 = vunpack.c.h.b16 %v338
    %v1015 = vunpack.c.l.b16 %v339
    %v1016 = vunpack.c.h.b16 %v339
    %v1017 = vunpack.c.l.b16 %v340
    %v1018 = vunpack.c.h.b16 %v340
    %v1019 = vunpack.c.l.b16 %v341
    %v1020 = vunpack.c.h.b16 %v341
    %v1021 = vunpack.c.l.b16 %v342
    %v1022 = vunpack.c.h.b16 %v342
    %v1023 = vunpack.c.l.b16 %v343
    %v1024 = vunpack.c.h.b16 %v343
    %v1025 = vunpack.c.l.b16 %v344
    %v1026 = vunpack.c.h.b16 %v344
    %v1027 = vunpack.c.l.b16 %v345
    %v1028 = vunpack.c.h.b16 %v345
    %v1029 = vunpack.c.l.b16 %v346
    %v1030 = vunpack.c.h.b16 %v346
    %v1031 = vunpack.c.l.b16 %v347
    %v1032 = vunpack.c.h.b16 %v347
    %v1033 = vunpack.c.l.b16 %v348
    %v1034 = vunpack.c.h.b16 %v348
    %v1035 = vunpack.c.l.b16 %v349
    %v1036 = vunpack.c.h.b16 %v349
    %v1037 = vunpack.c.l.b16 %v350
    %v1038 = vunpack.c.h.b16 %v350
    %v1039 = vunpack.c.l.b16 %v351
    %v1040 = vunpack.c.h.b16 %v351
    %v1041 = vunpack.c.l.b16 %v352
    %v1042 = vunpack.c.h.b16 %v352
    %v1043 = vunpack.c.l.b16 %v353
    %v1044 = vunpack.c.h.b16 %v353
    %v1045 = vunpack.c.l.b16 %v354
    %v1046 = vunpack.c.h.b16 %v354
    %v1047 = vunpack.c.l.b16 %v355
    %v1048 = vunpack.c.h.b16 %v355
    %v1049 = vunpack.c.l.b16 %v356
    %v1050 = vunpack.c.h.b16 %v356
    %v1051 = vunpack.c.l.b16 %v357
    %v1052 = vunpack.c.h.b16 %v357
    %v1053 = vunpack.c.l.b16 %v358
    %v1054 = vunpack.c.h.b16 %v358
    %v1055 = vunpack.c.l.b16 %v359
    %v1056 = vunpack.c.h.b16 %v359
    %v1057 = vunpack.c.l.b16 %v360
    %v1058 = vunpack.c.h.b16 %v360
    %v1059 = vunpack.c.l.b16 %v361
    %v1060 = vunpack.c.h.b16 %v361
    %v1061 = vunpack.c.l.b16 %v362
    %v1062 = vunpack.c.h.b16 %v362
    %v1063 = vunpack.c.l.b16 %v363
    %v1064 = vunpack.c.h.b16 %v363
    %v1065 = vunpack.c.l.b16 %v364
    %v1066 = vunpack.c.h.b16 %v364
    %v1067 = vunpack.c.l.b16 %v365
    %v1068 = vunpack.c.h.b16 %v365
    %v1069 = vunpack.c.l.b16 %v366
    %v1070 = vunpack.c.h.b16 %v366
    %v1071 = vunpack.c.l.b16 %v367
    %v1072 = vunpack.c.h.b16 %v367
    %v1073 = vunpack.c.l.b16 %v368
    %v1074 = vunpack.c.h.b16 %v368
    %v1075 = vunpack.c.l.b16 %v369
    %v1076 = vunpack.c.h.b16 %v369
    %v1077 = vunpack.c.l.b16 %v370
    %v1078 = vunpack.c.h.b16 %v370
    %v1079 = vunpack.c.l.b16 %v371
    %v1080 = vunpack.c.h.b16 %v371
    %v1081 = vunpack.c.l.b16 %v372
    %v1082 = vunpack.c.h.b16 %v372
    %v1083 = vunpack.c.l.b16 %v373
    %v1084 = vunpack.c.h.b16 %v373
    %v1085 = vunpack.c.l.b16 %v374
    %v1086 = vunpack.c.h.b16 %v374
    %v1087 = vunpack.c.l.b16 %v375
    %v1088 = vunpack.c.h.b16 %v375
    %v1089 = vunpack.c.l.b16 %v376
    %v1090 = vunpack.c.h.b16 %v376
    %v1091 = vunpack.c.l.b16 %v377
    %v1092 = vunpack.c.h.b16 %v377
    %v1093 = vunpack.c.l.b16 %v378
    %v1094 = vunpack.c.h.b16 %v378
    %v1095 = vunpack.c.l.b16 %v379
    %v1096 = vunpack.c.h.b16 %v379
    %v1097 = vunpack.c.l.b16 %v380
    %v1098 = vunpack.c.h.b16 %v380
    %v1099 = vunpack.c.l.b16 %v381
    %v1100 = vunpack.c.h.b16 %v381
    %v1101 = vunpack.c.l.b16 %v382
    %v1102 = vunpack.c.h.b16 %v382
    %v1103 = vunpack.c.l.b16 %v383
    %v1104 = vunpack.c.h.b16 %v383
    %v1105 = vunpack.c.l.b16 %v384
    %v1106 = vunpack.c.h.b16 %v384
    %v1107 = vunpack.c.l.b16 %v385
    %v1108 = vunpack.c.h.b16 %v385
    %v1109 = vunpack.c.l.b16 %v386
    %v1110 = vunpack.c.h.b16 %v386
    %v1111 = vunpack.c.l.b16 %v387
    %v1112 = vunpack.c.h.b16 %v387
    %v1113 = vunpack.c.l.b16 %v388
    %v1114 = vunpack.c.h.b16 %v388
    %v1115 = vunpack.c.l.b16 %v389
    %v1116 = vunpack.c.h.b16 %v389
    %v1117 = vunpack.c.l.b16 %v390
    %v1118 = vunpack.c.h.b16 %v390
    %v1119 = vunpack.c.l.b16 %v391
    %v1120 = vunpack.c.h.b16 %v391
    %v1121 = vunpack.c.l.b16 %v392
    %v1122 = vunpack.c.h.b16 %v392
    %v1123 = vpack.c.b16 %v679, %v675
    %v1124 = vpack.c.b16 %v680, %v676
    %v1125 = vpack.c.b16 %v681, %v677
    %v1126 = vpack.c.b16 %v682, %v678
    %v1127 = vpack.c.b16 %v687, %v683
    %v1128 = vpack.c.b16 %v688, %v684
    %v1129 = vpack.c.b16 %v689, %v685
    %v1130 = vpack.c.b16 %v690, %v686
    %v1131 = vpack.c.b16 %v695, %v691
    %v1132 = vpack.c.b16 %v696, %v692
    %v1133 = vpack.c.b16 %v697, %v693
    %v1134 = vpack.c.b16 %v698, %v694
    %v1135 = vpack.c.b16 %v703, %v699
    %v1136 = vpack.c.b16 %v704, %v700
    %v1137 = vpack.c.b16 %v705, %v701
    %v1138 = vpack.c.b16 %v706, %v702
    %v1139 = vpack.c.b16 %v711, %v707
    %v1140 = vpack.c.b16 %v712, %v708
    %v1141 = vpack.c.b16 %v713, %v709
    %v1142 = vpack.c.b16 %v714, %v710
    %v1143 = vpack.c.b16 %v719, %v715
    %v1144 = vpack.c.b16 %v720, %v716
    %v1145 = vpack.c.b16 %v721, %v717
    %v1146 = vpack.c.b16 %v722, %v718
    %v1147 = vpack.c.b16 %v727, %v723
    %v1148 = vpack.c.b16 %v728, %v724
    %v1149 = vpack.c.b16 %v729, %v725
    %v1150 = vpack.c.b16 %v730, %v726
    %v1151 = vpack.c.b16 %v735, %v731
    %v1152 = vpack.c.b16 %v736, %v732
    %v1153 = vpack.c.b16 %v737, %v733
    %v1154 = vpack.c.b16 %v738, %v734
    %v1155 = vpack.c.b16 %v743, %v739
    %v1156 = vpack.c.b16 %v744, %v740
    %v1157 = vpack.c.b16 %v745, %v741
    %v1158 = vpack.c.b16 %v746, %v742
    %v1159 = vpack.c.b16 %v751, %v747
    %v1160 = vpack.c.b16 %v752, %v748
    %v1161 = vpack.c.b16 %v753, %v749
    %v1162 = vpack.c.b16 %v754, %v750
    %v1163 = vpack.c.b16 %v759, %v755
    %v1164 = vpack.c.b16 %v760, %v756
    %v1165 = vpack.c.b16 %v761, %v757
    %v1166 = vpack.c.b16 %v762, %v758
    %v1167 = vpack.c.b16 %v767, %v763
    %v1168 = vpack.c.b16 %v768, %v764
    %v1169 = vpack.c.b16 %v769, %v765
    %v1170 = vpack.c.b16 %v770, %v766
    %v1171 = vpack.c.b16 %v775, %v771
    %v1172 = vpack.c.b16 %v776, %v772
    %v1173 = vpack.c.b16 %v777, %v773
    %v1174 = vpack.c.b16 %v778, %v774
    %v1175 = vpack.c.b16 %v783, %v779
    %v1176 = vpack.c.b16 %v784, %v780
    %v1177 = vpack.c.b16 %v785, %v781
    %v1178 = vpack.c.b16 %v786, %v782
    %v1179 = vpack.c.b16 %v791, %v787
    %v1180 = vpack.c.b16 %v792, %v788
    %v1181 = vpack.c.b16 %v793, %v789
    %v1182 = vpack.c.b16 %v794, %v790
    %v1183 = vpack.c.b16 %v799, %v795
    %v1184 = vpack.c.b16 %v800, %v796
    %v1185 = vpack.c.b16 %v801, %v797
    %v1186 = vpack.c.b16 %v802, %v798
    %v1187 = vpack.c.b16 %v807, %v803
    %v1188 = vpack.c.b16 %v808, %v804
    %v1189 = vpack.c.b16 %v809, %v805
    %v1190 = vpack.c.b16 %v810, %v806
    %v1191 = vpack.c.b16 %v815, %v811
    %v1192 = vpack.c.b16 %v816, %v812
    %v1193 = vpack.c.b16 %v817, %v813
    %v1194 = vpack.c.b16 %v818, %v814
    %v1195 = vpack.c.b16 %v823, %v819
    %v1196 = vpack.c.b16 %v824, %v820
    %v1197 = vpack.c.b16 %v825, %v821
    %v1198 = vpack.c.b16 %v826, %v822
    %v1199 = vpack.c.b16 %v831, %v827
    %v1200 = vpack.c.b16 %v832, %v828
    %v1201 = vpack.c.b16 %v833, %v829
    %v1202 = vpack.c.b16 %v834, %v830
    %v1203 = vpack.c.b16 %v839, %v835
    %v1204 = vpack.c.b16 %v840, %v836
    %v1205 = vpack.c.b16 %v841, %v837
    %v1206 = vpack.c.b16 %v842, %v838
    %v1207 = vpack.c.b16 %v847, %v843
    %v1208 = vpack.c.b16 %v848, %v844
    %v1209 = vpack.c.b16 %v849, %v845
    %v1210 = vpack.c.b16 %v850, %v846
    %v1211 = vpack.c.b16 %v855, %v851
    %v1212 = vpack.c.b16 %v856, %v852
    %v1213 = vpack.c.b16 %v857, %v853
    %v1214 = vpack.c.b16 %v858, %v854
    %v1215 = vpack.c.b16 %v863, %v859
    %v1216 = vpack.c.b16 %v864, %v860
    %v1217 = vpack.c.b16 %v865, %v861
    %v1218 = vpack.c.b16 %v866, %v862
    %v1219 = vpack.c.b16 %v871, %v867
    %v1220 = vpack.c.b16 %v872, %v868
    %v1221 = vpack.c.b16 %v873, %v869
    %v1222 = vpack.c.b16 %v874, %v870
    %v1223 = vpack.c.b16 %v879, %v875
    %v1224 = vpack.c.b16 %v880, %v876
    %v1225 = vpack.c.b16 %v881, %v877
    %v1226 = vpack.c.b16 %v882, %v878
    %v1227 = vpack.c.b16 %v887, %v883
    %v1228 = vpack.c.b16 %v888, %v884
    %v1229 = vpack.c.b16 %v889, %v885
    %v1230 = vpack.c.b16 %v890, %v886
    %v1231 = vpack.c.b16 %v895, %v891
    %v1232 = vpack.c.b16 %v896, %v892
    %v1233 = vpack.c.b16 %v897, %v893
    %v1234 = vpack.c.b16 %v898, %v894
    %v1235 = vpack.c.b16 %v903, %v899
    %v1236 = vpack.c.b16 %v904, %v900
    %v1237 = vpack.c.b16 %v905, %v901
    %v1238 = vpack.c.b16 %v906, %v902
    %v1239 = vpack.c.b16 %v911, %v907
    %v1240 = vpack.c.b16 %v912, %v908
    %v1241 = vpack.c.b16 %v913, %v909
    %v1242 = vpack.c.b16 %v914, %v910
    %v1243 = vpack.c.b16 %v919, %v915
    %v1244 = vpack.c.b16 %v920, %v916
    %v1245 = vpack.c.b16 %v921, %v917
    %v1246 = vpack.c.b16 %v922, %v918
    %v1247 = vpack.c.b16 %v927, %v923
    %v1248 = vpack.c.b16 %v928, %v924
    %v1249 = vpack.c.b16 %v929, %v925
    %v1250 = vpack.c.b16 %v930, %v926
    %v1251 = vpack.c.b16 %v935, %v931
    %v1252 = vpack.c.b16 %v936, %v932
    %v1253 = vpack.c.b16 %v937, %v933
    %v1254 = vpack.c.b16 %v938, %v934
    %v1255 = vpack.c.b16 %v943, %v939
    %v1256 = vpack.c.b16 %v944, %v940
    %v1257 = vpack.c.b16 %v945, %v941
    %v1258 = vpack.c.b16 %v946, %v942
    %v1259 = vpack.c.b16 %v951, %v947
    %v1260 = vpack.c.b16 %v952, %v948
    %v1261 = vpack.c.b16 %v953, %v949
    %v1262 = vpack.c.b16 %v954, %v950
    %v1263 = vpack.c.b16 %v959, %v955
    %v1264 = vpack.c.b16 %v960, %v956
    %v1265 = vpack.c.b16 %v961, %v957
    %v1266 = vpack.c.b16 %v962, %v958
    %v1267 = vpack.c.b16 %v967, %v963
    %v1268 = vpack.c.b16 %v968, %v964
    %v1269 = vpack.c.b16 %v969, %v965
    %v1270 = vpack.c.b16 %v970, %v966
    %v1271 = vpack.c.b16 %v975, %v971
    %v1272 = vpack.c.b16 %v976, %v972
    %v1273 = vpack.c.b16 %v977, %v973
    %v1274 = vpack.c.b16 %v978, %v974
    %v1275 = vpack.c.b16 %v983, %v979
    %v1276 = vpack.c.b16 %v984, %v980
    %v1277 = vpack.c.b16 %v985, %v981
    %v1278 = vpack.c.b16 %v986, %v982
    %v1279 = vpack.c.b16 %v991, %v987
    %v1280 = vpack.c.b16 %v992, %v988
    %v1281 = vpack.c.b16 %v993, %v989
    %v1282 = vpack.c.b16 %v994, %v990
    %v1283 = vpack.c.b16 %v999, %v995
    %v1284 = vpack.c.b16 %v1000, %v996
    %v1285 = vpack.c.b16 %v1001, %v997
    %v1286 = vpack.c.b16 %v1002, %v998
    %v1287 = vpack.c.b16 %v1007, %v1003
    %v1288 = vpack.c.b16 %v1008, %v1004
    %v1289 = vpack.c.b16 %v1009, %v1005
    %v1290 = vpack.c.b16 %v1010, %v1006
    %v1291 = vpack.c.b16 %v1015, %v1011
    %v1292 = vpack.c.b16 %v1016, %v1012
    %v1293 = vpack.c.b16 %v1017, %v1013
    %v1294 = vpack.c.b16 %v1018, %v1014
    %v1295 = vpack.c.b16 %v1023, %v1019
    %v1296 = vpack.c.b16 %v1024, %v1020
    %v1297 = vpack.c.b16 %v1025, %v1021
    %v1298 = vpack.c.b16 %v1026, %v1022
    %v1299 = vpack.c.b16 %v1031, %v1027
    %v1300 = vpack.c.b16 %v1032, %v1028
    %v1301 = vpack.c.b16 %v1033, %v1029
    %v1302 = vpack.c.b16 %v1034, %v1030
    %v1303 = vpack.c.b16 %v1039, %v1035
    %v1304 = vpack.c.b16 %v1040, %v1036
    %v1305 = vpack.c.b16 %v1041, %v1037
    %v1306 = vpack.c.b16 %v1042, %v1038
    %v1307 = vpack.c.b16 %v1047, %v1043
    %v1308 = vpack.c.b16 %v1048, %v1044
    %v1309 = vpack.c.b16 %v1049, %v1045
    %v1310 = vpack.c.b16 %v1050, %v1046
    %v1311 = vpack.c.b16 %v1055, %v1051
    %v1312 = vpack.c.b16 %v1056, %v1052
    %v1313 = vpack.c.b16 %v1057, %v1053
    %v1314 = vpack.c.b16 %v1058, %v1054
    %v1315 = vpack.c.b16 %v1063, %v1059
    %v1316 = vpack.c.b16 %v1064, %v1060
    %v1317 = vpack.c.b16 %v1065, %v1061
    %v1318 = vpack.c.b16 %v1066, %v1062
    %v1319 = vpack.c.b16 %v1071, %v1067
    %v1320 = vpack.c.b16 %v1072, %v1068
    %v1321 = vpack.c.b16 %v1073, %v1069
    %v1322 = vpack.c.b16 %v1074, %v1070
    %v1323 = vpack.c.b16 %v1079, %v1075
    %v1324 = vpack.c.b16 %v1080, %v1076
    %v1325 = vpack.c.b16 %v1081, %v1077
    %v1326 = vpack.c.b16 %v1082, %v1078
    %v1327 = vpack.c.b16 %v1087, %v1083
    %v1328 = vpack.c.b16 %v1088, %v1084
    %v1329 = vpack.c.b16 %v1089, %v1085
    %v1330 = vpack.c.b16 %v1090, %v1086
    %v1331 = vpack.c.b16 %v1095, %v1091
    %v1332 = vpack.c.b16 %v1096, %v1092
    %v1333 = vpack.c.b16 %v1097, %v1093
    %v1334 = vpack.c.b16 %v1098, %v1094
    %v1335 = vpack.c.b16 %v1103, %v1099
    %v1336 = vpack.c.b16 %v1104, %v1100
    %v1337 = vpack.c.b16 %v1105, %v1101
    %v1338 = vpack.c.b16 %v1106, %v1102
    %v1339 = vpack.c.b16 %v1111, %v1107
    %v1340 = vpack.c.b16 %v1112, %v1108
    %v1341 = vpack.c.b16 %v1113, %v1109
    %v1342 = vpack.c.b16 %v1114, %v1110
    %v1343 = vpack.c.b16 %v1119, %v1115
    %v1344 = vpack.c.b16 %v1120, %v1116
    %v1345 = vpack.c.b16 %v1121, %v1117
    %v1346 = vpack.c.b16 %v1122, %v1118
    %1571 = vmatprep.subr.bf16.mxu0 %v1124
    %1572 = vmatpush1.bf16.msra.mxu0 %v1123
    %1573 = vmatprep.subr.bf16.mxu0 %v1128
    %1574 = vmatpush1.bf16.msra.mxu0 %v1127
    %1575 = vmatprep.subr.bf16.mxu0 %v1132
    %1576 = vmatpush1.bf16.msra.mxu0 %v1131
    %1577 = vmatprep.subr.bf16.mxu0 %v1136
    %1578 = vmatpush1.bf16.msra.mxu0 %v1135
    %1579 = vmatprep.subr.bf16.mxu0 %v1140
    %1580 = vmatpush1.bf16.msra.mxu0 %v1139
    %1581 = vmatprep.subr.bf16.mxu0 %v1144
    %1582 = vmatpush1.bf16.msra.mxu0 %v1143
    %1583 = vmatprep.subr.bf16.mxu0 %v1148
    %1584 = vmatpush1.bf16.msra.mxu0 %v1147
    %1585 = vmatprep.subr.bf16.mxu0 %v1152
    %1586 = vmatpush1.bf16.msra.mxu0 %v1151
    %1587 = vmatprep.subr.bf16.mxu0 %v1156
    %1588 = vmatpush1.bf16.msra.mxu0 %v1155
    %1589 = vmatprep.subr.bf16.mxu0 %v1160
    %1590 = vmatpush1.bf16.msra.mxu0 %v1159
    %1591 = vmatprep.subr.bf16.mxu0 %v1164
    %1592 = vmatpush1.bf16.msra.mxu0 %v1163
    %1593 = vmatprep.subr.bf16.mxu0 %v1168
    %1594 = vmatpush1.bf16.msra.mxu0 %v1167
    %1595 = vmatprep.subr.bf16.mxu0 %v1172
    %1596 = vmatpush1.bf16.msra.mxu0 %v1171
    %1597 = vmatprep.subr.bf16.mxu0 %v1176
    %1598 = vmatpush1.bf16.msra.mxu0 %v1175
    %1599 = vmatprep.subr.bf16.mxu0 %v1180
    %1600 = vmatpush1.bf16.msra.mxu0 %v1179
    %1601 = vmatprep.subr.bf16.mxu0 %v1184
    %1602 = vmatpush1.bf16.msra.mxu0 %v1183
    %1603 = vmatprep.mubr.bf16.mxu0 %v438
    %1604 = vmatmul.mubr.bf16.gmra.mrb[0].mxu0 %v437
    %v1605 = vpop.f32.mrb[0].mxu0
    %v1606 = vadd.f32 %v398, %v1605
    %v1607 = vpop.f32.mrb[0].mxu0
    %v1608 = vadd.f32 %v402, %v1607
    %v1609 = vpop.f32.mrb[0].mxu0
    %v1610 = vadd.f32 %v398, %v1609
    %v1611 = vpop.f32.mrb[0].mxu0
    %v1612 = vadd.f32 %v402, %v1611
    %1613 = vdwg.mxu0
    %1614 = vmatprep.subr.bf16.mxu0 %v1188
    %1615 = vmatpush1.bf16.msra.mxu0 %v1187
    %1616 = vmatprep.subr.bf16.mxu0 %v1192
    %1617 = vmatpush1.bf16.msra.mxu0 %v1191
    %1618 = vmatprep.subr.bf16.mxu0 %v1196
    %1619 = vmatpush1.bf16.msra.mxu0 %v1195
    %1620 = vmatprep.subr.bf16.mxu0 %v1200
    %1621 = vmatpush1.bf16.msra.mxu0 %v1199
    %1622 = vmatprep.subr.bf16.mxu0 %v1204
    %1623 = vmatpush1.bf16.msra.mxu0 %v1203
    %1624 = vmatprep.subr.bf16.mxu0 %v1208
    %1625 = vmatpush1.bf16.msra.mxu0 %v1207
    %1626 = vmatprep.subr.bf16.mxu0 %v1212
    %1627 = vmatpush1.bf16.msra.mxu0 %v1211
    %1628 = vmatprep.subr.bf16.mxu0 %v1216
    %1629 = vmatpush1.bf16.msra.mxu0 %v1215
    %1630 = vmatprep.subr.bf16.mxu0 %v1220
    %1631 = vmatpush1.bf16.msra.mxu0 %v1219
    %1632 = vmatprep.subr.bf16.mxu0 %v1224
    %1633 = vmatpush1.bf16.msra.mxu0 %v1223
    %1634 = vmatprep.subr.bf16.mxu0 %v1228
    %1635 = vmatpush1.bf16.msra.mxu0 %v1227
    %1636 = vmatprep.subr.bf16.mxu0 %v1232
    %1637 = vmatpush1.bf16.msra.mxu0 %v1231
    %1638 = vmatprep.subr.bf16.mxu0 %v1236
    %1639 = vmatpush1.bf16.msra.mxu0 %v1235
    %1640 = vmatprep.subr.bf16.mxu0 %v1240
    %1641 = vmatpush1.bf16.msra.mxu0 %v1239
    %1642 = vmatprep.subr.bf16.mxu0 %v1244
    %1643 = vmatpush1.bf16.msra.mxu0 %v1243
    %1644 = vmatprep.subr.bf16.mxu0 %v1248
    %1645 = vmatpush1.bf16.msra.mxu0 %v1247
    %1646 = vmatprep.mubr.bf16.mxu0 %v440
    %1647 = vmatmul.mubr.bf16.gmra.mrb[0].mxu0 %v439
    %v1648 = vpop.f32.mrb[0].mxu0
    %v1649 = vadd.f32 %v1606, %v1648
    %v1650 = vpop.f32.mrb[0].mxu0
    %v1651 = vadd.f32 %v1608, %v1650
    %v1652 = vpop.f32.mrb[0].mxu0
    %v1653 = vadd.f32 %v1610, %v1652
    %v1654 = vpop.f32.mrb[0].mxu0
    %v1655 = vadd.f32 %v1612, %v1654
    %1656 = vdwg.mxu0
    %1657 = vmatprep.subr.bf16.mxu0 %v1252
    %1658 = vmatpush1.bf16.msra.mxu0 %v1251
    %1659 = vmatprep.subr.bf16.mxu0 %v1256
    %1660 = vmatpush1.bf16.msra.mxu0 %v1255
    %1661 = vmatprep.subr.bf16.mxu0 %v1260
    %1662 = vmatpush1.bf16.msra.mxu0 %v1259
    %1663 = vmatprep.subr.bf16.mxu0 %v1264
    %1664 = vmatpush1.bf16.msra.mxu0 %v1263
    %1665 = vmatprep.subr.bf16.mxu0 %v1268
    %1666 = vmatpush1.bf16.msra.mxu0 %v1267
    %1667 = vmatprep.subr.bf16.mxu0 %v1272
    %1668 = vmatpush1.bf16.msra.mxu0 %v1271
    %1669 = vmatprep.subr.bf16.mxu0 %v1276
    %1670 = vmatpush1.bf16.msra.mxu0 %v1275
    %1671 = vmatprep.subr.bf16.mxu0 %v1280
    %1672 = vmatpush1.bf16.msra.mxu0 %v1279
    %1673 = vmatprep.subr.bf16.mxu0 %v1284
    %1674 = vmatpush1.bf16.msra.mxu0 %v1283
    %1675 = vmatprep.subr.bf16.mxu0 %v1288
    %1676 = vmatpush1.bf16.msra.mxu0 %v1287
    %1677 = vmatprep.subr.bf16.mxu0 %v1292
    %1678 = vmatpush1.bf16.msra.mxu0 %v1291
    %1679 = vmatprep.subr.bf16.mxu0 %v1296
    %1680 = vmatpush1.bf16.msra.mxu0 %v1295
    %1681 = vmatprep.subr.bf16.mxu0 %v1300
    %1682 = vmatpush1.bf16.msra.mxu0 %v1299
    %1683 = vmatprep.subr.bf16.mxu0 %v1304
    %1684 = vmatpush1.bf16.msra.mxu0 %v1303
    %1685 = vmatprep.subr.bf16.mxu0 %v1308
    %1686 = vmatpush1.bf16.msra.mxu0 %v1307
    %1687 = vmatprep.subr.bf16.mxu0 %v1312
    %1688 = vmatpush1.bf16.msra.mxu0 %v1311
    %1689 = vmatprep.mubr.bf16.mxu0 %v442
    %1690 = vmatmul.mubr.bf16.gmra.mrb[0].mxu0 %v441
    %v1691 = vpop.f32.mrb[0].mxu0
    %v1692 = vadd.f32 %v1649, %v1691
    %v1693 = vpop.f32.mrb[0].mxu0
    %v1694 = vadd.f32 %v1651, %v1693
    %v1695 = vpop.f32.mrb[0].mxu0
    %v1696 = vadd.f32 %v1653, %v1695
    %v1697 = vpop.f32.mrb[0].mxu0
    %v1698 = vadd.f32 %v1655, %v1697
    %1699 = vdwg.mxu0
    %1700 = vmatprep.subr.bf16.mxu0 %v1316
    %1701 = vmatpush1.bf16.msra.mxu0 %v1315
    %1702 = vmatprep.subr.bf16.mxu0 %v1320
    %1703 = vmatpush1.bf16.msra.mxu0 %v1319
    %1704 = vmatprep.subr.bf16.mxu0 %v1324
    %1705 = vmatpush1.bf16.msra.mxu0 %v1323
    %1706 = vmatprep.subr.bf16.mxu0 %v1328
    %1707 = vmatpush1.bf16.msra.mxu0 %v1327
    %1708 = vmatprep.subr.bf16.mxu0 %v1332
    %1709 = vmatpush1.bf16.msra.mxu0 %v1331
    %1710 = vmatprep.subr.bf16.mxu0 %v1336
    %1711 = vmatpush1.bf16.msra.mxu0 %v1335
    %1712 = vmatprep.subr.bf16.mxu0 %v1340
    %1713 = vmatpush1.bf16.msra.mxu0 %v1339
    %1714 = vmatprep.subr.bf16.mxu0 %v1344
    %1715 = vmatpush1.bf16.msra.mxu0 %v1343
    %1716 = vmatprep.subr.bf16.mxu0 0
    %1717 = vmatpush1.bf16.msra.mxu0 0
    %1718 = vmatprep.subr.bf16.mxu0 0
    %1719 = vmatpush1.bf16.msra.mxu0 0
    %1720 = vmatprep.subr.bf16.mxu0 0
    %1721 = vmatpush1.bf16.msra.mxu0 0
    %1722 = vmatprep.subr.bf16.mxu0 0
    %1723 = vmatpush1.bf16.msra.mxu0 0
    %1724 = vmatprep.subr.bf16.mxu0 0
    %1725 = vmatpush1.bf16.msra.mxu0 0
    %1726 = vmatprep.subr.bf16.mxu0 0
    %1727 = vmatpush1.bf16.msra.mxu0 0
    %1728 = vmatprep.subr.bf16.mxu0 0
    %1729 = vmatpush1.bf16.msra.mxu0 0
    %1730 = vmatprep.subr.bf16.mxu0 0
    %1731 = vmatpush1.bf16.msra.mxu0 0
    %1732 = vmatprep.mubr.bf16.mxu0 0
    %1733 = vmatmul.mubr.bf16.gmra.mrb[0].mxu0 %v443
    %v1734 = vpop.f32.mrb[0].mxu0
    %v1735 = vadd.f32 %v1692, %v1734
    %v1736 = vpop.f32.mrb[0].mxu0
    %v1737 = vadd.f32 %v1694, %v1736
    %v1738 = vpop.f32.mrb[0].mxu0
    %v1739 = vadd.f32 %v1696, %v1738
    %v1740 = vpop.f32.mrb[0].mxu0
    %v1741 = vadd.f32 %v1698, %v1740
    %1742 = vdwg.mxu0
    %1743 = vmatprep.subr.bf16.mxu0 %v1126
    %1744 = vmatpush1.bf16.msra.mxu0 %v1125
    %1745 = vmatprep.subr.bf16.mxu0 %v1130
    %1746 = vmatpush1.bf16.msra.mxu0 %v1129
    %1747 = vmatprep.subr.bf16.mxu0 %v1134
    %1748 = vmatpush1.bf16.msra.mxu0 %v1133
    %1749 = vmatprep.subr.bf16.mxu0 %v1138
    %1750 = vmatpush1.bf16.msra.mxu0 %v1137
    %1751 = vmatprep.subr.bf16.mxu0 %v1142
    %1752 = vmatpush1.bf16.msra.mxu0 %v1141
    %1753 = vmatprep.subr.bf16.mxu0 %v1146
    %1754 = vmatpush1.bf16.msra.mxu0 %v1145
    %1755 = vmatprep.subr.bf16.mxu0 %v1150
    %1756 = vmatpush1.bf16.msra.mxu0 %v1149
    %1757 = vmatprep.subr.bf16.mxu0 %v1154
    %1758 = vmatpush1.bf16.msra.mxu0 %v1153
    %1759 = vmatprep.subr.bf16.mxu0 %v1158
    %1760 = vmatpush1.bf16.msra.mxu0 %v1157
    %1761 = vmatprep.subr.bf16.mxu0 %v1162
    %1762 = vmatpush1.bf16.msra.mxu0 %v1161
    %1763 = vmatprep.subr.bf16.mxu0 %v1166
    %1764 = vmatpush1.bf16.msra.mxu0 %v1165
    %1765 = vmatprep.subr.bf16.mxu0 %v1170
    %1766 = vmatpush1.bf16.msra.mxu0 %v1169
    %1767 = vmatprep.subr.bf16.mxu0 %v1174
    %1768 = vmatpush1.bf16.msra.mxu0 %v1173
    %1769 = vmatprep.subr.bf16.mxu0 %v1178
    %1770 = vmatpush1.bf16.msra.mxu0 %v1177
    %1771 = vmatprep.subr.bf16.mxu0 %v1182
    %1772 = vmatpush1.bf16.msra.mxu0 %v1181
    %1773 = vmatprep.subr.bf16.mxu0 %v1186
    %1774 = vmatpush1.bf16.msra.mxu0 %v1185
    %1775 = vmatprep.mubr.bf16.mxu0 %v438
    %1776 = vmatmul.mubr.bf16.gmra.mrb[0].mxu0 %v437
    %v1777 = vpop.f32.mrb[0].mxu0
    %v1778 = vadd.f32 %v406, %v1777
    %v1779 = vpop.f32.mrb[0].mxu0
    %v1780 = vadd.f32 %v410, %v1779
    %v1781 = vpop.f32.mrb[0].mxu0
    %v1782 = vadd.f32 %v406, %v1781
    %v1783 = vpop.f32.mrb[0].mxu0
    %v1784 = vadd.f32 %v410, %v1783
    %1785 = vdwg.mxu0
    %1786 = vmatprep.subr.bf16.mxu0 %v1190
    %1787 = vmatpush1.bf16.msra.mxu0 %v1189
    %1788 = vmatprep.subr.bf16.mxu0 %v1194
    %1789 = vmatpush1.bf16.msra.mxu0 %v1193
    %1790 = vmatprep.subr.bf16.mxu0 %v1198
    %1791 = vmatpush1.bf16.msra.mxu0 %v1197
    %1792 = vmatprep.subr.bf16.mxu0 %v1202
    %1793 = vmatpush1.bf16.msra.mxu0 %v1201
    %1794 = vmatprep.subr.bf16.mxu0 %v1206
    %1795 = vmatpush1.bf16.msra.mxu0 %v1205
    %1796 = vmatprep.subr.bf16.mxu0 %v1210
    %1797 = vmatpush1.bf16.msra.mxu0 %v1209
    %1798 = vmatprep.subr.bf16.mxu0 %v1214
    %1799 = vmatpush1.bf16.msra.mxu0 %v1213
    %1800 = vmatprep.subr.bf16.mxu0 %v1218
    %1801 = vmatpush1.bf16.msra.mxu0 %v1217
    %1802 = vmatprep.subr.bf16.mxu0 %v1222
    %1803 = vmatpush1.bf16.msra.mxu0 %v1221
    %1804 = vmatprep.subr.bf16.mxu0 %v1226
    %1805 = vmatpush1.bf16.msra.mxu0 %v1225
    %1806 = vmatprep.subr.bf16.mxu0 %v1230
    %1807 = vmatpush1.bf16.msra.mxu0 %v1229
    %1808 = vmatprep.subr.bf16.mxu0 %v1234
    %1809 = vmatpush1.bf16.msra.mxu0 %v1233
    %1810 = vmatprep.subr.bf16.mxu0 %v1238
    %1811 = vmatpush1.bf16.msra.mxu0 %v1237
    %1812 = vmatprep.subr.bf16.mxu0 %v1242
    %1813 = vmatpush1.bf16.msra.mxu0 %v1241
    %1814 = vmatprep.subr.bf16.mxu0 %v1246
    %1815 = vmatpush1.bf16.msra.mxu0 %v1245
    %1816 = vmatprep.subr.bf16.mxu0 %v1250
    %1817 = vmatpush1.bf16.msra.mxu0 %v1249
    %1818 = vmatprep.mubr.bf16.mxu0 %v440
    %1819 = vmatmul.mubr.bf16.gmra.mrb[0].mxu0 %v439
    %v1820 = vpop.f32.mrb[0].mxu0
    %v1821 = vadd.f32 %v1778, %v1820
    %v1822 = vpop.f32.mrb[0].mxu0
    %v1823 = vadd.f32 %v1780, %v1822
    %v1824 = vpop.f32.mrb[0].mxu0
    %v1825 = vadd.f32 %v1782, %v1824
    %v1826 = vpop.f32.mrb[0].mxu0
    %v1827 = vadd.f32 %v1784, %v1826
    %1828 = vdwg.mxu0
    %1829 = vmatprep.subr.bf16.mxu0 %v1254
    %1830 = vmatpush1.bf16.msra.mxu0 %v1253
    %1831 = vmatprep.subr.bf16.mxu0 %v1258
    %1832 = vmatpush1.bf16.msra.mxu0 %v1257
    %1833 = vmatprep.subr.bf16.mxu0 %v1262
    %1834 = vmatpush1.bf16.msra.mxu0 %v1261
    %1835 = vmatprep.subr.bf16.mxu0 %v1266
    %1836 = vmatpush1.bf16.msra.mxu0 %v1265
    %1837 = vmatprep.subr.bf16.mxu0 %v1270
    %1838 = vmatpush1.bf16.msra.mxu0 %v1269
    %1839 = vmatprep.subr.bf16.mxu0 %v1274
    %1840 = vmatpush1.bf16.msra.mxu0 %v1273
    %1841 = vmatprep.subr.bf16.mxu0 %v1278
    %1842 = vmatpush1.bf16.msra.mxu0 %v1277
    %1843 = vmatprep.subr.bf16.mxu0 %v1282
    %1844 = vmatpush1.bf16.msra.mxu0 %v1281
    %1845 = vmatprep.subr.bf16.mxu0 %v1286
    %1846 = vmatpush1.bf16.msra.mxu0 %v1285
    %1847 = vmatprep.subr.bf16.mxu0 %v1290
    %1848 = vmatpush1.bf16.msra.mxu0 %v1289
    %1849 = vmatprep.subr.bf16.mxu0 %v1294
    %1850 = vmatpush1.bf16.msra.mxu0 %v1293
    %1851 = vmatprep.subr.bf16.mxu0 %v1298
    %1852 = vmatpush1.bf16.msra.mxu0 %v1297
    %1853 = vmatprep.subr.bf16.mxu0 %v1302
    %1854 = vmatpush1.bf16.msra.mxu0 %v1301
    %1855 = vmatprep.subr.bf16.mxu0 %v1306
    %1856 = vmatpush1.bf16.msra.mxu0 %v1305
    %1857 = vmatprep.subr.bf16.mxu0 %v1310
    %1858 = vmatpush1.bf16.msra.mxu0 %v1309
    %1859 = vmatprep.subr.bf16.mxu0 %v1314
    %1860 = vmatpush1.bf16.msra.mxu0 %v1313
    %1861 = vmatprep.mubr.bf16.mxu0 %v442
    %1862 = vmatmul.mubr.bf16.gmra.mrb[0].mxu0 %v441
    %v1863 = vpop.f32.mrb[0].mxu0
    %v1864 = vadd.f32 %v1821, %v1863
    %v1865 = vpop.f32.mrb[0].mxu0
    %v1866 = vadd.f32 %v1823, %v1865
    %v1867 = vpop.f32.mrb[0].mxu0
    %v1868 = vadd.f32 %v1825, %v1867
    %v1869 = vpop.f32.mrb[0].mxu0
    %v1870 = vadd.f32 %v1827, %v1869
    %1871 = vdwg.mxu0
    %1872 = vmatprep.subr.bf16.mxu0 %v1318
    %1873 = vmatpush1.bf16.msra.mxu0 %v1317
    %1874 = vmatprep.subr.bf16.mxu0 %v1322
    %1875 = vmatpush1.bf16.msra.mxu0 %v1321
    %1876 = vmatprep.subr.bf16.mxu0 %v1326
    %1877 = vmatpush1.bf16.msra.mxu0 %v1325
    %1878 = vmatprep.subr.bf16.mxu0 %v1330
    %1879 = vmatpush1.bf16.msra.mxu0 %v1329
    %1880 = vmatprep.subr.bf16.mxu0 %v1334
    %1881 = vmatpush1.bf16.msra.mxu0 %v1333
    %1882 = vmatprep.subr.bf16.mxu0 %v1338
    %1883 = vmatpush1.bf16.msra.mxu0 %v1337
    %1884 = vmatprep.subr.bf16.mxu0 %v1342
    %1885 = vmatpush1.bf16.msra.mxu0 %v1341
    %1886 = vmatprep.subr.bf16.mxu0 %v1346
    %1887 = vmatpush1.bf16.msra.mxu0 %v1345
    %1888 = vmatprep.subr.bf16.mxu0 0
    %1889 = vmatpush1.bf16.msra.mxu0 0
    %1890 = vmatprep.subr.bf16.mxu0 0
    %1891 = vmatpush1.bf16.msra.mxu0 0
    %1892 = vmatprep.subr.bf16.mxu0 0
    %1893 = vmatpush1.bf16.msra.mxu0 0
    %1894 = vmatprep.subr.bf16.mxu0 0
    %1895 = vmatpush1.bf16.msra.mxu0 0
    %1896 = vmatprep.subr.bf16.mxu0 0
    %1897 = vmatpush1.bf16.msra.mxu0 0
    %1898 = vmatprep.subr.bf16.mxu0 0
    %1899 = vmatpush1.bf16.msra.mxu0 0
    %1900 = vmatprep.subr.bf16.mxu0 0
    %1901 = vmatpush1.bf16.msra.mxu0 0
    %1902 = vmatprep.subr.bf16.mxu0 0
    %1903 = vmatpush1.bf16.msra.mxu0 0
    %1904 = vmatprep.mubr.bf16.mxu0 0
    %1905 = vmatmul.mubr.bf16.gmra.mrb[0].mxu0 %v443
    %v1906 = vpop.f32.mrb[0].mxu0
    %v1907 = vadd.f32 %v1864, %v1906
    %v1908 = vpop.f32.mrb[0].mxu0
    %v1909 = vadd.f32 %v1866, %v1908
    %v1910 = vpop.f32.mrb[0].mxu0
    %v1911 = vadd.f32 %v1868, %v1910
    %v1912 = vpop.f32.mrb[0].mxu0
    %v1913 = vadd.f32 %v1870, %v1912
    %1914 = vdwg.mxu0
    %v1915 = vmax.f32 %v1735, 0.0
    %v1916 = vmax.f32 %v1737, 0.0
    %v1917 = vmax.f32 %v1907, 0.0
    %v1918 = vmax.f32 %v1909, 0.0
    %v1919 = vmax.f32 %v1739, 0.0
    %v1920 = vmax.f32 %v1741, 0.0
    %v1921 = vmax.f32 %v1911, 0.0
    %v1922 = vmax.f32 %v1913, 0.0
    %v1923 = vpack.c.bf16 %v1919, %v1915
    %v1924 = vpack.c.bf16 %v1920, %v1916
    %v1925 = vpack.c.bf16 %v1921, %v1917
    %v1926 = vpack.c.bf16 %v1922, %v1918
    %v1927 = vld [vmem:[#allocation8] sm:$0xff]
    %v1928 = vld [vmem:[#allocation8 + $0x8] sm:$0xff]
    %v1929 = vld [vmem:[#allocation8 + $0x10] sm:$0xff]
    %v1930 = vld [vmem:[#allocation8 + $0x18] sm:$0xff]
    %v1931 = vld [vmem:[#allocation8 + $0x20] sm:$0xff]
    %v1932 = vld [vmem:[#allocation8 + $0x28] sm:$0xff]
    %v1933 = vld [vmem:[#allocation8 + $0x30] sm:$0xff]
    %v1934 = vld [vmem:[#allocation8 + $0x38] sm:$0xff]
    %v1935 = vld [vmem:[#allocation8 + $0x40] sm:$0xff]
    %v1936 = vld [vmem:[#allocation8 + $0x48] sm:$0xff]
    %v1937 = vld [vmem:[#allocation8 + $0x50] sm:$0xff]
    %v1938 = vld [vmem:[#allocation8 + $0x58] sm:$0xff]
    %v1939 = vld [vmem:[#allocation8 + $0x60] sm:$0xff]
    %v1940 = vld [vmem:[#allocation8 + $0x68] sm:$0xff]
    %v1941 = vld [vmem:[#allocation8 + $0x70] sm:$0xff]
    %v1942 = vld [vmem:[#allocation8 + $0x78] sm:$0xff]
    %v1943 = vld [vmem:[#allocation8 + $0x80] sm:$0xff]
    %v1944 = vld [vmem:[#allocation8 + $0x88] sm:$0xff]
    %v1945 = vld [vmem:[#allocation8 + $0x90] sm:$0xff]
    %v1946 = vld [vmem:[#allocation8 + $0x98] sm:$0xff]
    %v1947 = vld [vmem:[#allocation8 + $0xa0] sm:$0xff]
    %v1948 = vld [vmem:[#allocation8 + $0xa8] sm:$0xff]
    %v1949 = vld [vmem:[#allocation8 + $0xb0] sm:$0xff]
    %v1950 = vld [vmem:[#allocation8 + $0xb8] sm:$0xff]
    %v1951 = vld [vmem:[#allocation8 + $0xc0] sm:$0xff]
    %v1952 = vld [vmem:[#allocation8 + $0xc8] sm:$0xff]
    %v1953 = vld [vmem:[#allocation8 + $0xd0] sm:$0xff]
    %v1954 = vld [vmem:[#allocation8 + $0xd8] sm:$0xff]
    %v1955 = vld [vmem:[#allocation8 + $0xe0] sm:$0xff]
    %v1956 = vld [vmem:[#allocation8 + $0xe8] sm:$0xff]
    %v1957 = vld [vmem:[#allocation8 + $0xf0] sm:$0xff]
    %v1958 = vld [vmem:[#allocation8 + $0xf8] sm:$0xff]
    %v1959 = vld [vmem:[#allocation8 + $0x100] sm:$0xff]
    %v1960 = vld [vmem:[#allocation8 + $0x108] sm:$0xff]
    %v1961 = vld [vmem:[#allocation8 + $0x110] sm:$0xff]
    %v1962 = vld [vmem:[#allocation8 + $0x118] sm:$0xff]
    %v1963 = vld [vmem:[#allocation8 + $0x120] sm:$0xff]
    %v1964 = vld [vmem:[#allocation8 + $0x128] sm:$0xff]
    %v1965 = vld [vmem:[#allocation8 + $0x130] sm:$0xff]
    %v1966 = vld [vmem:[#allocation8 + $0x138] sm:$0xff]
    %v1967 = vld [vmem:[#allocation8 + $0x140] sm:$0xff]
    %v1968 = vld [vmem:[#allocation8 + $0x148] sm:$0xff]
    %v1969 = vld [vmem:[#allocation8 + $0x150] sm:$0xff]
    %v1970 = vld [vmem:[#allocation8 + $0x158] sm:$0xff]
    %v1971 = vld [vmem:[#allocation8 + $0x160] sm:$0xff]
    %v1972 = vld [vmem:[#allocation8 + $0x168] sm:$0xff]
    %v1973 = vld [vmem:[#allocation8 + $0x170] sm:$0xff]
    %v1974 = vld [vmem:[#allocation8 + $0x178] sm:$0xff]
    %v1975 = vld [vmem:[#allocation8 + $0x180] sm:$0xff]
    %v1976 = vld [vmem:[#allocation8 + $0x188] sm:$0xff]
    %v1977 = vld [vmem:[#allocation8 + $0x190] sm:$0xff]
    %v1978 = vld [vmem:[#allocation8 + $0x198] sm:$0xff]
    %v1979 = vld [vmem:[#allocation8 + $0x1a0] sm:$0xff]
    %v1980 = vld [vmem:[#allocation8 + $0x1a8] sm:$0xff]
    %v1981 = vld [vmem:[#allocation8 + $0x1b0] sm:$0xff]
    %v1982 = vld [vmem:[#allocation8 + $0x1b8] sm:$0xff]
    %v1983 = vld [vmem:[#allocation8 + $0x1c0] sm:$0xff]
    %v1984 = vld [vmem:[#allocation8 + $0x1c8] sm:$0xff]
    %v1985 = vld [vmem:[#allocation8 + $0x1d0] sm:$0xff]
    %v1986 = vld [vmem:[#allocation8 + $0x1d8] sm:$0xff]
    %v1987 = vld [vmem:[#allocation8 + $0x1e0] sm:$0xff]
    %v1988 = vld [vmem:[#allocation8 + $0x1e8] sm:$0xff]
    %v1989 = vld [vmem:[#allocation8 + $0x1f0] sm:$0xff]
    %v1990 = vld [vmem:[#allocation8 + $0x1f8] sm:$0xff]
    %v1991 = vld [vmem:[%s5] sm:$0x3]
    %v1993 = vlaneseq
    %v1994 = vshrl.u32 %v1993, 7
    %v1995 = vsub.s32 0, %v1994
    %v1996 = vrot.slane %v1991, %v1995
    %v1997 = vlaneseq
    %v1998 = vshrl.u32 %v1997, 7
    %v1999 = vsub.s32 1, %v1998
    %v2000 = vrot.slane %v1991, %v1999
    %v2067 = vunpack.c.l.b16 %v1927
    %v2068 = vunpack.c.h.b16 %v1927
    %v2069 = vunpack.c.l.b16 %v1928
    %v2070 = vunpack.c.h.b16 %v1928
    %v2071 = vunpack.c.l.b16 %v1929
    %v2072 = vunpack.c.h.b16 %v1929
    %v2073 = vunpack.c.l.b16 %v1930
    %v2074 = vunpack.c.h.b16 %v1930
    %v2075 = vunpack.c.l.b16 %v1931
    %v2076 = vunpack.c.h.b16 %v1931
    %v2077 = vunpack.c.l.b16 %v1932
    %v2078 = vunpack.c.h.b16 %v1932
    %v2079 = vunpack.c.l.b16 %v1933
    %v2080 = vunpack.c.h.b16 %v1933
    %v2081 = vunpack.c.l.b16 %v1934
    %v2082 = vunpack.c.h.b16 %v1934
    %v2083 = vunpack.c.l.b16 %v1935
    %v2084 = vunpack.c.h.b16 %v1935
    %v2085 = vunpack.c.l.b16 %v1936
    %v2086 = vunpack.c.h.b16 %v1936
    %v2087 = vunpack.c.l.b16 %v1937
    %v2088 = vunpack.c.h.b16 %v1937
    %v2089 = vunpack.c.l.b16 %v1938
    %v2090 = vunpack.c.h.b16 %v1938
    %v2091 = vunpack.c.l.b16 %v1939
    %v2092 = vunpack.c.h.b16 %v1939
    %v2093 = vunpack.c.l.b16 %v1940
    %v2094 = vunpack.c.h.b16 %v1940
    %v2095 = vunpack.c.l.b16 %v1941
    %v2096 = vunpack.c.h.b16 %v1941
    %v2097 = vunpack.c.l.b16 %v1942
    %v2098 = vunpack.c.h.b16 %v1942
    %v2099 = vunpack.c.l.b16 %v1943
    %v2100 = vunpack.c.h.b16 %v1943
    %v2101 = vunpack.c.l.b16 %v1944
    %v2102 = vunpack.c.h.b16 %v1944
    %v2103 = vunpack.c.l.b16 %v1945
    %v2104 = vunpack.c.h.b16 %v1945
    %v2105 = vunpack.c.l.b16 %v1946
    %v2106 = vunpack.c.h.b16 %v1946
    %v2107 = vunpack.c.l.b16 %v1947
    %v2108 = vunpack.c.h.b16 %v1947
    %v2109 = vunpack.c.l.b16 %v1948
    %v2110 = vunpack.c.h.b16 %v1948
    %v2111 = vunpack.c.l.b16 %v1949
    %v2112 = vunpack.c.h.b16 %v1949
    %v2113 = vunpack.c.l.b16 %v1950
    %v2114 = vunpack.c.h.b16 %v1950
    %v2115 = vunpack.c.l.b16 %v1951
    %v2116 = vunpack.c.h.b16 %v1951
    %v2117 = vunpack.c.l.b16 %v1952
    %v2118 = vunpack.c.h.b16 %v1952
    %v2119 = vunpack.c.l.b16 %v1953
    %v2120 = vunpack.c.h.b16 %v1953
    %v2121 = vunpack.c.l.b16 %v1954
    %v2122 = vunpack.c.h.b16 %v1954
    %v2123 = vunpack.c.l.b16 %v1955
    %v2124 = vunpack.c.h.b16 %v1955
    %v2125 = vunpack.c.l.b16 %v1956
    %v2126 = vunpack.c.h.b16 %v1956
    %v2127 = vunpack.c.l.b16 %v1957
    %v2128 = vunpack.c.h.b16 %v1957
    %v2129 = vunpack.c.l.b16 %v1958
    %v2130 = vunpack.c.h.b16 %v1958
    %v2131 = vunpack.c.l.b16 %v1959
    %v2132 = vunpack.c.h.b16 %v1959
    %v2133 = vunpack.c.l.b16 %v1960
    %v2134 = vunpack.c.h.b16 %v1960
    %v2135 = vunpack.c.l.b16 %v1961
    %v2136 = vunpack.c.h.b16 %v1961
    %v2137 = vunpack.c.l.b16 %v1962
    %v2138 = vunpack.c.h.b16 %v1962
    %v2139 = vunpack.c.l.b16 %v1963
    %v2140 = vunpack.c.h.b16 %v1963
    %v2141 = vunpack.c.l.b16 %v1964
    %v2142 = vunpack.c.h.b16 %v1964
    %v2143 = vunpack.c.l.b16 %v1965
    %v2144 = vunpack.c.h.b16 %v1965
    %v2145 = vunpack.c.l.b16 %v1966
    %v2146 = vunpack.c.h.b16 %v1966
    %v2147 = vunpack.c.l.b16 %v1967
    %v2148 = vunpack.c.h.b16 %v1967
    %v2149 = vunpack.c.l.b16 %v1968
    %v2150 = vunpack.c.h.b16 %v1968
    %v2151 = vunpack.c.l.b16 %v1969
    %v2152 = vunpack.c.h.b16 %v1969
    %v2153 = vunpack.c.l.b16 %v1970
    %v2154 = vunpack.c.h.b16 %v1970
    %v2155 = vunpack.c.l.b16 %v1971
    %v2156 = vunpack.c.h.b16 %v1971
    %v2157 = vunpack.c.l.b16 %v1972
    %v2158 = vunpack.c.h.b16 %v1972
    %v2159 = vunpack.c.l.b16 %v1973
    %v2160 = vunpack.c.h.b16 %v1973
    %v2161 = vunpack.c.l.b16 %v1974
    %v2162 = vunpack.c.h.b16 %v1974
    %v2163 = vunpack.c.l.b16 %v1975
    %v2164 = vunpack.c.h.b16 %v1975
    %v2165 = vunpack.c.l.b16 %v1976
    %v2166 = vunpack.c.h.b16 %v1976
    %v2167 = vunpack.c.l.b16 %v1977
    %v2168 = vunpack.c.h.b16 %v1977
    %v2169 = vunpack.c.l.b16 %v1978
    %v2170 = vunpack.c.h.b16 %v1978
    %v2171 = vunpack.c.l.b16 %v1979
    %v2172 = vunpack.c.h.b16 %v1979
    %v2173 = vunpack.c.l.b16 %v1980
    %v2174 = vunpack.c.h.b16 %v1980
    %v2175 = vunpack.c.l.b16 %v1981
    %v2176 = vunpack.c.h.b16 %v1981
    %v2177 = vunpack.c.l.b16 %v1982
    %v2178 = vunpack.c.h.b16 %v1982
    %v2179 = vunpack.c.l.b16 %v1983
    %v2180 = vunpack.c.h.b16 %v1983
    %v2181 = vunpack.c.l.b16 %v1984
    %v2182 = vunpack.c.h.b16 %v1984
    %v2183 = vunpack.c.l.b16 %v1985
    %v2184 = vunpack.c.h.b16 %v1985
    %v2185 = vunpack.c.l.b16 %v1986
    %v2186 = vunpack.c.h.b16 %v1986
    %v2187 = vunpack.c.l.b16 %v1987
    %v2188 = vunpack.c.h.b16 %v1987
    %v2189 = vunpack.c.l.b16 %v1988
    %v2190 = vunpack.c.h.b16 %v1988
    %v2191 = vunpack.c.l.b16 %v1989
    %v2192 = vunpack.c.h.b16 %v1989
    %v2193 = vunpack.c.l.b16 %v1990
    %v2194 = vunpack.c.h.b16 %v1990
    %v2195 = vpack.c.b16 %v2069, %v2067
    %v2196 = vpack.c.b16 %v2070, %v2068
    %v2197 = vpack.c.b16 %v2073, %v2071
    %v2198 = vpack.c.b16 %v2074, %v2072
    %v2199 = vpack.c.b16 %v2077, %v2075
    %v2200 = vpack.c.b16 %v2078, %v2076
    %v2201 = vpack.c.b16 %v2081, %v2079
    %v2202 = vpack.c.b16 %v2082, %v2080
    %v2203 = vpack.c.b16 %v2085, %v2083
    %v2204 = vpack.c.b16 %v2086, %v2084
    %v2205 = vpack.c.b16 %v2089, %v2087
    %v2206 = vpack.c.b16 %v2090, %v2088
    %v2207 = vpack.c.b16 %v2093, %v2091
    %v2208 = vpack.c.b16 %v2094, %v2092
    %v2209 = vpack.c.b16 %v2097, %v2095
    %v2210 = vpack.c.b16 %v2098, %v2096
    %v2211 = vpack.c.b16 %v2101, %v2099
    %v2212 = vpack.c.b16 %v2102, %v2100
    %v2213 = vpack.c.b16 %v2105, %v2103
    %v2214 = vpack.c.b16 %v2106, %v2104
    %v2215 = vpack.c.b16 %v2109, %v2107
    %v2216 = vpack.c.b16 %v2110, %v2108
    %v2217 = vpack.c.b16 %v2113, %v2111
    %v2218 = vpack.c.b16 %v2114, %v2112
    %v2219 = vpack.c.b16 %v2117, %v2115
    %v2220 = vpack.c.b16 %v2118, %v2116
    %v2221 = vpack.c.b16 %v2121, %v2119
    %v2222 = vpack.c.b16 %v2122, %v2120
    %v2223 = vpack.c.b16 %v2125, %v2123
    %v2224 = vpack.c.b16 %v2126, %v2124
    %v2225 = vpack.c.b16 %v2129, %v2127
    %v2226 = vpack.c.b16 %v2130, %v2128
    %v2227 = vpack.c.b16 %v2133, %v2131
    %v2228 = vpack.c.b16 %v2134, %v2132
    %v2229 = vpack.c.b16 %v2137, %v2135
    %v2230 = vpack.c.b16 %v2138, %v2136
    %v2231 = vpack.c.b16 %v2141, %v2139
    %v2232 = vpack.c.b16 %v2142, %v2140
    %v2233 = vpack.c.b16 %v2145, %v2143
    %v2234 = vpack.c.b16 %v2146, %v2144
    %v2235 = vpack.c.b16 %v2149, %v2147
    %v2236 = vpack.c.b16 %v2150, %v2148
    %v2237 = vpack.c.b16 %v2153, %v2151
    %v2238 = vpack.c.b16 %v2154, %v2152
    %v2239 = vpack.c.b16 %v2157, %v2155
    %v2240 = vpack.c.b16 %v2158, %v2156
    %v2241 = vpack.c.b16 %v2161, %v2159
    %v2242 = vpack.c.b16 %v2162, %v2160
    %v2243 = vpack.c.b16 %v2165, %v2163
    %v2244 = vpack.c.b16 %v2166, %v2164
    %v2245 = vpack.c.b16 %v2169, %v2167
    %v2246 = vpack.c.b16 %v2170, %v2168
    %v2247 = vpack.c.b16 %v2173, %v2171
    %v2248 = vpack.c.b16 %v2174, %v2172
    %v2249 = vpack.c.b16 %v2177, %v2175
    %v2250 = vpack.c.b16 %v2178, %v2176
    %v2251 = vpack.c.b16 %v2181, %v2179
    %v2252 = vpack.c.b16 %v2182, %v2180
    %v2253 = vpack.c.b16 %v2185, %v2183
    %v2254 = vpack.c.b16 %v2186, %v2184
    %v2255 = vpack.c.b16 %v2189, %v2187
    %v2256 = vpack.c.b16 %v2190, %v2188
    %v2257 = vpack.c.b16 %v2193, %v2191
    %v2258 = vpack.c.b16 %v2194, %v2192
    %2323 = vmatprep.subr.bf16.mxu0 %v2196
    %2324 = vmatpush1.bf16.msra.mxu0 %v2195
    %2325 = vmatprep.subr.bf16.mxu0 %v2198
    %2326 = vmatpush1.bf16.msra.mxu0 %v2197
    %2327 = vmatprep.subr.bf16.mxu0 %v2200
    %2328 = vmatpush1.bf16.msra.mxu0 %v2199
    %2329 = vmatprep.subr.bf16.mxu0 %v2202
    %2330 = vmatpush1.bf16.msra.mxu0 %v2201
    %2331 = vmatprep.subr.bf16.mxu0 %v2204
    %2332 = vmatpush1.bf16.msra.mxu0 %v2203
    %2333 = vmatprep.subr.bf16.mxu0 %v2206
    %2334 = vmatpush1.bf16.msra.mxu0 %v2205
    %2335 = vmatprep.subr.bf16.mxu0 %v2208
    %2336 = vmatpush1.bf16.msra.mxu0 %v2207
    %2337 = vmatprep.subr.bf16.mxu0 %v2210
    %2338 = vmatpush1.bf16.msra.mxu0 %v2209
    %2339 = vmatprep.subr.bf16.mxu0 %v2212
    %2340 = vmatpush1.bf16.msra.mxu0 %v2211
    %2341 = vmatprep.subr.bf16.mxu0 %v2214
    %2342 = vmatpush1.bf16.msra.mxu0 %v2213
    %2343 = vmatprep.subr.bf16.mxu0 %v2216
    %2344 = vmatpush1.bf16.msra.mxu0 %v2215
    %2345 = vmatprep.subr.bf16.mxu0 %v2218
    %2346 = vmatpush1.bf16.msra.mxu0 %v2217
    %2347 = vmatprep.subr.bf16.mxu0 %v2220
    %2348 = vmatpush1.bf16.msra.mxu0 %v2219
    %2349 = vmatprep.subr.bf16.mxu0 %v2222
    %2350 = vmatpush1.bf16.msra.mxu0 %v2221
    %2351 = vmatprep.subr.bf16.mxu0 %v2224
    %2352 = vmatpush1.bf16.msra.mxu0 %v2223
    %2353 = vmatprep.subr.bf16.mxu0 %v2226
    %2354 = vmatpush1.bf16.msra.mxu0 %v2225
    %2355 = vmatprep.mubr.bf16.mxu0 %v1924
    %2356 = vmatmul.mubr.bf16.gmra.mrb[0].mxu0 %v1923
    %v2357 = vpop.f32.mrb[0].mxu0
    %v2358 = vadd.f32 %v1996, %v2357
    %v2359 = vpop.f32.mrb[0].mxu0
    %v2360 = vadd.f32 %v2000, %v2359
    %v2361 = vpop.f32.mrb[0].mxu0
    %v2362 = vadd.f32 %v1996, %v2361
    %v2363 = vpop.f32.mrb[0].mxu0
    %v2364 = vadd.f32 %v2000, %v2363
    %2365 = vdwg.mxu0
    %2366 = vmatprep.subr.bf16.mxu0 %v2228
    %2367 = vmatpush1.bf16.msra.mxu0 %v2227
    %2368 = vmatprep.subr.bf16.mxu0 %v2230
    %2369 = vmatpush1.bf16.msra.mxu0 %v2229
    %2370 = vmatprep.subr.bf16.mxu0 %v2232
    %2371 = vmatpush1.bf16.msra.mxu0 %v2231
    %2372 = vmatprep.subr.bf16.mxu0 %v2234
    %2373 = vmatpush1.bf16.msra.mxu0 %v2233
    %2374 = vmatprep.subr.bf16.mxu0 %v2236
    %2375 = vmatpush1.bf16.msra.mxu0 %v2235
    %2376 = vmatprep.subr.bf16.mxu0 %v2238
    %2377 = vmatpush1.bf16.msra.mxu0 %v2237
    %2378 = vmatprep.subr.bf16.mxu0 %v2240
    %2379 = vmatpush1.bf16.msra.mxu0 %v2239
    %2380 = vmatprep.subr.bf16.mxu0 %v2242
    %2381 = vmatpush1.bf16.msra.mxu0 %v2241
    %2382 = vmatprep.subr.bf16.mxu0 %v2244
    %2383 = vmatpush1.bf16.msra.mxu0 %v2243
    %2384 = vmatprep.subr.bf16.mxu0 %v2246
    %2385 = vmatpush1.bf16.msra.mxu0 %v2245
    %2386 = vmatprep.subr.bf16.mxu0 %v2248
    %2387 = vmatpush1.bf16.msra.mxu0 %v2247
    %2388 = vmatprep.subr.bf16.mxu0 %v2250
    %2389 = vmatpush1.bf16.msra.mxu0 %v2249
    %2390 = vmatprep.subr.bf16.mxu0 %v2252
    %2391 = vmatpush1.bf16.msra.mxu0 %v2251
    %2392 = vmatprep.subr.bf16.mxu0 %v2254
    %2393 = vmatpush1.bf16.msra.mxu0 %v2253
    %2394 = vmatprep.subr.bf16.mxu0 %v2256
    %2395 = vmatpush1.bf16.msra.mxu0 %v2255
    %2396 = vmatprep.subr.bf16.mxu0 %v2258
    %2397 = vmatpush1.bf16.msra.mxu0 %v2257
    %2398 = vmatprep.mubr.bf16.mxu0 %v1926
    %2399 = vmatmul.mubr.bf16.gmra.mrb[0].mxu0 %v1925
    %v2400 = vpop.f32.mrb[0].mxu0
    %v2401 = vadd.f32 %v2358, %v2400
    %v2402 = vpop.f32.mrb[0].mxu0
    %v2403 = vadd.f32 %v2360, %v2402
    %v2404 = vpop.f32.mrb[0].mxu0
    %v2405 = vadd.f32 %v2362, %v2404
    %v2406 = vpop.f32.mrb[0].mxu0
    %v2407 = vadd.f32 %v2364, %v2406
    %2408 = vdwg.mxu0
    %v2409 = vmax.f32 %v2401, 0.0
    %v2410 = vmax.f32 %v2403, 0.0
    %v2411 = vmax.f32 %v2405, 0.0
    %v2412 = vmax.f32 %v2407, 0.0
    %v2413 = vpack.c.bf16 %v2411, %v2409
    %v2414 = vpack.c.bf16 %v2412, %v2410
    %v2415 = vld [vmem:[#allocation10] sm:$0xf]
    %v2416 = vld [vmem:[#allocation10 + $0x4] sm:$0xf]
    %v2417 = vld [vmem:[#allocation10 + $0x8] sm:$0xf]
    %v2418 = vld [vmem:[#allocation10 + $0xc] sm:$0xf]
    %v2419 = vld [vmem:[#allocation10 + $0x10] sm:$0xf]
    %v2420 = vld [vmem:[#allocation10 + $0x14] sm:$0xf]
    %v2421 = vld [vmem:[#allocation10 + $0x18] sm:$0xf]
    %v2422 = vld [vmem:[#allocation10 + $0x1c] sm:$0xf]
    %v2423 = vld [vmem:[#allocation10 + $0x20] sm:$0xf]
    %v2424 = vld [vmem:[#allocation10 + $0x24] sm:$0xf]
    %v2425 = vld [vmem:[#allocation10 + $0x28] sm:$0xf]
    %v2426 = vld [vmem:[#allocation10 + $0x2c] sm:$0xf]
    %v2427 = vld [vmem:[#allocation10 + $0x30] sm:$0xf]
    %v2428 = vld [vmem:[#allocation10 + $0x34] sm:$0xf]
    %v2429 = vld [vmem:[#allocation10 + $0x38] sm:$0xf]
    %v2430 = vld [vmem:[#allocation10 + $0x3c] sm:$0xf]
    %v2431 = vld [vmem:[#allocation10 + $0x40] sm:$0xf]
    %v2432 = vld [vmem:[#allocation10 + $0x44] sm:$0xf]
    %v2433 = vld [vmem:[#allocation10 + $0x48] sm:$0xf]
    %v2434 = vld [vmem:[#allocation10 + $0x4c] sm:$0xf]
    %v2435 = vld [vmem:[#allocation10 + $0x50] sm:$0xf]
    %v2436 = vld [vmem:[#allocation10 + $0x54] sm:$0xf]
    %v2437 = vld [vmem:[#allocation10 + $0x58] sm:$0xf]
    %v2438 = vld [vmem:[#allocation10 + $0x5c] sm:$0xf]
    %v2439 = vld [vmem:[#allocation10 + $0x60] sm:$0xf]
    %v2440 = vld [vmem:[#allocation10 + $0x64] sm:$0xf]
    %v2441 = vld [vmem:[#allocation10 + $0x68] sm:$0xf]
    %v2442 = vld [vmem:[#allocation10 + $0x6c] sm:$0xf]
    %v2443 = vld [vmem:[#allocation10 + $0x70] sm:$0xf]
    %v2444 = vld [vmem:[#allocation10 + $0x74] sm:$0xf]
    %v2445 = vld [vmem:[#allocation10 + $0x78] sm:$0xf]
    %v2446 = vld [vmem:[#allocation10 + $0x7c] sm:$0xf]
    %v2447 = vld [vmem:[%s7] sm:$0x1]
    %v2449 = vlaneseq
    %v2450 = vshrl.u32 %v2449, 7
    %v2451 = vsub.s32 0, %v2450
    %v2452 = vrot.slane %v2447, %v2451
    %v2486 = vunpack.c.l.b16 %v2415
    %v2487 = vunpack.c.l.b16 %v2416
    %v2488 = vunpack.c.l.b16 %v2417
    %v2489 = vunpack.c.l.b16 %v2418
    %v2490 = vunpack.c.l.b16 %v2419
    %v2491 = vunpack.c.l.b16 %v2420
    %v2492 = vunpack.c.l.b16 %v2421
    %v2493 = vunpack.c.l.b16 %v2422
    %v2494 = vunpack.c.l.b16 %v2423
    %v2495 = vunpack.c.l.b16 %v2424
    %v2496 = vunpack.c.l.b16 %v2425
    %v2497 = vunpack.c.l.b16 %v2426
    %v2498 = vunpack.c.l.b16 %v2427
    %v2499 = vunpack.c.l.b16 %v2428
    %v2500 = vunpack.c.l.b16 %v2429
    %v2501 = vunpack.c.l.b16 %v2430
    %v2502 = vunpack.c.l.b16 %v2431
    %v2503 = vunpack.c.l.b16 %v2432
    %v2504 = vunpack.c.l.b16 %v2433
    %v2505 = vunpack.c.l.b16 %v2434
    %v2506 = vunpack.c.l.b16 %v2435
    %v2507 = vunpack.c.l.b16 %v2436
    %v2508 = vunpack.c.l.b16 %v2437
    %v2509 = vunpack.c.l.b16 %v2438
    %v2510 = vunpack.c.l.b16 %v2439
    %v2511 = vunpack.c.l.b16 %v2440
    %v2512 = vunpack.c.l.b16 %v2441
    %v2513 = vunpack.c.l.b16 %v2442
    %v2514 = vunpack.c.l.b16 %v2443
    %v2515 = vunpack.c.l.b16 %v2444
    %v2516 = vunpack.c.l.b16 %v2445
    %v2517 = vunpack.c.l.b16 %v2446
    %v2518 = vpack.c.b16 %v2487, %v2486
    %v2519 = vpack.c.b16 %v2489, %v2488
    %v2520 = vpack.c.b16 %v2491, %v2490
    %v2521 = vpack.c.b16 %v2493, %v2492
    %v2522 = vpack.c.b16 %v2495, %v2494
    %v2523 = vpack.c.b16 %v2497, %v2496
    %v2524 = vpack.c.b16 %v2499, %v2498
    %v2525 = vpack.c.b16 %v2501, %v2500
    %v2526 = vpack.c.b16 %v2503, %v2502
    %v2527 = vpack.c.b16 %v2505, %v2504
    %v2528 = vpack.c.b16 %v2507, %v2506
    %v2529 = vpack.c.b16 %v2509, %v2508
    %v2530 = vpack.c.b16 %v2511, %v2510
    %v2531 = vpack.c.b16 %v2513, %v2512
    %v2532 = vpack.c.b16 %v2515, %v2514
    %v2533 = vpack.c.b16 %v2517, %v2516
    %2550 = vmatprep.subr.bf16.mxu0 0
    %2551 = vmatpush1.bf16.msra.mxu0 %v2518
    %2552 = vmatprep.subr.bf16.mxu0 0
    %2553 = vmatpush1.bf16.msra.mxu0 %v2519
    %2554 = vmatprep.subr.bf16.mxu0 0
    %2555 = vmatpush1.bf16.msra.mxu0 %v2520
    %2556 = vmatprep.subr.bf16.mxu0 0
    %2557 = vmatpush1.bf16.msra.mxu0 %v2521
    %2558 = vmatprep.subr.bf16.mxu0 0
    %2559 = vmatpush1.bf16.msra.mxu0 %v2522
    %2560 = vmatprep.subr.bf16.mxu0 0
    %2561 = vmatpush1.bf16.msra.mxu0 %v2523
    %2562 = vmatprep.subr.bf16.mxu0 0
    %2563 = vmatpush1.bf16.msra.mxu0 %v2524
    %2564 = vmatprep.subr.bf16.mxu0 0
    %2565 = vmatpush1.bf16.msra.mxu0 %v2525
    %2566 = vmatprep.subr.bf16.mxu0 0
    %2567 = vmatpush1.bf16.msra.mxu0 %v2526
    %2568 = vmatprep.subr.bf16.mxu0 0
    %2569 = vmatpush1.bf16.msra.mxu0 %v2527
    %2570 = vmatprep.subr.bf16.mxu0 0
    %2571 = vmatpush1.bf16.msra.mxu0 %v2528
    %2572 = vmatprep.subr.bf16.mxu0 0
    %2573 = vmatpush1.bf16.msra.mxu0 %v2529
    %2574 = vmatprep.subr.bf16.mxu0 0
    %2575 = vmatpush1.bf16.msra.mxu0 %v2530
    %2576 = vmatprep.subr.bf16.mxu0 0
    %2577 = vmatpush1.bf16.msra.mxu0 %v2531
    %2578 = vmatprep.subr.bf16.mxu0 0
    %2579 = vmatpush1.bf16.msra.mxu0 %v2532
    %2580 = vmatprep.subr.bf16.mxu0 0
    %2581 = vmatpush1.bf16.msra.mxu0 %v2533
    %2582 = vmatprep.mubr.bf16.mxu0 %v2414
    %2583 = vmatmul.mubr.bf16.gmra.mrb[0].mxu0 %v2413
    %v2584 = vpop.f32.mrb[0].mxu0
    %v2585 = vadd.f32 %v2452, %v2584
    %v2586 = vpop.f32.mrb[0].mxu0
    %v2587 = vpop.f32.mrb[0].mxu0
    %v2588 = vadd.f32 %v2452, %v2587
    %v2589 = vpop.f32.mrb[0].mxu0
    %2590 = vdwg.mxu0
    %v2591 = vld [vmem:[#allocation5] sm:$0xff]
    %v2592 = vld [vmem:[#allocation5 + $0x8] sm:$0xff]
    %v2593 = vadd.f32 %v2585, %v2591
    %v2594 = vadd.f32 %v2588, %v2592
    %v2595 = vmul.f32 %v2593, 1.4285715
    %v2596 = vmul.f32 %v2594, 1.4285715
    %v2597 = vlaneseq
    %v2598 = vand.u32 %v2597, 127
    %2599 = vrot.lane.b32.xlu0 %v2595, 127
    %v2600 = vpop.permute.xlu0 %2599
    %2601 = vrot.lane.b32.xlu0 %v2596, 127
    %v2602 = vpop.permute.xlu0 %2601
    %2603 = vrot.lane.b32.xlu0 %v2595, 1
    %v2604 = vpop.permute.xlu0 %2603
    %2605 = vrot.lane.b32.xlu0 %v2596, 1
    %v2606 = vpop.permute.xlu0 %2605
    %v2607 = vand.u32 %v2598, 1
    %vm2608 = vcmp.eq.s32.totalorder %v2607, 0
    %v2609 = vsel %vm2608, %v2600, %v2604
    %v2610 = vsel %vm2608, %v2602, %v2606
    %v2611 = vmax.f32 %v2595, %v2609
    %v2612 = vmax.f32 %v2596, %v2610
    %2613 = vrot.lane.b32.xlu0 %v2611, 126
    %v2614 = vpop.permute.xlu0 %2613
    %2615 = vrot.lane.b32.xlu0 %v2612, 126
    %v2616 = vpop.permute.xlu0 %2615
    %2617 = vrot.lane.b32.xlu0 %v2611, 2
    %v2618 = vpop.permute.xlu0 %2617
    %2619 = vrot.lane.b32.xlu0 %v2612, 2
    %v2620 = vpop.permute.xlu0 %2619
    %v2621 = vand.u32 %v2598, 2
    %vm2622 = vcmp.eq.s32.totalorder %v2621, 0
    %v2623 = vsel %vm2622, %v2614, %v2618
    %v2624 = vsel %vm2622, %v2616, %v2620
    %v2625 = vmax.f32 %v2611, %v2623
    %v2626 = vmax.f32 %v2612, %v2624
    %2627 = vrot.lane.b32.xlu0 %v2625, 124
    %v2628 = vpop.permute.xlu0 %2627
    %2629 = vrot.lane.b32.xlu0 %v2626, 124
    %v2630 = vpop.permute.xlu0 %2629
    %2631 = vrot.lane.b32.xlu0 %v2625, 4
    %v2632 = vpop.permute.xlu0 %2631
    %2633 = vrot.lane.b32.xlu0 %v2626, 4
    %v2634 = vpop.permute.xlu0 %2633
    %v2635 = vand.u32 %v2598, 4
    %vm2636 = vcmp.eq.s32.totalorder %v2635, 0
    %v2637 = vsel %vm2636, %v2628, %v2632
    %v2638 = vsel %vm2636, %v2630, %v2634
    %v2639 = vmax.f32 %v2625, %v2637
    %v2640 = vmax.f32 %v2626, %v2638
    %2641 = vrot.lane.b32.xlu0 %v2639, 120
    %v2642 = vpop.permute.xlu0 %2641
    %2643 = vrot.lane.b32.xlu0 %v2640, 120
    %v2644 = vpop.permute.xlu0 %2643
    %2645 = vrot.lane.b32.xlu0 %v2639, 8
    %v2646 = vpop.permute.xlu0 %2645
    %2647 = vrot.lane.b32.xlu0 %v2640, 8
    %v2648 = vpop.permute.xlu0 %2647
    %v2649 = vand.u32 %v2598, 8
    %vm2650 = vcmp.eq.s32.totalorder %v2649, 0
    %v2651 = vsel %vm2650, %v2642, %v2646
    %v2652 = vsel %vm2650, %v2644, %v2648
    %v2653 = vmax.f32 %v2639, %v2651
    %v2654 = vmax.f32 %v2640, %v2652
    %v2655 = vsub.f32 %v2595, %v2653
    %v2656 = vsub.f32 %v2596, %v2654
    %v2657 = vmul.f32 %v2655, 1.442695
    %v2658 = vpow.pop %v2657
    %v2659 = vmul.f32 %v2656, 1.442695
    %v2660 = vpow.pop %v2659
    %2661 = vrot.lane.b32.xlu0 %v2658, 127
    %v2662 = vpop.permute.xlu0 %2661
    %2663 = vrot.lane.b32.xlu0 %v2660, 127
    %v2664 = vpop.permute.xlu0 %2663
    %2665 = vrot.lane.b32.xlu0 %v2658, 1
    %v2666 = vpop.permute.xlu0 %2665
    %2667 = vrot.lane.b32.xlu0 %v2660, 1
    %v2668 = vpop.permute.xlu0 %2667
    %v2669 = vsel %vm2608, %v2662, %v2666
    %v2670 = vsel %vm2608, %v2664, %v2668
    %v2671 = vadd.f32 %v2658, %v2669
    %v2672 = vadd.f32 %v2660, %v2670
    %2673 = vrot.lane.b32.xlu0 %v2671, 126
    %v2674 = vpop.permute.xlu0 %2673
    %2675 = vrot.lane.b32.xlu0 %v2672, 126
    %v2676 = vpop.permute.xlu0 %2675
    %2677 = vrot.lane.b32.xlu0 %v2671, 2
    %v2678 = vpop.permute.xlu0 %2677
    %2679 = vrot.lane.b32.xlu0 %v2672, 2
    %v2680 = vpop.permute.xlu0 %2679
    %v2681 = vsel %vm2622, %v2674, %v2678
    %v2682 = vsel %vm2622, %v2676, %v2680
    %v2683 = vadd.f32 %v2671, %v2681
    %v2684 = vadd.f32 %v2672, %v2682
    %2685 = vrot.lane.b32.xlu0 %v2683, 124
    %v2686 = vpop.permute.xlu0 %2685
    %2687 = vrot.lane.b32.xlu0 %v2684, 124
    %v2688 = vpop.permute.xlu0 %2687
    %2689 = vrot.lane.b32.xlu0 %v2683, 4
    %v2690 = vpop.permute.xlu0 %2689
    %2691 = vrot.lane.b32.xlu0 %v2684, 4
    %v2692 = vpop.permute.xlu0 %2691
    %v2693 = vsel %vm2636, %v2686, %v2690
    %v2694 = vsel %vm2636, %v2688, %v2692
    %v2695 = vadd.f32 %v2683, %v2693
    %v2696 = vadd.f32 %v2684, %v2694
    %2697 = vrot.lane.b32.xlu0 %v2695, 120
    %v2698 = vpop.permute.xlu0 %2697
    %2699 = vrot.lane.b32.xlu0 %v2696, 120
    %v2700 = vpop.permute.xlu0 %2699
    %2701 = vrot.lane.b32.xlu0 %v2695, 8
    %v2702 = vpop.permute.xlu0 %2701
    %2703 = vrot.lane.b32.xlu0 %v2696, 8
    %v2704 = vpop.permute.xlu0 %2703
    %v2705 = vsel %vm2650, %v2698, %v2702
    %v2706 = vsel %vm2650, %v2700, %v2704
    %v2707 = vadd.f32 %v2695, %v2705
    %v2708 = vadd.f32 %v2696, %v2706
    %v2709 = vrcp.pop %v2707
    %v2710 = vrcp.pop %v2708
    %v2711 = vmul.f32 %v2707, %v2709
    %v2712 = vmul.f32 %v2708, %v2710
    %v2713 = vsub.f32 2.0, %v2711
    %v2714 = vsub.f32 2.0, %v2712
    %v2715 = vmul.f32 %v2709, %v2713
    %v2716 = vmul.f32 %v2710, %v2714
    %v2717 = vmul.f32 %v2658, %v2715
    %v2718 = vmul.f32 %v2660, %v2716
    %v2719 = vmin.f32 %v2717, 1.0
    %v2720 = vmin.f32 %v2718, 1.0
    %2721 = vst [vmem:[#allocation17] sm:$0xff] %v2719
    %2722 = vst [vmem:[#allocation17 + $0x8] sm:$0xff] %v2720
    %v2723 = vpack.c.bf16 %v2720, %v2719
    %v2724 = vld [vmem:[#allocation11] sm:$0xff]
    %v2725 = vld [vmem:[#allocation11 + $0x8] sm:$0xff]
    %v2726 = vld [vmem:[#allocation11 + $0x10] sm:$0xff]
    %v2727 = vld [vmem:[#allocation11 + $0x18] sm:$0xff]
    %v2728 = vld [vmem:[#allocation11 + $0x20] sm:$0xff]
    %v2729 = vld [vmem:[#allocation11 + $0x28] sm:$0xff]
    %v2730 = vld [vmem:[#allocation11 + $0x30] sm:$0xff]
    %v2731 = vld [vmem:[#allocation11 + $0x38] sm:$0xff]
    %v2732 = vld [vmem:[#allocation11 + $0x40] sm:$0xff]
    %v2733 = vld [vmem:[#allocation11 + $0x48] sm:$0xff]
    %v2734 = vld [vmem:[#allocation11 + $0x50] sm:$0xff]
    %v2735 = vld [vmem:[#allocation11 + $0x58] sm:$0xff]
    %v2736 = vld [vmem:[#allocation11 + $0x60] sm:$0xff]
    %v2737 = vld [vmem:[#allocation11 + $0x68] sm:$0xff]
    %v2738 = vld [vmem:[#allocation11 + $0x70] sm:$0xff]
    %v2739 = vld [vmem:[#allocation11 + $0x78] sm:$0xff]
    %v2740 = vld [vmem:[%s9] sm:$0x3]
    %v2742 = vlaneseq
    %v2743 = vshrl.u32 %v2742, 7
    %v2744 = vsub.s32 0, %v2743
    %v2745 = vrot.slane %v2740, %v2744
    %v2746 = vlaneseq
    %v2747 = vshrl.u32 %v2746, 7
    %v2748 = vsub.s32 1, %v2747
    %v2749 = vrot.slane %v2740, %v2748
    %v2768 = vunpack.c.l.b16 %v2724
    %v2769 = vunpack.c.h.b16 %v2724
    %v2770 = vunpack.c.l.b16 %v2725
    %v2771 = vunpack.c.h.b16 %v2725
    %v2772 = vunpack.c.l.b16 %v2726
    %v2773 = vunpack.c.h.b16 %v2726
    %v2774 = vunpack.c.l.b16 %v2727
    %v2775 = vunpack.c.h.b16 %v2727
    %v2776 = vunpack.c.l.b16 %v2728
    %v2777 = vunpack.c.h.b16 %v2728
    %v2778 = vunpack.c.l.b16 %v2729
    %v2779 = vunpack.c.h.b16 %v2729
    %v2780 = vunpack.c.l.b16 %v2730
    %v2781 = vunpack.c.h.b16 %v2730
    %v2782 = vunpack.c.l.b16 %v2731
    %v2783 = vunpack.c.h.b16 %v2731
    %v2784 = vunpack.c.l.b16 %v2732
    %v2785 = vunpack.c.h.b16 %v2732
    %v2786 = vunpack.c.l.b16 %v2733
    %v2787 = vunpack.c.h.b16 %v2733
    %v2788 = vunpack.c.l.b16 %v2734
    %v2789 = vunpack.c.h.b16 %v2734
    %v2790 = vunpack.c.l.b16 %v2735
    %v2791 = vunpack.c.h.b16 %v2735
    %v2792 = vunpack.c.l.b16 %v2736
    %v2793 = vunpack.c.h.b16 %v2736
    %v2794 = vunpack.c.l.b16 %v2737
    %v2795 = vunpack.c.h.b16 %v2737
    %v2796 = vunpack.c.l.b16 %v2738
    %v2797 = vunpack.c.h.b16 %v2738
    %v2798 = vunpack.c.l.b16 %v2739
    %v2799 = vunpack.c.h.b16 %v2739
    %v2800 = vpack.c.b16 %v2770, %v2768
    %v2801 = vpack.c.b16 %v2771, %v2769
    %v2802 = vpack.c.b16 %v2774, %v2772
    %v2803 = vpack.c.b16 %v2775, %v2773
    %v2804 = vpack.c.b16 %v2778, %v2776
    %v2805 = vpack.c.b16 %v2779, %v2777
    %v2806 = vpack.c.b16 %v2782, %v2780
    %v2807 = vpack.c.b16 %v2783, %v2781
    %v2808 = vpack.c.b16 %v2786, %v2784
    %v2809 = vpack.c.b16 %v2787, %v2785
    %v2810 = vpack.c.b16 %v2790, %v2788
    %v2811 = vpack.c.b16 %v2791, %v2789
    %v2812 = vpack.c.b16 %v2794, %v2792
    %v2813 = vpack.c.b16 %v2795, %v2793
    %v2814 = vpack.c.b16 %v2798, %v2796
    %v2815 = vpack.c.b16 %v2799, %v2797
    %2832 = vmatprep.subr.bf16.mxu0 %v2801
    %2833 = vmatpush1.bf16.msra.mxu0 %v2800
    %2834 = vmatprep.subr.bf16.mxu0 %v2803
    %2835 = vmatpush1.bf16.msra.mxu0 %v2802
    %2836 = vmatprep.subr.bf16.mxu0 %v2805
    %2837 = vmatpush1.bf16.msra.mxu0 %v2804
    %2838 = vmatprep.subr.bf16.mxu0 %v2807
    %2839 = vmatpush1.bf16.msra.mxu0 %v2806
    %2840 = vmatprep.subr.bf16.mxu0 %v2809
    %2841 = vmatpush1.bf16.msra.mxu0 %v2808
    %2842 = vmatprep.subr.bf16.mxu0 %v2811
    %2843 = vmatpush1.bf16.msra.mxu0 %v2810
    %2844 = vmatprep.subr.bf16.mxu0 %v2813
    %2845 = vmatpush1.bf16.msra.mxu0 %v2812
    %2846 = vmatprep.subr.bf16.mxu0 %v2815
    %2847 = vmatpush1.bf16.msra.mxu0 %v2814
    %2848 = vmatprep.subr.bf16.mxu0 0
    %2849 = vmatpush1.bf16.msra.mxu0 0
    %2850 = vmatprep.subr.bf16.mxu0 0
    %2851 = vmatpush1.bf16.msra.mxu0 0
    %2852 = vmatprep.subr.bf16.mxu0 0
    %2853 = vmatpush1.bf16.msra.mxu0 0
    %2854 = vmatprep.subr.bf16.mxu0 0
    %2855 = vmatpush1.bf16.msra.mxu0 0
    %2856 = vmatprep.subr.bf16.mxu0 0
    %2857 = vmatpush1.bf16.msra.mxu0 0
    %2858 = vmatprep.subr.bf16.mxu0 0
    %2859 = vmatpush1.bf16.msra.mxu0 0
    %2860 = vmatprep.subr.bf16.mxu0 0
    %2861 = vmatpush1.bf16.msra.mxu0 0
    %2862 = vmatprep.subr.bf16.mxu0 0
    %2863 = vmatpush1.bf16.msra.mxu0 0
    %2864 = vmatprep.mubr.bf16.mxu0 0
    %2865 = vmatmul.mubr.bf16.gmra.mrb[0].mxu0 %v2723
    %v2866 = vpop.f32.mrb[0].mxu0
    %v2867 = vadd.f32 %v2745, %v2866
    %v2868 = vpop.f32.mrb[0].mxu0
    %v2869 = vadd.f32 %v2749, %v2868
    %v2870 = vpop.f32.mrb[0].mxu0
    %v2871 = vadd.f32 %v2745, %v2870
    %v2872 = vpop.f32.mrb[0].mxu0
    %v2873 = vadd.f32 %v2749, %v2872
    %2874 = vdwg.mxu0
    %v2875 = vmax.f32 %v2867, 0.0
    %v2876 = vmax.f32 %v2869, 0.0
    %v2877 = vmax.f32 %v2871, 0.0
    %v2878 = vmax.f32 %v2873, 0.0
    %v2879 = vpack.c.bf16 %v2877, %v2875
    %v2880 = vpack.c.bf16 %v2878, %v2876
    %v2881 = vld [vmem:[#allocation13] sm:$0xff]
    %v2882 = vld [vmem:[#allocation13 + $0x8] sm:$0xff]
    %v2883 = vld [vmem:[#allocation13 + $0x10] sm:$0xff]
    %v2884 = vld [vmem:[#allocation13 + $0x18] sm:$0xff]
    %v2885 = vld [vmem:[#allocation13 + $0x20] sm:$0xff]
    %v2886 = vld [vmem:[#allocation13 + $0x28] sm:$0xff]
    %v2887 = vld [vmem:[#allocation13 + $0x30] sm:$0xff]
    %v2888 = vld [vmem:[#allocation13 + $0x38] sm:$0xff]
    %v2889 = vld [vmem:[#allocation13 + $0x40] sm:$0xff]
    %v2890 = vld [vmem:[#allocation13 + $0x48] sm:$0xff]
    %v2891 = vld [vmem:[#allocation13 + $0x50] sm:$0xff]
    %v2892 = vld [vmem:[#allocation13 + $0x58] sm:$0xff]
    %v2893 = vld [vmem:[#allocation13 + $0x60] sm:$0xff]
    %v2894 = vld [vmem:[#allocation13 + $0x68] sm:$0xff]
    %v2895 = vld [vmem:[#allocation13 + $0x70] sm:$0xff]
    %v2896 = vld [vmem:[#allocation13 + $0x78] sm:$0xff]
    %v2897 = vld [vmem:[#allocation13 + $0x80] sm:$0xff]
    %v2898 = vld [vmem:[#allocation13 + $0x88] sm:$0xff]
    %v2899 = vld [vmem:[#allocation13 + $0x90] sm:$0xff]
    %v2900 = vld [vmem:[#allocation13 + $0x98] sm:$0xff]
    %v2901 = vld [vmem:[#allocation13 + $0xa0] sm:$0xff]
    %v2902 = vld [vmem:[#allocation13 + $0xa8] sm:$0xff]
    %v2903 = vld [vmem:[#allocation13 + $0xb0] sm:$0xff]
    %v2904 = vld [vmem:[#allocation13 + $0xb8] sm:$0xff]
    %v2905 = vld [vmem:[#allocation13 + $0xc0] sm:$0xff]
    %v2906 = vld [vmem:[#allocation13 + $0xc8] sm:$0xff]
    %v2907 = vld [vmem:[#allocation13 + $0xd0] sm:$0xff]
    %v2908 = vld [vmem:[#allocation13 + $0xd8] sm:$0xff]
    %v2909 = vld [vmem:[#allocation13 + $0xe0] sm:$0xff]
    %v2910 = vld [vmem:[#allocation13 + $0xe8] sm:$0xff]
    %v2911 = vld [vmem:[#allocation13 + $0xf0] sm:$0xff]
    %v2912 = vld [vmem:[#allocation13 + $0xf8] sm:$0xff]
    %v2913 = vld [vmem:[#allocation13 + $0x100] sm:$0xff]
    %v2914 = vld [vmem:[#allocation13 + $0x108] sm:$0xff]
    %v2915 = vld [vmem:[#allocation13 + $0x110] sm:$0xff]
    %v2916 = vld [vmem:[#allocation13 + $0x118] sm:$0xff]
    %v2917 = vld [vmem:[#allocation13 + $0x120] sm:$0xff]
    %v2918 = vld [vmem:[#allocation13 + $0x128] sm:$0xff]
    %v2919 = vld [vmem:[#allocation13 + $0x130] sm:$0xff]
    %v2920 = vld [vmem:[#allocation13 + $0x138] sm:$0xff]
    %v2921 = vld [vmem:[#allocation13 + $0x140] sm:$0xff]
    %v2922 = vld [vmem:[#allocation13 + $0x148] sm:$0xff]
    %v2923 = vld [vmem:[#allocation13 + $0x150] sm:$0xff]
    %v2924 = vld [vmem:[#allocation13 + $0x158] sm:$0xff]
    %v2925 = vld [vmem:[#allocation13 + $0x160] sm:$0xff]
    %v2926 = vld [vmem:[#allocation13 + $0x168] sm:$0xff]
    %v2927 = vld [vmem:[#allocation13 + $0x170] sm:$0xff]
    %v2928 = vld [vmem:[#allocation13 + $0x178] sm:$0xff]
    %v2929 = vld [vmem:[#allocation13 + $0x180] sm:$0xff]
    %v2930 = vld [vmem:[#allocation13 + $0x188] sm:$0xff]
    %v2931 = vld [vmem:[#allocation13 + $0x190] sm:$0xff]
    %v2932 = vld [vmem:[#allocation13 + $0x198] sm:$0xff]
    %v2933 = vld [vmem:[#allocation13 + $0x1a0] sm:$0xff]
    %v2934 = vld [vmem:[#allocation13 + $0x1a8] sm:$0xff]
    %v2935 = vld [vmem:[#allocation13 + $0x1b0] sm:$0xff]
    %v2936 = vld [vmem:[#allocation13 + $0x1b8] sm:$0xff]
    %v2937 = vld [vmem:[#allocation13 + $0x1c0] sm:$0xff]
    %v2938 = vld [vmem:[#allocation13 + $0x1c8] sm:$0xff]
    %v2939 = vld [vmem:[#allocation13 + $0x1d0] sm:$0xff]
    %v2940 = vld [vmem:[#allocation13 + $0x1d8] sm:$0xff]
    %v2941 = vld [vmem:[#allocation13 + $0x1e0] sm:$0xff]
    %v2942 = vld [vmem:[#allocation13 + $0x1e8] sm:$0xff]
    %v2943 = vld [vmem:[#allocation13 + $0x1f0] sm:$0xff]
    %v2944 = vld [vmem:[#allocation13 + $0x1f8] sm:$0xff]
    %v2945 = vld [vmem:[%s11] sm:$0xf]
    %v2947 = vlaneseq
    %v2948 = vshrl.u32 %v2947, 7
    %v2949 = vsub.s32 0, %v2948
    %v2950 = vrot.slane %v2945, %v2949
    %v2951 = vlaneseq
    %v2952 = vshrl.u32 %v2951, 7
    %v2953 = vsub.s32 1, %v2952
    %v2954 = vrot.slane %v2945, %v2953
    %v2955 = vlaneseq
    %v2956 = vshrl.u32 %v2955, 7
    %v2957 = vsub.s32 2, %v2956
    %v2958 = vrot.slane %v2945, %v2957
    %v2959 = vlaneseq
    %v2960 = vshrl.u32 %v2959, 7
    %v2961 = vsub.s32 3, %v2960
    %v2962 = vrot.slane %v2945, %v2961
    %v3031 = vunpack.c.l.b16 %v2881
    %v3032 = vunpack.c.h.b16 %v2881
    %v3033 = vunpack.c.l.b16 %v2882
    %v3034 = vunpack.c.h.b16 %v2882
    %v3035 = vunpack.c.l.b16 %v2883
    %v3036 = vunpack.c.h.b16 %v2883
    %v3037 = vunpack.c.l.b16 %v2884
    %v3038 = vunpack.c.h.b16 %v2884
    %v3039 = vunpack.c.l.b16 %v2885
    %v3040 = vunpack.c.h.b16 %v2885
    %v3041 = vunpack.c.l.b16 %v2886
    %v3042 = vunpack.c.h.b16 %v2886
    %v3043 = vunpack.c.l.b16 %v2887
    %v3044 = vunpack.c.h.b16 %v2887
    %v3045 = vunpack.c.l.b16 %v2888
    %v3046 = vunpack.c.h.b16 %v2888
    %v3047 = vunpack.c.l.b16 %v2889
    %v3048 = vunpack.c.h.b16 %v2889
    %v3049 = vunpack.c.l.b16 %v2890
    %v3050 = vunpack.c.h.b16 %v2890
    %v3051 = vunpack.c.l.b16 %v2891
    %v3052 = vunpack.c.h.b16 %v2891
    %v3053 = vunpack.c.l.b16 %v2892
    %v3054 = vunpack.c.h.b16 %v2892
    %v3055 = vunpack.c.l.b16 %v2893
    %v3056 = vunpack.c.h.b16 %v2893
    %v3057 = vunpack.c.l.b16 %v2894
    %v3058 = vunpack.c.h.b16 %v2894
    %v3059 = vunpack.c.l.b16 %v2895
    %v3060 = vunpack.c.h.b16 %v2895
    %v3061 = vunpack.c.l.b16 %v2896
    %v3062 = vunpack.c.h.b16 %v2896
    %v3063 = vunpack.c.l.b16 %v2897
    %v3064 = vunpack.c.h.b16 %v2897
    %v3065 = vunpack.c.l.b16 %v2898
    %v3066 = vunpack.c.h.b16 %v2898
    %v3067 = vunpack.c.l.b16 %v2899
    %v3068 = vunpack.c.h.b16 %v2899
    %v3069 = vunpack.c.l.b16 %v2900
    %v3070 = vunpack.c.h.b16 %v2900
    %v3071 = vunpack.c.l.b16 %v2901
    %v3072 = vunpack.c.h.b16 %v2901
    %v3073 = vunpack.c.l.b16 %v2902
    %v3074 = vunpack.c.h.b16 %v2902
    %v3075 = vunpack.c.l.b16 %v2903
    %v3076 = vunpack.c.h.b16 %v2903
    %v3077 = vunpack.c.l.b16 %v2904
    %v3078 = vunpack.c.h.b16 %v2904
    %v3079 = vunpack.c.l.b16 %v2905
    %v3080 = vunpack.c.h.b16 %v2905
    %v3081 = vunpack.c.l.b16 %v2906
    %v3082 = vunpack.c.h.b16 %v2906
    %v3083 = vunpack.c.l.b16 %v2907
    %v3084 = vunpack.c.h.b16 %v2907
    %v3085 = vunpack.c.l.b16 %v2908
    %v3086 = vunpack.c.h.b16 %v2908
    %v3087 = vunpack.c.l.b16 %v2909
    %v3088 = vunpack.c.h.b16 %v2909
    %v3089 = vunpack.c.l.b16 %v2910
    %v3090 = vunpack.c.h.b16 %v2910
    %v3091 = vunpack.c.l.b16 %v2911
    %v3092 = vunpack.c.h.b16 %v2911
    %v3093 = vunpack.c.l.b16 %v2912
    %v3094 = vunpack.c.h.b16 %v2912
    %v3095 = vunpack.c.l.b16 %v2913
    %v3096 = vunpack.c.h.b16 %v2913
    %v3097 = vunpack.c.l.b16 %v2914
    %v3098 = vunpack.c.h.b16 %v2914
    %v3099 = vunpack.c.l.b16 %v2915
    %v3100 = vunpack.c.h.b16 %v2915
    %v3101 = vunpack.c.l.b16 %v2916
    %v3102 = vunpack.c.h.b16 %v2916
    %v3103 = vunpack.c.l.b16 %v2917
    %v3104 = vunpack.c.h.b16 %v2917
    %v3105 = vunpack.c.l.b16 %v2918
    %v3106 = vunpack.c.h.b16 %v2918
    %v3107 = vunpack.c.l.b16 %v2919
    %v3108 = vunpack.c.h.b16 %v2919
    %v3109 = vunpack.c.l.b16 %v2920
    %v3110 = vunpack.c.h.b16 %v2920
    %v3111 = vunpack.c.l.b16 %v2921
    %v3112 = vunpack.c.h.b16 %v2921
    %v3113 = vunpack.c.l.b16 %v2922
    %v3114 = vunpack.c.h.b16 %v2922
    %v3115 = vunpack.c.l.b16 %v2923
    %v3116 = vunpack.c.h.b16 %v2923
    %v3117 = vunpack.c.l.b16 %v2924
    %v3118 = vunpack.c.h.b16 %v2924
    %v3119 = vunpack.c.l.b16 %v2925
    %v3120 = vunpack.c.h.b16 %v2925
    %v3121 = vunpack.c.l.b16 %v2926
    %v3122 = vunpack.c.h.b16 %v2926
    %v3123 = vunpack.c.l.b16 %v2927
    %v3124 = vunpack.c.h.b16 %v2927
    %v3125 = vunpack.c.l.b16 %v2928
    %v3126 = vunpack.c.h.b16 %v2928
    %v3127 = vunpack.c.l.b16 %v2929
    %v3128 = vunpack.c.h.b16 %v2929
    %v3129 = vunpack.c.l.b16 %v2930
    %v3130 = vunpack.c.h.b16 %v2930
    %v3131 = vunpack.c.l.b16 %v2931
    %v3132 = vunpack.c.h.b16 %v2931
    %v3133 = vunpack.c.l.b16 %v2932
    %v3134 = vunpack.c.h.b16 %v2932
    %v3135 = vunpack.c.l.b16 %v2933
    %v3136 = vunpack.c.h.b16 %v2933
    %v3137 = vunpack.c.l.b16 %v2934
    %v3138 = vunpack.c.h.b16 %v2934
    %v3139 = vunpack.c.l.b16 %v2935
    %v3140 = vunpack.c.h.b16 %v2935
    %v3141 = vunpack.c.l.b16 %v2936
    %v3142 = vunpack.c.h.b16 %v2936
    %v3143 = vunpack.c.l.b16 %v2937
    %v3144 = vunpack.c.h.b16 %v2937
    %v3145 = vunpack.c.l.b16 %v2938
    %v3146 = vunpack.c.h.b16 %v2938
    %v3147 = vunpack.c.l.b16 %v2939
    %v3148 = vunpack.c.h.b16 %v2939
    %v3149 = vunpack.c.l.b16 %v2940
    %v3150 = vunpack.c.h.b16 %v2940
    %v3151 = vunpack.c.l.b16 %v2941
    %v3152 = vunpack.c.h.b16 %v2941
    %v3153 = vunpack.c.l.b16 %v2942
    %v3154 = vunpack.c.h.b16 %v2942
    %v3155 = vunpack.c.l.b16 %v2943
    %v3156 = vunpack.c.h.b16 %v2943
    %v3157 = vunpack.c.l.b16 %v2944
    %v3158 = vunpack.c.h.b16 %v2944
    %v3159 = vpack.c.b16 %v3035, %v3031
    %v3160 = vpack.c.b16 %v3036, %v3032
    %v3161 = vpack.c.b16 %v3037, %v3033
    %v3162 = vpack.c.b16 %v3038, %v3034
    %v3163 = vpack.c.b16 %v3043, %v3039
    %v3164 = vpack.c.b16 %v3044, %v3040
    %v3165 = vpack.c.b16 %v3045, %v3041
    %v3166 = vpack.c.b16 %v3046, %v3042
    %v3167 = vpack.c.b16 %v3051, %v3047
    %v3168 = vpack.c.b16 %v3052, %v3048
    %v3169 = vpack.c.b16 %v3053, %v3049
    %v3170 = vpack.c.b16 %v3054, %v3050
    %v3171 = vpack.c.b16 %v3059, %v3055
    %v3172 = vpack.c.b16 %v3060, %v3056
    %v3173 = vpack.c.b16 %v3061, %v3057
    %v3174 = vpack.c.b16 %v3062, %v3058
    %v3175 = vpack.c.b16 %v3067, %v3063
    %v3176 = vpack.c.b16 %v3068, %v3064
    %v3177 = vpack.c.b16 %v3069, %v3065
    %v3178 = vpack.c.b16 %v3070, %v3066
    %v3179 = vpack.c.b16 %v3075, %v3071
    %v3180 = vpack.c.b16 %v3076, %v3072
    %v3181 = vpack.c.b16 %v3077, %v3073
    %v3182 = vpack.c.b16 %v3078, %v3074
    %v3183 = vpack.c.b16 %v3083, %v3079
    %v3184 = vpack.c.b16 %v3084, %v3080
    %v3185 = vpack.c.b16 %v3085, %v3081
    %v3186 = vpack.c.b16 %v3086, %v3082
    %v3187 = vpack.c.b16 %v3091, %v3087
    %v3188 = vpack.c.b16 %v3092, %v3088
    %v3189 = vpack.c.b16 %v3093, %v3089
    %v3190 = vpack.c.b16 %v3094, %v3090
    %v3191 = vpack.c.b16 %v3099, %v3095
    %v3192 = vpack.c.b16 %v3100, %v3096
    %v3193 = vpack.c.b16 %v3101, %v3097
    %v3194 = vpack.c.b16 %v3102, %v3098
    %v3195 = vpack.c.b16 %v3107, %v3103
    %v3196 = vpack.c.b16 %v3108, %v3104
    %v3197 = vpack.c.b16 %v3109, %v3105
    %v3198 = vpack.c.b16 %v3110, %v3106
    %v3199 = vpack.c.b16 %v3115, %v3111
    %v3200 = vpack.c.b16 %v3116, %v3112
    %v3201 = vpack.c.b16 %v3117, %v3113
    %v3202 = vpack.c.b16 %v3118, %v3114
    %v3203 = vpack.c.b16 %v3123, %v3119
    %v3204 = vpack.c.b16 %v3124, %v3120
    %v3205 = vpack.c.b16 %v3125, %v3121
    %v3206 = vpack.c.b16 %v3126, %v3122
    %v3207 = vpack.c.b16 %v3131, %v3127
    %v3208 = vpack.c.b16 %v3132, %v3128
    %v3209 = vpack.c.b16 %v3133, %v3129
    %v3210 = vpack.c.b16 %v3134, %v3130
    %v3211 = vpack.c.b16 %v3139, %v3135
    %v3212 = vpack.c.b16 %v3140, %v3136
    %v3213 = vpack.c.b16 %v3141, %v3137
    %v3214 = vpack.c.b16 %v3142, %v3138
    %v3215 = vpack.c.b16 %v3147, %v3143
    %v3216 = vpack.c.b16 %v3148, %v3144
    %v3217 = vpack.c.b16 %v3149, %v3145
    %v3218 = vpack.c.b16 %v3150, %v3146
    %v3219 = vpack.c.b16 %v3155, %v3151
    %v3220 = vpack.c.b16 %v3156, %v3152
    %v3221 = vpack.c.b16 %v3157, %v3153
    %v3222 = vpack.c.b16 %v3158, %v3154
    %3287 = vmatprep.subr.bf16.mxu0 %v3160
    %3288 = vmatpush1.bf16.msra.mxu0 %v3159
    %3289 = vmatprep.subr.bf16.mxu0 %v3164
    %3290 = vmatpush1.bf16.msra.mxu0 %v3163
    %3291 = vmatprep.subr.bf16.mxu0 %v3168
    %3292 = vmatpush1.bf16.msra.mxu0 %v3167
    %3293 = vmatprep.subr.bf16.mxu0 %v3172
    %3294 = vmatpush1.bf16.msra.mxu0 %v3171
    %3295 = vmatprep.subr.bf16.mxu0 %v3176
    %3296 = vmatpush1.bf16.msra.mxu0 %v3175
    %3297 = vmatprep.subr.bf16.mxu0 %v3180
    %3298 = vmatpush1.bf16.msra.mxu0 %v3179
    %3299 = vmatprep.subr.bf16.mxu0 %v3184
    %3300 = vmatpush1.bf16.msra.mxu0 %v3183
    %3301 = vmatprep.subr.bf16.mxu0 %v3188
    %3302 = vmatpush1.bf16.msra.mxu0 %v3187
    %3303 = vmatprep.subr.bf16.mxu0 %v3192
    %3304 = vmatpush1.bf16.msra.mxu0 %v3191
    %3305 = vmatprep.subr.bf16.mxu0 %v3196
    %3306 = vmatpush1.bf16.msra.mxu0 %v3195
    %3307 = vmatprep.subr.bf16.mxu0 %v3200
    %3308 = vmatpush1.bf16.msra.mxu0 %v3199
    %3309 = vmatprep.subr.bf16.mxu0 %v3204
    %3310 = vmatpush1.bf16.msra.mxu0 %v3203
    %3311 = vmatprep.subr.bf16.mxu0 %v3208
    %3312 = vmatpush1.bf16.msra.mxu0 %v3207
    %3313 = vmatprep.subr.bf16.mxu0 %v3212
    %3314 = vmatpush1.bf16.msra.mxu0 %v3211
    %3315 = vmatprep.subr.bf16.mxu0 %v3216
    %3316 = vmatpush1.bf16.msra.mxu0 %v3215
    %3317 = vmatprep.subr.bf16.mxu0 %v3220
    %3318 = vmatpush1.bf16.msra.mxu0 %v3219
    %3319 = vmatprep.mubr.bf16.mxu0 %v2880
    %3320 = vmatmul.mubr.bf16.gmra.mrb[0].mxu0 %v2879
    %v3321 = vpop.f32.mrb[0].mxu0
    %v3322 = vadd.f32 %v2950, %v3321
    %v3323 = vpop.f32.mrb[0].mxu0
    %v3324 = vadd.f32 %v2954, %v3323
    %v3325 = vpop.f32.mrb[0].mxu0
    %v3326 = vadd.f32 %v2950, %v3325
    %v3327 = vpop.f32.mrb[0].mxu0
    %v3328 = vadd.f32 %v2954, %v3327
    %3329 = vdwg.mxu0
    %3330 = vmatprep.subr.bf16.mxu0 %v3162
    %3331 = vmatpush1.bf16.msra.mxu0 %v3161
    %3332 = vmatprep.subr.bf16.mxu0 %v3166
    %3333 = vmatpush1.bf16.msra.mxu0 %v3165
    %3334 = vmatprep.subr.bf16.mxu0 %v3170
    %3335 = vmatpush1.bf16.msra.mxu0 %v3169
    %3336 = vmatprep.subr.bf16.mxu0 %v3174
    %3337 = vmatpush1.bf16.msra.mxu0 %v3173
    %3338 = vmatprep.subr.bf16.mxu0 %v3178
    %3339 = vmatpush1.bf16.msra.mxu0 %v3177
    %3340 = vmatprep.subr.bf16.mxu0 %v3182
    %3341 = vmatpush1.bf16.msra.mxu0 %v3181
    %3342 = vmatprep.subr.bf16.mxu0 %v3186
    %3343 = vmatpush1.bf16.msra.mxu0 %v3185
    %3344 = vmatprep.subr.bf16.mxu0 %v3190
    %3345 = vmatpush1.bf16.msra.mxu0 %v3189
    %3346 = vmatprep.subr.bf16.mxu0 %v3194
    %3347 = vmatpush1.bf16.msra.mxu0 %v3193
    %3348 = vmatprep.subr.bf16.mxu0 %v3198
    %3349 = vmatpush1.bf16.msra.mxu0 %v3197
    %3350 = vmatprep.subr.bf16.mxu0 %v3202
    %3351 = vmatpush1.bf16.msra.mxu0 %v3201
    %3352 = vmatprep.subr.bf16.mxu0 %v3206
    %3353 = vmatpush1.bf16.msra.mxu0 %v3205
    %3354 = vmatprep.subr.bf16.mxu0 %v3210
    %3355 = vmatpush1.bf16.msra.mxu0 %v3209
    %3356 = vmatprep.subr.bf16.mxu0 %v3214
    %3357 = vmatpush1.bf16.msra.mxu0 %v3213
    %3358 = vmatprep.subr.bf16.mxu0 %v3218
    %3359 = vmatpush1.bf16.msra.mxu0 %v3217
    %3360 = vmatprep.subr.bf16.mxu0 %v3222
    %3361 = vmatpush1.bf16.msra.mxu0 %v3221
    %3362 = vmatprep.mubr.bf16.mxu0 %v2880
    %3363 = vmatmul.mubr.bf16.gmra.mrb[0].mxu0 %v2879
    %v3364 = vpop.f32.mrb[0].mxu0
    %v3365 = vadd.f32 %v2958, %v3364
    %v3366 = vpop.f32.mrb[0].mxu0
    %v3367 = vadd.f32 %v2962, %v3366
    %v3368 = vpop.f32.mrb[0].mxu0
    %v3369 = vadd.f32 %v2958, %v3368
    %v3370 = vpop.f32.mrb[0].mxu0
    %v3371 = vadd.f32 %v2962, %v3370
    %3372 = vdwg.mxu0
    %v3373 = vmax.f32 %v3322, 0.0
    %v3374 = vmax.f32 %v3324, 0.0
    %v3375 = vmax.f32 %v3365, 0.0
    %v3376 = vmax.f32 %v3367, 0.0
    %v3377 = vmax.f32 %v3326, 0.0
    %v3378 = vmax.f32 %v3328, 0.0
    %v3379 = vmax.f32 %v3369, 0.0
    %v3380 = vmax.f32 %v3371, 0.0
    %v3381 = vpack.c.bf16 %v3377, %v3373
    %v3382 = vpack.c.bf16 %v3378, %v3374
    %v3383 = vpack.c.bf16 %v3379, %v3375
    %v3384 = vpack.c.bf16 %v3380, %v3376
    %v3385 = vld [vmem:[#allocation14] sm:$0xff]
    %v3386 = vld [vmem:[#allocation14 + $0x8] sm:$0xff]
    %v3387 = vld [vmem:[#allocation14 + $0x10] sm:$0xff]
    %v3388 = vld [vmem:[#allocation14 + $0x18] sm:$0xf]
    %v3389 = vld [vmem:[#allocation14 + $0x1c] sm:$0xff]
    %v3390 = vld [vmem:[#allocation14 + $0x24] sm:$0xff]
    %v3391 = vld [vmem:[#allocation14 + $0x2c] sm:$0xff]
    %v3392 = vld [vmem:[#allocation14 + $0x34] sm:$0xf]
    %v3393 = vld [vmem:[#allocation14 + $0x38] sm:$0xff]
    %v3394 = vld [vmem:[#allocation14 + $0x40] sm:$0xff]
    %v3395 = vld [vmem:[#allocation14 + $0x48] sm:$0xff]
    %v3396 = vld [vmem:[#allocation14 + $0x50] sm:$0xf]
    %v3397 = vld [vmem:[#allocation14 + $0x54] sm:$0xff]
    %v3398 = vld [vmem:[#allocation14 + $0x5c] sm:$0xff]
    %v3399 = vld [vmem:[#allocation14 + $0x64] sm:$0xff]
    %v3400 = vld [vmem:[#allocation14 + $0x6c] sm:$0xf]
    %v3401 = vld [vmem:[#allocation14 + $0x70] sm:$0xff]
    %v3402 = vld [vmem:[#allocation14 + $0x78] sm:$0xff]
    %v3403 = vld [vmem:[#allocation14 + $0x80] sm:$0xff]
    %v3404 = vld [vmem:[#allocation14 + $0x88] sm:$0xf]
    %v3405 = vld [vmem:[#allocation14 + $0x8c] sm:$0xff]
    %v3406 = vld [vmem:[#allocation14 + $0x94] sm:$0xff]
    %v3407 = vld [vmem:[#allocation14 + $0x9c] sm:$0xff]
    %v3408 = vld [vmem:[#allocation14 + $0xa4] sm:$0xf]
    %v3409 = vld [vmem:[#allocation14 + $0xa8] sm:$0xff]
    %v3410 = vld [vmem:[#allocation14 + $0xb0] sm:$0xff]
    %v3411 = vld [vmem:[#allocation14 + $0xb8] sm:$0xff]
    %v3412 = vld [vmem:[#allocation14 + $0xc0] sm:$0xf]
    %v3413 = vld [vmem:[#allocation14 + $0xc4] sm:$0xff]
    %v3414 = vld [vmem:[#allocation14 + $0xcc] sm:$0xff]
    %v3415 = vld [vmem:[#allocation14 + $0xd4] sm:$0xff]
    %v3416 = vld [vmem:[#allocation14 + $0xdc] sm:$0xf]
    %v3417 = vld [vmem:[#allocation14 + $0xe0] sm:$0xff]
    %v3418 = vld [vmem:[#allocation14 + $0xe8] sm:$0xff]
    %v3419 = vld [vmem:[#allocation14 + $0xf0] sm:$0xff]
    %v3420 = vld [vmem:[#allocation14 + $0xf8] sm:$0xf]
    %v3421 = vld [vmem:[#allocation14 + $0xfc] sm:$0xff]
    %v3422 = vld [vmem:[#allocation14 + $0x104] sm:$0xff]
    %v3423 = vld [vmem:[#allocation14 + $0x10c] sm:$0xff]
    %v3424 = vld [vmem:[#allocation14 + $0x114] sm:$0xf]
    %v3425 = vld [vmem:[#allocation14 + $0x118] sm:$0xff]
    %v3426 = vld [vmem:[#allocation14 + $0x120] sm:$0xff]
    %v3427 = vld [vmem:[#allocation14 + $0x128] sm:$0xff]
    %v3428 = vld [vmem:[#allocation14 + $0x130] sm:$0xf]
    %v3429 = vld [vmem:[#allocation14 + $0x134] sm:$0xff]
    %v3430 = vld [vmem:[#allocation14 + $0x13c] sm:$0xff]
    %v3431 = vld [vmem:[#allocation14 + $0x144] sm:$0xff]
    %v3432 = vld [vmem:[#allocation14 + $0x14c] sm:$0xf]
    %v3433 = vld [vmem:[#allocation14 + $0x150] sm:$0xff]
    %v3434 = vld [vmem:[#allocation14 + $0x158] sm:$0xff]
    %v3435 = vld [vmem:[#allocation14 + $0x160] sm:$0xff]
    %v3436 = vld [vmem:[#allocation14 + $0x168] sm:$0xf]
    %v3437 = vld [vmem:[#allocation14 + $0x16c] sm:$0xff]
    %v3438 = vld [vmem:[#allocation14 + $0x174] sm:$0xff]
    %v3439 = vld [vmem:[#allocation14 + $0x17c] sm:$0xff]
    %v3440 = vld [vmem:[#allocation14 + $0x184] sm:$0xf]
    %v3441 = vld [vmem:[#allocation14 + $0x188] sm:$0xff]
    %v3442 = vld [vmem:[#allocation14 + $0x190] sm:$0xff]
    %v3443 = vld [vmem:[#allocation14 + $0x198] sm:$0xff]
    %v3444 = vld [vmem:[#allocation14 + $0x1a0] sm:$0xf]
    %v3445 = vld [vmem:[#allocation14 + $0x1a4] sm:$0xff]
    %v3446 = vld [vmem:[#allocation14 + $0x1ac] sm:$0xff]
    %v3447 = vld [vmem:[#allocation14 + $0x1b4] sm:$0xff]
    %v3448 = vld [vmem:[#allocation14 + $0x1bc] sm:$0xf]
    %v3449 = vld [vmem:[#allocation14 + $0x1c0] sm:$0xff]
    %v3450 = vld [vmem:[#allocation14 + $0x1c8] sm:$0xff]
    %v3451 = vld [vmem:[#allocation14 + $0x1d0] sm:$0xff]
    %v3452 = vld [vmem:[#allocation14 + $0x1d8] sm:$0xf]
    %v3453 = vld [vmem:[#allocation14 + $0x1dc] sm:$0xff]
    %v3454 = vld [vmem:[#allocation14 + $0x1e4] sm:$0xff]
    %v3455 = vld [vmem:[#allocation14 + $0x1ec] sm:$0xff]
    %v3456 = vld [vmem:[#allocation14 + $0x1f4] sm:$0xf]
    %v3457 = vld [vmem:[#allocation14 + $0x1f8] sm:$0xff]
    %v3458 = vld [vmem:[#allocation14 + $0x200] sm:$0xff]
    %v3459 = vld [vmem:[#allocation14 + $0x208] sm:$0xff]
    %v3460 = vld [vmem:[#allocation14 + $0x210] sm:$0xf]
    %v3461 = vld [vmem:[#allocation14 + $0x214] sm:$0xff]
    %v3462 = vld [vmem:[#allocation14 + $0x21c] sm:$0xff]
    %v3463 = vld [vmem:[#allocation14 + $0x224] sm:$0xff]
    %v3464 = vld [vmem:[#allocation14 + $0x22c] sm:$0xf]
    %v3465 = vld [vmem:[#allocation14 + $0x230] sm:$0xff]
    %v3466 = vld [vmem:[#allocation14 + $0x238] sm:$0xff]
    %v3467 = vld [vmem:[#allocation14 + $0x240] sm:$0xff]
    %v3468 = vld [vmem:[#allocation14 + $0x248] sm:$0xf]
    %v3469 = vld [vmem:[#allocation14 + $0x24c] sm:$0xff]
    %v3470 = vld [vmem:[#allocation14 + $0x254] sm:$0xff]
    %v3471 = vld [vmem:[#allocation14 + $0x25c] sm:$0xff]
    %v3472 = vld [vmem:[#allocation14 + $0x264] sm:$0xf]
    %v3473 = vld [vmem:[#allocation14 + $0x268] sm:$0xff]
    %v3474 = vld [vmem:[#allocation14 + $0x270] sm:$0xff]
    %v3475 = vld [vmem:[#allocation14 + $0x278] sm:$0xff]
    %v3476 = vld [vmem:[#allocation14 + $0x280] sm:$0xf]
    %v3477 = vld [vmem:[#allocation14 + $0x284] sm:$0xff]
    %v3478 = vld [vmem:[#allocation14 + $0x28c] sm:$0xff]
    %v3479 = vld [vmem:[#allocation14 + $0x294] sm:$0xff]
    %v3480 = vld [vmem:[#allocation14 + $0x29c] sm:$0xf]
    %v3481 = vld [vmem:[#allocation14 + $0x2a0] sm:$0xff]
    %v3482 = vld [vmem:[#allocation14 + $0x2a8] sm:$0xff]
    %v3483 = vld [vmem:[#allocation14 + $0x2b0] sm:$0xff]
    %v3484 = vld [vmem:[#allocation14 + $0x2b8] sm:$0xf]
    %v3485 = vld [vmem:[#allocation14 + $0x2bc] sm:$0xff]
    %v3486 = vld [vmem:[#allocation14 + $0x2c4] sm:$0xff]
    %v3487 = vld [vmem:[#allocation14 + $0x2cc] sm:$0xff]
    %v3488 = vld [vmem:[#allocation14 + $0x2d4] sm:$0xf]
    %v3489 = vld [vmem:[#allocation14 + $0x2d8] sm:$0xff]
    %v3490 = vld [vmem:[#allocation14 + $0x2e0] sm:$0xff]
    %v3491 = vld [vmem:[#allocation14 + $0x2e8] sm:$0xff]
    %v3492 = vld [vmem:[#allocation14 + $0x2f0] sm:$0xf]
    %v3493 = vld [vmem:[#allocation14 + $0x2f4] sm:$0xff]
    %v3494 = vld [vmem:[#allocation14 + $0x2fc] sm:$0xff]
    %v3495 = vld [vmem:[#allocation14 + $0x304] sm:$0xff]
    %v3496 = vld [vmem:[#allocation14 + $0x30c] sm:$0xf]
    %v3497 = vld [vmem:[#allocation14 + $0x310] sm:$0xff]
    %v3498 = vld [vmem:[#allocation14 + $0x318] sm:$0xff]
    %v3499 = vld [vmem:[#allocation14 + $0x320] sm:$0xff]
    %v3500 = vld [vmem:[#allocation14 + $0x328] sm:$0xf]
    %v3501 = vld [vmem:[#allocation14 + $0x32c] sm:$0xff]
    %v3502 = vld [vmem:[#allocation14 + $0x334] sm:$0xff]
    %v3503 = vld [vmem:[#allocation14 + $0x33c] sm:$0xff]
    %v3504 = vld [vmem:[#allocation14 + $0x344] sm:$0xf]
    %v3505 = vld [vmem:[#allocation14 + $0x348] sm:$0xff]
    %v3506 = vld [vmem:[#allocation14 + $0x350] sm:$0xff]
    %v3507 = vld [vmem:[#allocation14 + $0x358] sm:$0xff]
    %v3508 = vld [vmem:[#allocation14 + $0x360] sm:$0xf]
    %v3509 = vld [vmem:[#allocation14 + $0x364] sm:$0xff]
    %v3510 = vld [vmem:[#allocation14 + $0x36c] sm:$0xff]
    %v3511 = vld [vmem:[#allocation14 + $0x374] sm:$0xff]
    %v3512 = vld [vmem:[#allocation14 + $0x37c] sm:$0xf]
    %v3513 = vld [vmem:[#allocation14 + $0x380] sm:$0xff]
    %v3514 = vld [vmem:[#allocation14 + $0x388] sm:$0xff]
    %v3515 = vld [vmem:[#allocation14 + $0x390] sm:$0xff]
    %v3516 = vld [vmem:[#allocation14 + $0x398] sm:$0xf]
    %v3517 = vld [vmem:[#allocation14 + $0x39c] sm:$0xff]
    %v3518 = vld [vmem:[#allocation14 + $0x3a4] sm:$0xff]
    %v3519 = vld [vmem:[#allocation14 + $0x3ac] sm:$0xff]
    %v3520 = vld [vmem:[#allocation14 + $0x3b4] sm:$0xf]
    %v3521 = vld [vmem:[#allocation14 + $0x3b8] sm:$0xff]
    %v3522 = vld [vmem:[#allocation14 + $0x3c0] sm:$0xff]
    %v3523 = vld [vmem:[#allocation14 + $0x3c8] sm:$0xff]
    %v3524 = vld [vmem:[#allocation14 + $0x3d0] sm:$0xf]
    %v3525 = vld [vmem:[#allocation14 + $0x3d4] sm:$0xff]
    %v3526 = vld [vmem:[#allocation14 + $0x3dc] sm:$0xff]
    %v3527 = vld [vmem:[#allocation14 + $0x3e4] sm:$0xff]
    %v3528 = vld [vmem:[#allocation14 + $0x3ec] sm:$0xf]
    %v3529 = vld [vmem:[#allocation14 + $0x3f0] sm:$0xff]
    %v3530 = vld [vmem:[#allocation14 + $0x3f8] sm:$0xff]
    %v3531 = vld [vmem:[#allocation14 + $0x400] sm:$0xff]
    %v3532 = vld [vmem:[#allocation14 + $0x408] sm:$0xf]
    %v3533 = vld [vmem:[#allocation14 + $0x40c] sm:$0xff]
    %v3534 = vld [vmem:[#allocation14 + $0x414] sm:$0xff]
    %v3535 = vld [vmem:[#allocation14 + $0x41c] sm:$0xff]
    %v3536 = vld [vmem:[#allocation14 + $0x424] sm:$0xf]
    %v3537 = vld [vmem:[#allocation14 + $0x428] sm:$0xff]
    %v3538 = vld [vmem:[#allocation14 + $0x430] sm:$0xff]
    %v3539 = vld [vmem:[#allocation14 + $0x438] sm:$0xff]
    %v3540 = vld [vmem:[#allocation14 + $0x440] sm:$0xf]
    %v3541 = vld [vmem:[#allocation14 + $0x444] sm:$0xff]
    %v3542 = vld [vmem:[#allocation14 + $0x44c] sm:$0xff]
    %v3543 = vld [vmem:[#allocation14 + $0x454] sm:$0xff]
    %v3544 = vld [vmem:[#allocation14 + $0x45c] sm:$0xf]
    %v3545 = vld [vmem:[#allocation14 + $0x460] sm:$0xff]
    %v3546 = vld [vmem:[#allocation14 + $0x468] sm:$0xff]
    %v3547 = vld [vmem:[#allocation14 + $0x470] sm:$0xff]
    %v3548 = vld [vmem:[#allocation14 + $0x478] sm:$0xf]
    %v3549 = vld [vmem:[#allocation14 + $0x47c] sm:$0xff]
    %v3550 = vld [vmem:[#allocation14 + $0x484] sm:$0xff]
    %v3551 = vld [vmem:[#allocation14 + $0x48c] sm:$0xff]
    %v3552 = vld [vmem:[#allocation14 + $0x494] sm:$0xf]
    %v3553 = vld [vmem:[#allocation14 + $0x498] sm:$0xff]
    %v3554 = vld [vmem:[#allocation14 + $0x4a0] sm:$0xff]
    %v3555 = vld [vmem:[#allocation14 + $0x4a8] sm:$0xff]
    %v3556 = vld [vmem:[#allocation14 + $0x4b0] sm:$0xf]
    %v3557 = vld [vmem:[#allocation14 + $0x4b4] sm:$0xff]
    %v3558 = vld [vmem:[#allocation14 + $0x4bc] sm:$0xff]
    %v3559 = vld [vmem:[#allocation14 + $0x4c4] sm:$0xff]
    %v3560 = vld [vmem:[#allocation14 + $0x4cc] sm:$0xf]
    %v3561 = vld [vmem:[#allocation14 + $0x4d0] sm:$0xff]
    %v3562 = vld [vmem:[#allocation14 + $0x4d8] sm:$0xff]
    %v3563 = vld [vmem:[#allocation14 + $0x4e0] sm:$0xff]
    %v3564 = vld [vmem:[#allocation14 + $0x4e8] sm:$0xf]
    %v3565 = vld [vmem:[#allocation14 + $0x4ec] sm:$0xff]
    %v3566 = vld [vmem:[#allocation14 + $0x4f4] sm:$0xff]
    %v3567 = vld [vmem:[#allocation14 + $0x4fc] sm:$0xff]
    %v3568 = vld [vmem:[#allocation14 + $0x504] sm:$0xf]
    %v3569 = vld [vmem:[#allocation14 + $0x508] sm:$0xff]
    %v3570 = vld [vmem:[#allocation14 + $0x510] sm:$0xff]
    %v3571 = vld [vmem:[#allocation14 + $0x518] sm:$0xff]
    %v3572 = vld [vmem:[#allocation14 + $0x520] sm:$0xf]
    %v3573 = vld [vmem:[#allocation14 + $0x524] sm:$0xff]
    %v3574 = vld [vmem:[#allocation14 + $0x52c] sm:$0xff]
    %v3575 = vld [vmem:[#allocation14 + $0x534] sm:$0xff]
    %v3576 = vld [vmem:[#allocation14 + $0x53c] sm:$0xf]
    %v3577 = vld [vmem:[#allocation14 + $0x540] sm:$0xff]
    %v3578 = vld [vmem:[#allocation14 + $0x548] sm:$0xff]
    %v3579 = vld [vmem:[#allocation14 + $0x550] sm:$0xff]
    %v3580 = vld [vmem:[#allocation14 + $0x558] sm:$0xf]
    %v3581 = vld [vmem:[#allocation14 + $0x55c] sm:$0xff]
    %v3582 = vld [vmem:[#allocation14 + $0x564] sm:$0xff]
    %v3583 = vld [vmem:[#allocation14 + $0x56c] sm:$0xff]
    %v3584 = vld [vmem:[#allocation14 + $0x574] sm:$0xf]
    %v3585 = vld [vmem:[#allocation14 + $0x578] sm:$0xff]
    %v3586 = vld [vmem:[#allocation14 + $0x580] sm:$0xff]
    %v3587 = vld [vmem:[#allocation14 + $0x588] sm:$0xff]
    %v3588 = vld [vmem:[#allocation14 + $0x590] sm:$0xf]
    %v3589 = vld [vmem:[#allocation14 + $0x594] sm:$0xff]
    %v3590 = vld [vmem:[#allocation14 + $0x59c] sm:$0xff]
    %v3591 = vld [vmem:[#allocation14 + $0x5a4] sm:$0xff]
    %v3592 = vld [vmem:[#allocation14 + $0x5ac] sm:$0xf]
    %v3593 = vld [vmem:[#allocation14 + $0x5b0] sm:$0xff]
    %v3594 = vld [vmem:[#allocation14 + $0x5b8] sm:$0xff]
    %v3595 = vld [vmem:[#allocation14 + $0x5c0] sm:$0xff]
    %v3596 = vld [vmem:[#allocation14 + $0x5c8] sm:$0xf]
    %v3597 = vld [vmem:[#allocation14 + $0x5cc] sm:$0xff]
    %v3598 = vld [vmem:[#allocation14 + $0x5d4] sm:$0xff]
    %v3599 = vld [vmem:[#allocation14 + $0x5dc] sm:$0xff]
    %v3600 = vld [vmem:[#allocation14 + $0x5e4] sm:$0xf]
    %v3601 = vld [vmem:[#allocation14 + $0x5e8] sm:$0xff]
    %v3602 = vld [vmem:[#allocation14 + $0x5f0] sm:$0xff]
    %v3603 = vld [vmem:[#allocation14 + $0x5f8] sm:$0xff]
    %v3604 = vld [vmem:[#allocation14 + $0x600] sm:$0xf]
    %v3605 = vld [vmem:[#allocation14 + $0x604] sm:$0xff]
    %v3606 = vld [vmem:[#allocation14 + $0x60c] sm:$0xff]
    %v3607 = vld [vmem:[#allocation14 + $0x614] sm:$0xff]
    %v3608 = vld [vmem:[#allocation14 + $0x61c] sm:$0xf]
    %v3609 = vld [vmem:[#allocation14 + $0x620] sm:$0xff]
    %v3610 = vld [vmem:[#allocation14 + $0x628] sm:$0xff]
    %v3611 = vld [vmem:[#allocation14 + $0x630] sm:$0xff]
    %v3612 = vld [vmem:[#allocation14 + $0x638] sm:$0xf]
    %v3613 = vld [vmem:[#allocation14 + $0x63c] sm:$0xff]
    %v3614 = vld [vmem:[#allocation14 + $0x644] sm:$0xff]
    %v3615 = vld [vmem:[#allocation14 + $0x64c] sm:$0xff]
    %v3616 = vld [vmem:[#allocation14 + $0x654] sm:$0xf]
    %v3617 = vld [vmem:[#allocation14 + $0x658] sm:$0xff]
    %v3618 = vld [vmem:[#allocation14 + $0x660] sm:$0xff]
    %v3619 = vld [vmem:[#allocation14 + $0x668] sm:$0xff]
    %v3620 = vld [vmem:[#allocation14 + $0x670] sm:$0xf]
    %v3621 = vld [vmem:[#allocation14 + $0x674] sm:$0xff]
    %v3622 = vld [vmem:[#allocation14 + $0x67c] sm:$0xff]
    %v3623 = vld [vmem:[#allocation14 + $0x684] sm:$0xff]
    %v3624 = vld [vmem:[#allocation14 + $0x68c] sm:$0xf]
    %v3625 = vld [vmem:[#allocation14 + $0x690] sm:$0xff]
    %v3626 = vld [vmem:[#allocation14 + $0x698] sm:$0xff]
    %v3627 = vld [vmem:[#allocation14 + $0x6a0] sm:$0xff]
    %v3628 = vld [vmem:[#allocation14 + $0x6a8] sm:$0xf]
    %v3629 = vld [vmem:[#allocation14 + $0x6ac] sm:$0xff]
    %v3630 = vld [vmem:[#allocation14 + $0x6b4] sm:$0xff]
    %v3631 = vld [vmem:[#allocation14 + $0x6bc] sm:$0xff]
    %v3632 = vld [vmem:[#allocation14 + $0x6c4] sm:$0xf]
    %v3633 = vld [vmem:[#allocation14 + $0x6c8] sm:$0xff]
    %v3634 = vld [vmem:[#allocation14 + $0x6d0] sm:$0xff]
    %v3635 = vld [vmem:[#allocation14 + $0x6d8] sm:$0xff]
    %v3636 = vld [vmem:[#allocation14 + $0x6e0] sm:$0xf]
    %v3637 = vld [vmem:[#allocation14 + $0x6e4] sm:$0xff]
    %v3638 = vld [vmem:[#allocation14 + $0x6ec] sm:$0xff]
    %v3639 = vld [vmem:[#allocation14 + $0x6f4] sm:$0xff]
    %v3640 = vld [vmem:[#allocation14 + $0x6fc] sm:$0xf]
    %v3641 = vld [vmem:[%s13] sm:$0xff]
    %v3643 = vlaneseq
    %v3644 = vshrl.u32 %v3643, 7
    %v3645 = vsub.s32 0, %v3644
    %v3646 = vrot.slane %v3641, %v3645
    %v3647 = vlaneseq
    %v3648 = vshrl.u32 %v3647, 7
    %v3649 = vsub.s32 1, %v3648
    %v3650 = vrot.slane %v3641, %v3649
    %v3651 = vlaneseq
    %v3652 = vshrl.u32 %v3651, 7
    %v3653 = vsub.s32 2, %v3652
    %v3654 = vrot.slane %v3641, %v3653
    %v3655 = vlaneseq
    %v3656 = vshrl.u32 %v3655, 7
    %v3657 = vsub.s32 3, %v3656
    %v3658 = vrot.slane %v3641, %v3657
    %v3659 = vlaneseq
    %v3660 = vshrl.u32 %v3659, 7
    %v3661 = vsub.s32 4, %v3660
    %v3662 = vrot.slane %v3641, %v3661
    %v3663 = vlaneseq
    %v3664 = vshrl.u32 %v3663, 7
    %v3665 = vsub.s32 5, %v3664
    %v3666 = vrot.slane %v3641, %v3665
    %v3667 = vlaneseq
    %v3668 = vshrl.u32 %v3667, 7
    %v3669 = vsub.s32 6, %v3668
    %v3670 = vrot.slane %v3641, %v3669
    %v3934 = vunpack.c.l.b16 %v3385
    %v3935 = vunpack.c.h.b16 %v3385
    %v3936 = vunpack.c.l.b16 %v3386
    %v3937 = vunpack.c.h.b16 %v3386
    %v3938 = vunpack.c.l.b16 %v3387
    %v3939 = vunpack.c.h.b16 %v3387
    %v3940 = vunpack.c.l.b16 %v3388
    %v3941 = vunpack.c.l.b16 %v3389
    %v3942 = vunpack.c.h.b16 %v3389
    %v3943 = vunpack.c.l.b16 %v3390
    %v3944 = vunpack.c.h.b16 %v3390
    %v3945 = vunpack.c.l.b16 %v3391
    %v3946 = vunpack.c.h.b16 %v3391
    %v3947 = vunpack.c.l.b16 %v3392
    %v3948 = vunpack.c.l.b16 %v3393
    %v3949 = vunpack.c.h.b16 %v3393
    %v3950 = vunpack.c.l.b16 %v3394
    %v3951 = vunpack.c.h.b16 %v3394
    %v3952 = vunpack.c.l.b16 %v3395
    %v3953 = vunpack.c.h.b16 %v3395
    %v3954 = vunpack.c.l.b16 %v3396
    %v3955 = vunpack.c.l.b16 %v3397
    %v3956 = vunpack.c.h.b16 %v3397
    %v3957 = vunpack.c.l.b16 %v3398
    %v3958 = vunpack.c.h.b16 %v3398
    %v3959 = vunpack.c.l.b16 %v3399
    %v3960 = vunpack.c.h.b16 %v3399
    %v3961 = vunpack.c.l.b16 %v3400
    %v3962 = vunpack.c.l.b16 %v3401
    %v3963 = vunpack.c.h.b16 %v3401
    %v3964 = vunpack.c.l.b16 %v3402
    %v3965 = vunpack.c.h.b16 %v3402
    %v3966 = vunpack.c.l.b16 %v3403
    %v3967 = vunpack.c.h.b16 %v3403
    %v3968 = vunpack.c.l.b16 %v3404
    %v3969 = vunpack.c.l.b16 %v3405
    %v3970 = vunpack.c.h.b16 %v3405
    %v3971 = vunpack.c.l.b16 %v3406
    %v3972 = vunpack.c.h.b16 %v3406
    %v3973 = vunpack.c.l.b16 %v3407
    %v3974 = vunpack.c.h.b16 %v3407
    %v3975 = vunpack.c.l.b16 %v3408
    %v3976 = vunpack.c.l.b16 %v3409
    %v3977 = vunpack.c.h.b16 %v3409
    %v3978 = vunpack.c.l.b16 %v3410
    %v3979 = vunpack.c.h.b16 %v3410
    %v3980 = vunpack.c.l.b16 %v3411
    %v3981 = vunpack.c.h.b16 %v3411
    %v3982 = vunpack.c.l.b16 %v3412
    %v3983 = vunpack.c.l.b16 %v3413
    %v3984 = vunpack.c.h.b16 %v3413
    %v3985 = vunpack.c.l.b16 %v3414
    %v3986 = vunpack.c.h.b16 %v3414
    %v3987 = vunpack.c.l.b16 %v3415
    %v3988 = vunpack.c.h.b16 %v3415
    %v3989 = vunpack.c.l.b16 %v3416
    %v3990 = vunpack.c.l.b16 %v3417
    %v3991 = vunpack.c.h.b16 %v3417
    %v3992 = vunpack.c.l.b16 %v3418
    %v3993 = vunpack.c.h.b16 %v3418
    %v3994 = vunpack.c.l.b16 %v3419
    %v3995 = vunpack.c.h.b16 %v3419
    %v3996 = vunpack.c.l.b16 %v3420
    %v3997 = vunpack.c.l.b16 %v3421
    %v3998 = vunpack.c.h.b16 %v3421
    %v3999 = vunpack.c.l.b16 %v3422
    %v4000 = vunpack.c.h.b16 %v3422
    %v4001 = vunpack.c.l.b16 %v3423
    %v4002 = vunpack.c.h.b16 %v3423
    %v4003 = vunpack.c.l.b16 %v3424
    %v4004 = vunpack.c.l.b16 %v3425
    %v4005 = vunpack.c.h.b16 %v3425
    %v4006 = vunpack.c.l.b16 %v3426
    %v4007 = vunpack.c.h.b16 %v3426
    %v4008 = vunpack.c.l.b16 %v3427
    %v4009 = vunpack.c.h.b16 %v3427
    %v4010 = vunpack.c.l.b16 %v3428
    %v4011 = vunpack.c.l.b16 %v3429
    %v4012 = vunpack.c.h.b16 %v3429
    %v4013 = vunpack.c.l.b16 %v3430
    %v4014 = vunpack.c.h.b16 %v3430
    %v4015 = vunpack.c.l.b16 %v3431
    %v4016 = vunpack.c.h.b16 %v3431
    %v4017 = vunpack.c.l.b16 %v3432
    %v4018 = vunpack.c.l.b16 %v3433
    %v4019 = vunpack.c.h.b16 %v3433
    %v4020 = vunpack.c.l.b16 %v3434
    %v4021 = vunpack.c.h.b16 %v3434
    %v4022 = vunpack.c.l.b16 %v3435
    %v4023 = vunpack.c.h.b16 %v3435
    %v4024 = vunpack.c.l.b16 %v3436
    %v4025 = vunpack.c.l.b16 %v3437
    %v4026 = vunpack.c.h.b16 %v3437
    %v4027 = vunpack.c.l.b16 %v3438
    %v4028 = vunpack.c.h.b16 %v3438
    %v4029 = vunpack.c.l.b16 %v3439
    %v4030 = vunpack.c.h.b16 %v3439
    %v4031 = vunpack.c.l.b16 %v3440
    %v4032 = vunpack.c.l.b16 %v3441
    %v4033 = vunpack.c.h.b16 %v3441
    %v4034 = vunpack.c.l.b16 %v3442
    %v4035 = vunpack.c.h.b16 %v3442
    %v4036 = vunpack.c.l.b16 %v3443
    %v4037 = vunpack.c.h.b16 %v3443
    %v4038 = vunpack.c.l.b16 %v3444
    %v4039 = vunpack.c.l.b16 %v3445
    %v4040 = vunpack.c.h.b16 %v3445
    %v4041 = vunpack.c.l.b16 %v3446
    %v4042 = vunpack.c.h.b16 %v3446
    %v4043 = vunpack.c.l.b16 %v3447
    %v4044 = vunpack.c.h.b16 %v3447
    %v4045 = vunpack.c.l.b16 %v3448
    %v4046 = vunpack.c.l.b16 %v3449
    %v4047 = vunpack.c.h.b16 %v3449
    %v4048 = vunpack.c.l.b16 %v3450
    %v4049 = vunpack.c.h.b16 %v3450
    %v4050 = vunpack.c.l.b16 %v3451
    %v4051 = vunpack.c.h.b16 %v3451
    %v4052 = vunpack.c.l.b16 %v3452
    %v4053 = vunpack.c.l.b16 %v3453
    %v4054 = vunpack.c.h.b16 %v3453
    %v4055 = vunpack.c.l.b16 %v3454
    %v4056 = vunpack.c.h.b16 %v3454
    %v4057 = vunpack.c.l.b16 %v3455
    %v4058 = vunpack.c.h.b16 %v3455
    %v4059 = vunpack.c.l.b16 %v3456
    %v4060 = vunpack.c.l.b16 %v3457
    %v4061 = vunpack.c.h.b16 %v3457
    %v4062 = vunpack.c.l.b16 %v3458
    %v4063 = vunpack.c.h.b16 %v3458
    %v4064 = vunpack.c.l.b16 %v3459
    %v4065 = vunpack.c.h.b16 %v3459
    %v4066 = vunpack.c.l.b16 %v3460
    %v4067 = vunpack.c.l.b16 %v3461
    %v4068 = vunpack.c.h.b16 %v3461
    %v4069 = vunpack.c.l.b16 %v3462
    %v4070 = vunpack.c.h.b16 %v3462
    %v4071 = vunpack.c.l.b16 %v3463
    %v4072 = vunpack.c.h.b16 %v3463
    %v4073 = vunpack.c.l.b16 %v3464
    %v4074 = vunpack.c.l.b16 %v3465
    %v4075 = vunpack.c.h.b16 %v3465
    %v4076 = vunpack.c.l.b16 %v3466
    %v4077 = vunpack.c.h.b16 %v3466
    %v4078 = vunpack.c.l.b16 %v3467
    %v4079 = vunpack.c.h.b16 %v3467
    %v4080 = vunpack.c.l.b16 %v3468
    %v4081 = vunpack.c.l.b16 %v3469
    %v4082 = vunpack.c.h.b16 %v3469
    %v4083 = vunpack.c.l.b16 %v3470
    %v4084 = vunpack.c.h.b16 %v3470
    %v4085 = vunpack.c.l.b16 %v3471
    %v4086 = vunpack.c.h.b16 %v3471
    %v4087 = vunpack.c.l.b16 %v3472
    %v4088 = vunpack.c.l.b16 %v3473
    %v4089 = vunpack.c.h.b16 %v3473
    %v4090 = vunpack.c.l.b16 %v3474
    %v4091 = vunpack.c.h.b16 %v3474
    %v4092 = vunpack.c.l.b16 %v3475
    %v4093 = vunpack.c.h.b16 %v3475
    %v4094 = vunpack.c.l.b16 %v3476
    %v4095 = vunpack.c.l.b16 %v3477
    %v4096 = vunpack.c.h.b16 %v3477
    %v4097 = vunpack.c.l.b16 %v3478
    %v4098 = vunpack.c.h.b16 %v3478
    %v4099 = vunpack.c.l.b16 %v3479
    %v4100 = vunpack.c.h.b16 %v3479
    %v4101 = vunpack.c.l.b16 %v3480
    %v4102 = vunpack.c.l.b16 %v3481
    %v4103 = vunpack.c.h.b16 %v3481
    %v4104 = vunpack.c.l.b16 %v3482
    %v4105 = vunpack.c.h.b16 %v3482
    %v4106 = vunpack.c.l.b16 %v3483
    %v4107 = vunpack.c.h.b16 %v3483
    %v4108 = vunpack.c.l.b16 %v3484
    %v4109 = vunpack.c.l.b16 %v3485
    %v4110 = vunpack.c.h.b16 %v3485
    %v4111 = vunpack.c.l.b16 %v3486
    %v4112 = vunpack.c.h.b16 %v3486
    %v4113 = vunpack.c.l.b16 %v3487
    %v4114 = vunpack.c.h.b16 %v3487
    %v4115 = vunpack.c.l.b16 %v3488
    %v4116 = vunpack.c.l.b16 %v3489
    %v4117 = vunpack.c.h.b16 %v3489
    %v4118 = vunpack.c.l.b16 %v3490
    %v4119 = vunpack.c.h.b16 %v3490
    %v4120 = vunpack.c.l.b16 %v3491
    %v4121 = vunpack.c.h.b16 %v3491
    %v4122 = vunpack.c.l.b16 %v3492
    %v4123 = vunpack.c.l.b16 %v3493
    %v4124 = vunpack.c.h.b16 %v3493
    %v4125 = vunpack.c.l.b16 %v3494
    %v4126 = vunpack.c.h.b16 %v3494
    %v4127 = vunpack.c.l.b16 %v3495
    %v4128 = vunpack.c.h.b16 %v3495
    %v4129 = vunpack.c.l.b16 %v3496
    %v4130 = vunpack.c.l.b16 %v3497
    %v4131 = vunpack.c.h.b16 %v3497
    %v4132 = vunpack.c.l.b16 %v3498
    %v4133 = vunpack.c.h.b16 %v3498
    %v4134 = vunpack.c.l.b16 %v3499
    %v4135 = vunpack.c.h.b16 %v3499
    %v4136 = vunpack.c.l.b16 %v3500
    %v4137 = vunpack.c.l.b16 %v3501
    %v4138 = vunpack.c.h.b16 %v3501
    %v4139 = vunpack.c.l.b16 %v3502
    %v4140 = vunpack.c.h.b16 %v3502
    %v4141 = vunpack.c.l.b16 %v3503
    %v4142 = vunpack.c.h.b16 %v3503
    %v4143 = vunpack.c.l.b16 %v3504
    %v4144 = vunpack.c.l.b16 %v3505
    %v4145 = vunpack.c.h.b16 %v3505
    %v4146 = vunpack.c.l.b16 %v3506
    %v4147 = vunpack.c.h.b16 %v3506
    %v4148 = vunpack.c.l.b16 %v3507
    %v4149 = vunpack.c.h.b16 %v3507
    %v4150 = vunpack.c.l.b16 %v3508
    %v4151 = vunpack.c.l.b16 %v3509
    %v4152 = vunpack.c.h.b16 %v3509
    %v4153 = vunpack.c.l.b16 %v3510
    %v4154 = vunpack.c.h.b16 %v3510
    %v4155 = vunpack.c.l.b16 %v3511
    %v4156 = vunpack.c.h.b16 %v3511
    %v4157 = vunpack.c.l.b16 %v3512
    %v4158 = vunpack.c.l.b16 %v3513
    %v4159 = vunpack.c.h.b16 %v3513
    %v4160 = vunpack.c.l.b16 %v3514
    %v4161 = vunpack.c.h.b16 %v3514
    %v4162 = vunpack.c.l.b16 %v3515
    %v4163 = vunpack.c.h.b16 %v3515
    %v4164 = vunpack.c.l.b16 %v3516
    %v4165 = vunpack.c.l.b16 %v3517
    %v4166 = vunpack.c.h.b16 %v3517
    %v4167 = vunpack.c.l.b16 %v3518
    %v4168 = vunpack.c.h.b16 %v3518
    %v4169 = vunpack.c.l.b16 %v3519
    %v4170 = vunpack.c.h.b16 %v3519
    %v4171 = vunpack.c.l.b16 %v3520
    %v4172 = vunpack.c.l.b16 %v3521
    %v4173 = vunpack.c.h.b16 %v3521
    %v4174 = vunpack.c.l.b16 %v3522
    %v4175 = vunpack.c.h.b16 %v3522
    %v4176 = vunpack.c.l.b16 %v3523
    %v4177 = vunpack.c.h.b16 %v3523
    %v4178 = vunpack.c.l.b16 %v3524
    %v4179 = vunpack.c.l.b16 %v3525
    %v4180 = vunpack.c.h.b16 %v3525
    %v4181 = vunpack.c.l.b16 %v3526
    %v4182 = vunpack.c.h.b16 %v3526
    %v4183 = vunpack.c.l.b16 %v3527
    %v4184 = vunpack.c.h.b16 %v3527
    %v4185 = vunpack.c.l.b16 %v3528
    %v4186 = vunpack.c.l.b16 %v3529
    %v4187 = vunpack.c.h.b16 %v3529
    %v4188 = vunpack.c.l.b16 %v3530
    %v4189 = vunpack.c.h.b16 %v3530
    %v4190 = vunpack.c.l.b16 %v3531
    %v4191 = vunpack.c.h.b16 %v3531
    %v4192 = vunpack.c.l.b16 %v3532
    %v4193 = vunpack.c.l.b16 %v3533
    %v4194 = vunpack.c.h.b16 %v3533
    %v4195 = vunpack.c.l.b16 %v3534
    %v4196 = vunpack.c.h.b16 %v3534
    %v4197 = vunpack.c.l.b16 %v3535
    %v4198 = vunpack.c.h.b16 %v3535
    %v4199 = vunpack.c.l.b16 %v3536
    %v4200 = vunpack.c.l.b16 %v3537
    %v4201 = vunpack.c.h.b16 %v3537
    %v4202 = vunpack.c.l.b16 %v3538
    %v4203 = vunpack.c.h.b16 %v3538
    %v4204 = vunpack.c.l.b16 %v3539
    %v4205 = vunpack.c.h.b16 %v3539
    %v4206 = vunpack.c.l.b16 %v3540
    %v4207 = vunpack.c.l.b16 %v3541
    %v4208 = vunpack.c.h.b16 %v3541
    %v4209 = vunpack.c.l.b16 %v3542
    %v4210 = vunpack.c.h.b16 %v3542
    %v4211 = vunpack.c.l.b16 %v3543
    %v4212 = vunpack.c.h.b16 %v3543
    %v4213 = vunpack.c.l.b16 %v3544
    %v4214 = vunpack.c.l.b16 %v3545
    %v4215 = vunpack.c.h.b16 %v3545
    %v4216 = vunpack.c.l.b16 %v3546
    %v4217 = vunpack.c.h.b16 %v3546
    %v4218 = vunpack.c.l.b16 %v3547
    %v4219 = vunpack.c.h.b16 %v3547
    %v4220 = vunpack.c.l.b16 %v3548
    %v4221 = vunpack.c.l.b16 %v3549
    %v4222 = vunpack.c.h.b16 %v3549
    %v4223 = vunpack.c.l.b16 %v3550
    %v4224 = vunpack.c.h.b16 %v3550
    %v4225 = vunpack.c.l.b16 %v3551
    %v4226 = vunpack.c.h.b16 %v3551
    %v4227 = vunpack.c.l.b16 %v3552
    %v4228 = vunpack.c.l.b16 %v3553
    %v4229 = vunpack.c.h.b16 %v3553
    %v4230 = vunpack.c.l.b16 %v3554
    %v4231 = vunpack.c.h.b16 %v3554
    %v4232 = vunpack.c.l.b16 %v3555
    %v4233 = vunpack.c.h.b16 %v3555
    %v4234 = vunpack.c.l.b16 %v3556
    %v4235 = vunpack.c.l.b16 %v3557
    %v4236 = vunpack.c.h.b16 %v3557
    %v4237 = vunpack.c.l.b16 %v3558
    %v4238 = vunpack.c.h.b16 %v3558
    %v4239 = vunpack.c.l.b16 %v3559
    %v4240 = vunpack.c.h.b16 %v3559
    %v4241 = vunpack.c.l.b16 %v3560
    %v4242 = vunpack.c.l.b16 %v3561
    %v4243 = vunpack.c.h.b16 %v3561
    %v4244 = vunpack.c.l.b16 %v3562
    %v4245 = vunpack.c.h.b16 %v3562
    %v4246 = vunpack.c.l.b16 %v3563
    %v4247 = vunpack.c.h.b16 %v3563
    %v4248 = vunpack.c.l.b16 %v3564
    %v4249 = vunpack.c.l.b16 %v3565
    %v4250 = vunpack.c.h.b16 %v3565
    %v4251 = vunpack.c.l.b16 %v3566
    %v4252 = vunpack.c.h.b16 %v3566
    %v4253 = vunpack.c.l.b16 %v3567
    %v4254 = vunpack.c.h.b16 %v3567
    %v4255 = vunpack.c.l.b16 %v3568
    %v4256 = vunpack.c.l.b16 %v3569
    %v4257 = vunpack.c.h.b16 %v3569
    %v4258 = vunpack.c.l.b16 %v3570
    %v4259 = vunpack.c.h.b16 %v3570
    %v4260 = vunpack.c.l.b16 %v3571
    %v4261 = vunpack.c.h.b16 %v3571
    %v4262 = vunpack.c.l.b16 %v3572
    %v4263 = vunpack.c.l.b16 %v3573
    %v4264 = vunpack.c.h.b16 %v3573
    %v4265 = vunpack.c.l.b16 %v3574
    %v4266 = vunpack.c.h.b16 %v3574
    %v4267 = vunpack.c.l.b16 %v3575
    %v4268 = vunpack.c.h.b16 %v3575
    %v4269 = vunpack.c.l.b16 %v3576
    %v4270 = vunpack.c.l.b16 %v3577
    %v4271 = vunpack.c.h.b16 %v3577
    %v4272 = vunpack.c.l.b16 %v3578
    %v4273 = vunpack.c.h.b16 %v3578
    %v4274 = vunpack.c.l.b16 %v3579
    %v4275 = vunpack.c.h.b16 %v3579
    %v4276 = vunpack.c.l.b16 %v3580
    %v4277 = vunpack.c.l.b16 %v3581
    %v4278 = vunpack.c.h.b16 %v3581
    %v4279 = vunpack.c.l.b16 %v3582
    %v4280 = vunpack.c.h.b16 %v3582
    %v4281 = vunpack.c.l.b16 %v3583
    %v4282 = vunpack.c.h.b16 %v3583
    %v4283 = vunpack.c.l.b16 %v3584
    %v4284 = vunpack.c.l.b16 %v3585
    %v4285 = vunpack.c.h.b16 %v3585
    %v4286 = vunpack.c.l.b16 %v3586
    %v4287 = vunpack.c.h.b16 %v3586
    %v4288 = vunpack.c.l.b16 %v3587
    %v4289 = vunpack.c.h.b16 %v3587
    %v4290 = vunpack.c.l.b16 %v3588
    %v4291 = vunpack.c.l.b16 %v3589
    %v4292 = vunpack.c.h.b16 %v3589
    %v4293 = vunpack.c.l.b16 %v3590
    %v4294 = vunpack.c.h.b16 %v3590
    %v4295 = vunpack.c.l.b16 %v3591
    %v4296 = vunpack.c.h.b16 %v3591
    %v4297 = vunpack.c.l.b16 %v3592
    %v4298 = vunpack.c.l.b16 %v3593
    %v4299 = vunpack.c.h.b16 %v3593
    %v4300 = vunpack.c.l.b16 %v3594
    %v4301 = vunpack.c.h.b16 %v3594
    %v4302 = vunpack.c.l.b16 %v3595
    %v4303 = vunpack.c.h.b16 %v3595
    %v4304 = vunpack.c.l.b16 %v3596
    %v4305 = vunpack.c.l.b16 %v3597
    %v4306 = vunpack.c.h.b16 %v3597
    %v4307 = vunpack.c.l.b16 %v3598
    %v4308 = vunpack.c.h.b16 %v3598
    %v4309 = vunpack.c.l.b16 %v3599
    %v4310 = vunpack.c.h.b16 %v3599
    %v4311 = vunpack.c.l.b16 %v3600
    %v4312 = vunpack.c.l.b16 %v3601
    %v4313 = vunpack.c.h.b16 %v3601
    %v4314 = vunpack.c.l.b16 %v3602
    %v4315 = vunpack.c.h.b16 %v3602
    %v4316 = vunpack.c.l.b16 %v3603
    %v4317 = vunpack.c.h.b16 %v3603
    %v4318 = vunpack.c.l.b16 %v3604
    %v4319 = vunpack.c.l.b16 %v3605
    %v4320 = vunpack.c.h.b16 %v3605
    %v4321 = vunpack.c.l.b16 %v3606
    %v4322 = vunpack.c.h.b16 %v3606
    %v4323 = vunpack.c.l.b16 %v3607
    %v4324 = vunpack.c.h.b16 %v3607
    %v4325 = vunpack.c.l.b16 %v3608
    %v4326 = vunpack.c.l.b16 %v3609
    %v4327 = vunpack.c.h.b16 %v3609
    %v4328 = vunpack.c.l.b16 %v3610
    %v4329 = vunpack.c.h.b16 %v3610
    %v4330 = vunpack.c.l.b16 %v3611
    %v4331 = vunpack.c.h.b16 %v3611
    %v4332 = vunpack.c.l.b16 %v3612
    %v4333 = vunpack.c.l.b16 %v3613
    %v4334 = vunpack.c.h.b16 %v3613
    %v4335 = vunpack.c.l.b16 %v3614
    %v4336 = vunpack.c.h.b16 %v3614
    %v4337 = vunpack.c.l.b16 %v3615
    %v4338 = vunpack.c.h.b16 %v3615
    %v4339 = vunpack.c.l.b16 %v3616
    %v4340 = vunpack.c.l.b16 %v3617
    %v4341 = vunpack.c.h.b16 %v3617
    %v4342 = vunpack.c.l.b16 %v3618
    %v4343 = vunpack.c.h.b16 %v3618
    %v4344 = vunpack.c.l.b16 %v3619
    %v4345 = vunpack.c.h.b16 %v3619
    %v4346 = vunpack.c.l.b16 %v3620
    %v4347 = vunpack.c.l.b16 %v3621
    %v4348 = vunpack.c.h.b16 %v3621
    %v4349 = vunpack.c.l.b16 %v3622
    %v4350 = vunpack.c.h.b16 %v3622
    %v4351 = vunpack.c.l.b16 %v3623
    %v4352 = vunpack.c.h.b16 %v3623
    %v4353 = vunpack.c.l.b16 %v3624
    %v4354 = vunpack.c.l.b16 %v3625
    %v4355 = vunpack.c.h.b16 %v3625
    %v4356 = vunpack.c.l.b16 %v3626
    %v4357 = vunpack.c.h.b16 %v3626
    %v4358 = vunpack.c.l.b16 %v3627
    %v4359 = vunpack.c.h.b16 %v3627
    %v4360 = vunpack.c.l.b16 %v3628
    %v4361 = vunpack.c.l.b16 %v3629
    %v4362 = vunpack.c.h.b16 %v3629
    %v4363 = vunpack.c.l.b16 %v3630
    %v4364 = vunpack.c.h.b16 %v3630
    %v4365 = vunpack.c.l.b16 %v3631
    %v4366 = vunpack.c.h.b16 %v3631
    %v4367 = vunpack.c.l.b16 %v3632
    %v4368 = vunpack.c.l.b16 %v3633
    %v4369 = vunpack.c.h.b16 %v3633
    %v4370 = vunpack.c.l.b16 %v3634
    %v4371 = vunpack.c.h.b16 %v3634
    %v4372 = vunpack.c.l.b16 %v3635
    %v4373 = vunpack.c.h.b16 %v3635
    %v4374 = vunpack.c.l.b16 %v3636
    %v4375 = vunpack.c.l.b16 %v3637
    %v4376 = vunpack.c.h.b16 %v3637
    %v4377 = vunpack.c.l.b16 %v3638
    %v4378 = vunpack.c.h.b16 %v3638
    %v4379 = vunpack.c.l.b16 %v3639
    %v4380 = vunpack.c.h.b16 %v3639
    %v4381 = vunpack.c.l.b16 %v3640
    %v4382 = vpack.c.b16 %v3941, %v3934
    %v4383 = vpack.c.b16 %v3942, %v3935
    %v4384 = vpack.c.b16 %v3943, %v3936
    %v4385 = vpack.c.b16 %v3944, %v3937
    %v4386 = vpack.c.b16 %v3945, %v3938
    %v4387 = vpack.c.b16 %v3946, %v3939
    %v4388 = vpack.c.b16 %v3947, %v3940
    %v4389 = vpack.c.b16 %v3955, %v3948
    %v4390 = vpack.c.b16 %v3956, %v3949
    %v4391 = vpack.c.b16 %v3957, %v3950
    %v4392 = vpack.c.b16 %v3958, %v3951
    %v4393 = vpack.c.b16 %v3959, %v3952
    %v4394 = vpack.c.b16 %v3960, %v3953
    %v4395 = vpack.c.b16 %v3961, %v3954
    %v4396 = vpack.c.b16 %v3969, %v3962
    %v4397 = vpack.c.b16 %v3970, %v3963
    %v4398 = vpack.c.b16 %v3971, %v3964
    %v4399 = vpack.c.b16 %v3972, %v3965
    %v4400 = vpack.c.b16 %v3973, %v3966
    %v4401 = vpack.c.b16 %v3974, %v3967
    %v4402 = vpack.c.b16 %v3975, %v3968
    %v4403 = vpack.c.b16 %v3983, %v3976
    %v4404 = vpack.c.b16 %v3984, %v3977
    %v4405 = vpack.c.b16 %v3985, %v3978
    %v4406 = vpack.c.b16 %v3986, %v3979
    %v4407 = vpack.c.b16 %v3987, %v3980
    %v4408 = vpack.c.b16 %v3988, %v3981
    %v4409 = vpack.c.b16 %v3989, %v3982
    %v4410 = vpack.c.b16 %v3997, %v3990
    %v4411 = vpack.c.b16 %v3998, %v3991
    %v4412 = vpack.c.b16 %v3999, %v3992
    %v4413 = vpack.c.b16 %v4000, %v3993
    %v4414 = vpack.c.b16 %v4001, %v3994
    %v4415 = vpack.c.b16 %v4002, %v3995
    %v4416 = vpack.c.b16 %v4003, %v3996
    %v4417 = vpack.c.b16 %v4011, %v4004
    %v4418 = vpack.c.b16 %v4012, %v4005
    %v4419 = vpack.c.b16 %v4013, %v4006
    %v4420 = vpack.c.b16 %v4014, %v4007
    %v4421 = vpack.c.b16 %v4015, %v4008
    %v4422 = vpack.c.b16 %v4016, %v4009
    %v4423 = vpack.c.b16 %v4017, %v4010
    %v4424 = vpack.c.b16 %v4025, %v4018
    %v4425 = vpack.c.b16 %v4026, %v4019
    %v4426 = vpack.c.b16 %v4027, %v4020
    %v4427 = vpack.c.b16 %v4028, %v4021
    %v4428 = vpack.c.b16 %v4029, %v4022
    %v4429 = vpack.c.b16 %v4030, %v4023
    %v4430 = vpack.c.b16 %v4031, %v4024
    %v4431 = vpack.c.b16 %v4039, %v4032
    %v4432 = vpack.c.b16 %v4040, %v4033
    %v4433 = vpack.c.b16 %v4041, %v4034
    %v4434 = vpack.c.b16 %v4042, %v4035
    %v4435 = vpack.c.b16 %v4043, %v4036
    %v4436 = vpack.c.b16 %v4044, %v4037
    %v4437 = vpack.c.b16 %v4045, %v4038
    %v4438 = vpack.c.b16 %v4053, %v4046
    %v4439 = vpack.c.b16 %v4054, %v4047
    %v4440 = vpack.c.b16 %v4055, %v4048
    %v4441 = vpack.c.b16 %v4056, %v4049
    %v4442 = vpack.c.b16 %v4057, %v4050
    %v4443 = vpack.c.b16 %v4058, %v4051
    %v4444 = vpack.c.b16 %v4059, %v4052
    %v4445 = vpack.c.b16 %v4067, %v4060
    %v4446 = vpack.c.b16 %v4068, %v4061
    %v4447 = vpack.c.b16 %v4069, %v4062
    %v4448 = vpack.c.b16 %v4070, %v4063
    %v4449 = vpack.c.b16 %v4071, %v4064
    %v4450 = vpack.c.b16 %v4072, %v4065
    %v4451 = vpack.c.b16 %v4073, %v4066
    %v4452 = vpack.c.b16 %v4081, %v4074
    %v4453 = vpack.c.b16 %v4082, %v4075
    %v4454 = vpack.c.b16 %v4083, %v4076
    %v4455 = vpack.c.b16 %v4084, %v4077
    %v4456 = vpack.c.b16 %v4085, %v4078
    %v4457 = vpack.c.b16 %v4086, %v4079
    %v4458 = vpack.c.b16 %v4087, %v4080
    %v4459 = vpack.c.b16 %v4095, %v4088
    %v4460 = vpack.c.b16 %v4096, %v4089
    %v4461 = vpack.c.b16 %v4097, %v4090
    %v4462 = vpack.c.b16 %v4098, %v4091
    %v4463 = vpack.c.b16 %v4099, %v4092
    %v4464 = vpack.c.b16 %v4100, %v4093
    %v4465 = vpack.c.b16 %v4101, %v4094
    %v4466 = vpack.c.b16 %v4109, %v4102
    %v4467 = vpack.c.b16 %v4110, %v4103
    %v4468 = vpack.c.b16 %v4111, %v4104
    %v4469 = vpack.c.b16 %v4112, %v4105
    %v4470 = vpack.c.b16 %v4113, %v4106
    %v4471 = vpack.c.b16 %v4114, %v4107
    %v4472 = vpack.c.b16 %v4115, %v4108
    %v4473 = vpack.c.b16 %v4123, %v4116
    %v4474 = vpack.c.b16 %v4124, %v4117
    %v4475 = vpack.c.b16 %v4125, %v4118
    %v4476 = vpack.c.b16 %v4126, %v4119
    %v4477 = vpack.c.b16 %v4127, %v4120
    %v4478 = vpack.c.b16 %v4128, %v4121
    %v4479 = vpack.c.b16 %v4129, %v4122
    %v4480 = vpack.c.b16 %v4137, %v4130
    %v4481 = vpack.c.b16 %v4138, %v4131
    %v4482 = vpack.c.b16 %v4139, %v4132
    %v4483 = vpack.c.b16 %v4140, %v4133
    %v4484 = vpack.c.b16 %v4141, %v4134
    %v4485 = vpack.c.b16 %v4142, %v4135
    %v4486 = vpack.c.b16 %v4143, %v4136
    %v4487 = vpack.c.b16 %v4151, %v4144
    %v4488 = vpack.c.b16 %v4152, %v4145
    %v4489 = vpack.c.b16 %v4153, %v4146
    %v4490 = vpack.c.b16 %v4154, %v4147
    %v4491 = vpack.c.b16 %v4155, %v4148
    %v4492 = vpack.c.b16 %v4156, %v4149
    %v4493 = vpack.c.b16 %v4157, %v4150
    %v4494 = vpack.c.b16 %v4165, %v4158
    %v4495 = vpack.c.b16 %v4166, %v4159
    %v4496 = vpack.c.b16 %v4167, %v4160
    %v4497 = vpack.c.b16 %v4168, %v4161
    %v4498 = vpack.c.b16 %v4169, %v4162
    %v4499 = vpack.c.b16 %v4170, %v4163
    %v4500 = vpack.c.b16 %v4171, %v4164
    %v4501 = vpack.c.b16 %v4179, %v4172
    %v4502 = vpack.c.b16 %v4180, %v4173
    %v4503 = vpack.c.b16 %v4181, %v4174
    %v4504 = vpack.c.b16 %v4182, %v4175
    %v4505 = vpack.c.b16 %v4183, %v4176
    %v4506 = vpack.c.b16 %v4184, %v4177
    %v4507 = vpack.c.b16 %v4185, %v4178
    %v4508 = vpack.c.b16 %v4193, %v4186
    %v4509 = vpack.c.b16 %v4194, %v4187
    %v4510 = vpack.c.b16 %v4195, %v4188
    %v4511 = vpack.c.b16 %v4196, %v4189
    %v4512 = vpack.c.b16 %v4197, %v4190
    %v4513 = vpack.c.b16 %v4198, %v4191
    %v4514 = vpack.c.b16 %v4199, %v4192
    %v4515 = vpack.c.b16 %v4207, %v4200
    %v4516 = vpack.c.b16 %v4208, %v4201
    %v4517 = vpack.c.b16 %v4209, %v4202
    %v4518 = vpack.c.b16 %v4210, %v4203
    %v4519 = vpack.c.b16 %v4211, %v4204
    %v4520 = vpack.c.b16 %v4212, %v4205
    %v4521 = vpack.c.b16 %v4213, %v4206
    %v4522 = vpack.c.b16 %v4221, %v4214
    %v4523 = vpack.c.b16 %v4222, %v4215
    %v4524 = vpack.c.b16 %v4223, %v4216
    %v4525 = vpack.c.b16 %v4224, %v4217
    %v4526 = vpack.c.b16 %v4225, %v4218
    %v4527 = vpack.c.b16 %v4226, %v4219
    %v4528 = vpack.c.b16 %v4227, %v4220
    %v4529 = vpack.c.b16 %v4235, %v4228
    %v4530 = vpack.c.b16 %v4236, %v4229
    %v4531 = vpack.c.b16 %v4237, %v4230
    %v4532 = vpack.c.b16 %v4238, %v4231
    %v4533 = vpack.c.b16 %v4239, %v4232
    %v4534 = vpack.c.b16 %v4240, %v4233
    %v4535 = vpack.c.b16 %v4241, %v4234
    %v4536 = vpack.c.b16 %v4249, %v4242
    %v4537 = vpack.c.b16 %v4250, %v4243
    %v4538 = vpack.c.b16 %v4251, %v4244
    %v4539 = vpack.c.b16 %v4252, %v4245
    %v4540 = vpack.c.b16 %v4253, %v4246
    %v4541 = vpack.c.b16 %v4254, %v4247
    %v4542 = vpack.c.b16 %v4255, %v4248
    %v4543 = vpack.c.b16 %v4263, %v4256
    %v4544 = vpack.c.b16 %v4264, %v4257
    %v4545 = vpack.c.b16 %v4265, %v4258
    %v4546 = vpack.c.b16 %v4266, %v4259
    %v4547 = vpack.c.b16 %v4267, %v4260
    %v4548 = vpack.c.b16 %v4268, %v4261
    %v4549 = vpack.c.b16 %v4269, %v4262
    %v4550 = vpack.c.b16 %v4277, %v4270
    %v4551 = vpack.c.b16 %v4278, %v4271
    %v4552 = vpack.c.b16 %v4279, %v4272
    %v4553 = vpack.c.b16 %v4280, %v4273
    %v4554 = vpack.c.b16 %v4281, %v4274
    %v4555 = vpack.c.b16 %v4282, %v4275
    %v4556 = vpack.c.b16 %v4283, %v4276
    %v4557 = vpack.c.b16 %v4291, %v4284
    %v4558 = vpack.c.b16 %v4292, %v4285
    %v4559 = vpack.c.b16 %v4293, %v4286
    %v4560 = vpack.c.b16 %v4294, %v4287
    %v4561 = vpack.c.b16 %v4295, %v4288
    %v4562 = vpack.c.b16 %v4296, %v4289
    %v4563 = vpack.c.b16 %v4297, %v4290
    %v4564 = vpack.c.b16 %v4305, %v4298
    %v4565 = vpack.c.b16 %v4306, %v4299
    %v4566 = vpack.c.b16 %v4307, %v4300
    %v4567 = vpack.c.b16 %v4308, %v4301
    %v4568 = vpack.c.b16 %v4309, %v4302
    %v4569 = vpack.c.b16 %v4310, %v4303
    %v4570 = vpack.c.b16 %v4311, %v4304
    %v4571 = vpack.c.b16 %v4319, %v4312
    %v4572 = vpack.c.b16 %v4320, %v4313
    %v4573 = vpack.c.b16 %v4321, %v4314
    %v4574 = vpack.c.b16 %v4322, %v4315
    %v4575 = vpack.c.b16 %v4323, %v4316
    %v4576 = vpack.c.b16 %v4324, %v4317
    %v4577 = vpack.c.b16 %v4325, %v4318
    %v4578 = vpack.c.b16 %v4333, %v4326
    %v4579 = vpack.c.b16 %v4334, %v4327
    %v4580 = vpack.c.b16 %v4335, %v4328
    %v4581 = vpack.c.b16 %v4336, %v4329
    %v4582 = vpack.c.b16 %v4337, %v4330
    %v4583 = vpack.c.b16 %v4338, %v4331
    %v4584 = vpack.c.b16 %v4339, %v4332
    %v4585 = vpack.c.b16 %v4347, %v4340
    %v4586 = vpack.c.b16 %v4348, %v4341
    %v4587 = vpack.c.b16 %v4349, %v4342
    %v4588 = vpack.c.b16 %v4350, %v4343
    %v4589 = vpack.c.b16 %v4351, %v4344
    %v4590 = vpack.c.b16 %v4352, %v4345
    %v4591 = vpack.c.b16 %v4353, %v4346
    %v4592 = vpack.c.b16 %v4361, %v4354
    %v4593 = vpack.c.b16 %v4362, %v4355
    %v4594 = vpack.c.b16 %v4363, %v4356
    %v4595 = vpack.c.b16 %v4364, %v4357
    %v4596 = vpack.c.b16 %v4365, %v4358
    %v4597 = vpack.c.b16 %v4366, %v4359
    %v4598 = vpack.c.b16 %v4367, %v4360
    %v4599 = vpack.c.b16 %v4375, %v4368
    %v4600 = vpack.c.b16 %v4376, %v4369
    %v4601 = vpack.c.b16 %v4377, %v4370
    %v4602 = vpack.c.b16 %v4378, %v4371
    %v4603 = vpack.c.b16 %v4379, %v4372
    %v4604 = vpack.c.b16 %v4380, %v4373
    %v4605 = vpack.c.b16 %v4381, %v4374
    %4830 = vmatprep.subr.bf16.mxu0 %v4383
    %4831 = vmatpush1.bf16.msra.mxu0 %v4382
    %4832 = vmatprep.subr.bf16.mxu0 %v4390
    %4833 = vmatpush1.bf16.msra.mxu0 %v4389
    %4834 = vmatprep.subr.bf16.mxu0 %v4397
    %4835 = vmatpush1.bf16.msra.mxu0 %v4396
    %4836 = vmatprep.subr.bf16.mxu0 %v4404
    %4837 = vmatpush1.bf16.msra.mxu0 %v4403
    %4838 = vmatprep.subr.bf16.mxu0 %v4411
    %4839 = vmatpush1.bf16.msra.mxu0 %v4410
    %4840 = vmatprep.subr.bf16.mxu0 %v4418
    %4841 = vmatpush1.bf16.msra.mxu0 %v4417
    %4842 = vmatprep.subr.bf16.mxu0 %v4425
    %4843 = vmatpush1.bf16.msra.mxu0 %v4424
    %4844 = vmatprep.subr.bf16.mxu0 %v4432
    %4845 = vmatpush1.bf16.msra.mxu0 %v4431
    %4846 = vmatprep.subr.bf16.mxu0 %v4439
    %4847 = vmatpush1.bf16.msra.mxu0 %v4438
    %4848 = vmatprep.subr.bf16.mxu0 %v4446
    %4849 = vmatpush1.bf16.msra.mxu0 %v4445
    %4850 = vmatprep.subr.bf16.mxu0 %v4453
    %4851 = vmatpush1.bf16.msra.mxu0 %v4452
    %4852 = vmatprep.subr.bf16.mxu0 %v4460
    %4853 = vmatpush1.bf16.msra.mxu0 %v4459
    %4854 = vmatprep.subr.bf16.mxu0 %v4467
    %4855 = vmatpush1.bf16.msra.mxu0 %v4466
    %4856 = vmatprep.subr.bf16.mxu0 %v4474
    %4857 = vmatpush1.bf16.msra.mxu0 %v4473
    %4858 = vmatprep.subr.bf16.mxu0 %v4481
    %4859 = vmatpush1.bf16.msra.mxu0 %v4480
    %4860 = vmatprep.subr.bf16.mxu0 %v4488
    %4861 = vmatpush1.bf16.msra.mxu0 %v4487
    %4862 = vmatprep.mubr.bf16.mxu0 %v3382
    %4863 = vmatmul.mubr.bf16.gmra.mrb[0].mxu0 %v3381
    %v4864 = vpop.f32.mrb[0].mxu0
    %v4865 = vadd.f32 %v3646, %v4864
    %v4866 = vpop.f32.mrb[0].mxu0
    %v4867 = vadd.f32 %v3650, %v4866
    %v4868 = vpop.f32.mrb[0].mxu0
    %v4869 = vadd.f32 %v3646, %v4868
    %v4870 = vpop.f32.mrb[0].mxu0
    %v4871 = vadd.f32 %v3650, %v4870
    %4872 = vdwg.mxu0
    %4873 = vmatprep.subr.bf16.mxu0 %v4495
    %4874 = vmatpush1.bf16.msra.mxu0 %v4494
    %4875 = vmatprep.subr.bf16.mxu0 %v4502
    %4876 = vmatpush1.bf16.msra.mxu0 %v4501
    %4877 = vmatprep.subr.bf16.mxu0 %v4509
    %4878 = vmatpush1.bf16.msra.mxu0 %v4508
    %4879 = vmatprep.subr.bf16.mxu0 %v4516
    %4880 = vmatpush1.bf16.msra.mxu0 %v4515
    %4881 = vmatprep.subr.bf16.mxu0 %v4523
    %4882 = vmatpush1.bf16.msra.mxu0 %v4522
    %4883 = vmatprep.subr.bf16.mxu0 %v4530
    %4884 = vmatpush1.bf16.msra.mxu0 %v4529
    %4885 = vmatprep.subr.bf16.mxu0 %v4537
    %4886 = vmatpush1.bf16.msra.mxu0 %v4536
    %4887 = vmatprep.subr.bf16.mxu0 %v4544
    %4888 = vmatpush1.bf16.msra.mxu0 %v4543
    %4889 = vmatprep.subr.bf16.mxu0 %v4551
    %4890 = vmatpush1.bf16.msra.mxu0 %v4550
    %4891 = vmatprep.subr.bf16.mxu0 %v4558
    %4892 = vmatpush1.bf16.msra.mxu0 %v4557
    %4893 = vmatprep.subr.bf16.mxu0 %v4565
    %4894 = vmatpush1.bf16.msra.mxu0 %v4564
    %4895 = vmatprep.subr.bf16.mxu0 %v4572
    %4896 = vmatpush1.bf16.msra.mxu0 %v4571
    %4897 = vmatprep.subr.bf16.mxu0 %v4579
    %4898 = vmatpush1.bf16.msra.mxu0 %v4578
    %4899 = vmatprep.subr.bf16.mxu0 %v4586
    %4900 = vmatpush1.bf16.msra.mxu0 %v4585
    %4901 = vmatprep.subr.bf16.mxu0 %v4593
    %4902 = vmatpush1.bf16.msra.mxu0 %v4592
    %4903 = vmatprep.subr.bf16.mxu0 %v4600
    %4904 = vmatpush1.bf16.msra.mxu0 %v4599
    %4905 = vmatprep.mubr.bf16.mxu0 %v3384
    %4906 = vmatmul.mubr.bf16.gmra.mrb[0].mxu0 %v3383
    %v4907 = vpop.f32.mrb[0].mxu0
    %v4908 = vadd.f32 %v4865, %v4907
    %v4909 = vpop.f32.mrb[0].mxu0
    %v4910 = vadd.f32 %v4867, %v4909
    %v4911 = vpop.f32.mrb[0].mxu0
    %v4912 = vadd.f32 %v4869, %v4911
    %v4913 = vpop.f32.mrb[0].mxu0
    %v4914 = vadd.f32 %v4871, %v4913
    %4915 = vdwg.mxu0
    %4916 = vmatprep.subr.bf16.mxu0 %v4385
    %4917 = vmatpush1.bf16.msra.mxu0 %v4384
    %4918 = vmatprep.subr.bf16.mxu0 %v4392
    %4919 = vmatpush1.bf16.msra.mxu0 %v4391
    %4920 = vmatprep.subr.bf16.mxu0 %v4399
    %4921 = vmatpush1.bf16.msra.mxu0 %v4398
    %4922 = vmatprep.subr.bf16.mxu0 %v4406
    %4923 = vmatpush1.bf16.msra.mxu0 %v4405
    %4924 = vmatprep.subr.bf16.mxu0 %v4413
    %4925 = vmatpush1.bf16.msra.mxu0 %v4412
    %4926 = vmatprep.subr.bf16.mxu0 %v4420
    %4927 = vmatpush1.bf16.msra.mxu0 %v4419
    %4928 = vmatprep.subr.bf16.mxu0 %v4427
    %4929 = vmatpush1.bf16.msra.mxu0 %v4426
    %4930 = vmatprep.subr.bf16.mxu0 %v4434
    %4931 = vmatpush1.bf16.msra.mxu0 %v4433
    %4932 = vmatprep.subr.bf16.mxu0 %v4441
    %4933 = vmatpush1.bf16.msra.mxu0 %v4440
    %4934 = vmatprep.subr.bf16.mxu0 %v4448
    %4935 = vmatpush1.bf16.msra.mxu0 %v4447
    %4936 = vmatprep.subr.bf16.mxu0 %v4455
    %4937 = vmatpush1.bf16.msra.mxu0 %v4454
    %4938 = vmatprep.subr.bf16.mxu0 %v4462
    %4939 = vmatpush1.bf16.msra.mxu0 %v4461
    %4940 = vmatprep.subr.bf16.mxu0 %v4469
    %4941 = vmatpush1.bf16.msra.mxu0 %v4468
    %4942 = vmatprep.subr.bf16.mxu0 %v4476
    %4943 = vmatpush1.bf16.msra.mxu0 %v4475
    %4944 = vmatprep.subr.bf16.mxu0 %v4483
    %4945 = vmatpush1.bf16.msra.mxu0 %v4482
    %4946 = vmatprep.subr.bf16.mxu0 %v4490
    %4947 = vmatpush1.bf16.msra.mxu0 %v4489
    %4948 = vmatprep.mubr.bf16.mxu0 %v3382
    %4949 = vmatmul.mubr.bf16.gmra.mrb[0].mxu0 %v3381
    %v4950 = vpop.f32.mrb[0].mxu0
    %v4951 = vadd.f32 %v3654, %v4950
    %v4952 = vpop.f32.mrb[0].mxu0
    %v4953 = vadd.f32 %v3658, %v4952
    %v4954 = vpop.f32.mrb[0].mxu0
    %v4955 = vadd.f32 %v3654, %v4954
    %v4956 = vpop.f32.mrb[0].mxu0
    %v4957 = vadd.f32 %v3658, %v4956
    %4958 = vdwg.mxu0
    %4959 = vmatprep.subr.bf16.mxu0 %v4497
    %4960 = vmatpush1.bf16.msra.mxu0 %v4496
    %4961 = vmatprep.subr.bf16.mxu0 %v4504
    %4962 = vmatpush1.bf16.msra.mxu0 %v4503
    %4963 = vmatprep.subr.bf16.mxu0 %v4511
    %4964 = vmatpush1.bf16.msra.mxu0 %v4510
    %4965 = vmatprep.subr.bf16.mxu0 %v4518
    %4966 = vmatpush1.bf16.msra.mxu0 %v4517
    %4967 = vmatprep.subr.bf16.mxu0 %v4525
    %4968 = vmatpush1.bf16.msra.mxu0 %v4524
    %4969 = vmatprep.subr.bf16.mxu0 %v4532
    %4970 = vmatpush1.bf16.msra.mxu0 %v4531
    %4971 = vmatprep.subr.bf16.mxu0 %v4539
    %4972 = vmatpush1.bf16.msra.mxu0 %v4538
    %4973 = vmatprep.subr.bf16.mxu0 %v4546
    %4974 = vmatpush1.bf16.msra.mxu0 %v4545
    %4975 = vmatprep.subr.bf16.mxu0 %v4553
    %4976 = vmatpush1.bf16.msra.mxu0 %v4552
    %4977 = vmatprep.subr.bf16.mxu0 %v4560
    %4978 = vmatpush1.bf16.msra.mxu0 %v4559
    %4979 = vmatprep.subr.bf16.mxu0 %v4567
    %4980 = vmatpush1.bf16.msra.mxu0 %v4566
    %4981 = vmatprep.subr.bf16.mxu0 %v4574
    %4982 = vmatpush1.bf16.msra.mxu0 %v4573
    %4983 = vmatprep.subr.bf16.mxu0 %v4581
    %4984 = vmatpush1.bf16.msra.mxu0 %v4580
    %4985 = vmatprep.subr.bf16.mxu0 %v4588
    %4986 = vmatpush1.bf16.msra.mxu0 %v4587
    %4987 = vmatprep.subr.bf16.mxu0 %v4595
    %4988 = vmatpush1.bf16.msra.mxu0 %v4594
    %4989 = vmatprep.subr.bf16.mxu0 %v4602
    %4990 = vmatpush1.bf16.msra.mxu0 %v4601
    %4991 = vmatprep.mubr.bf16.mxu0 %v3384
    %4992 = vmatmul.mubr.bf16.gmra.mrb[0].mxu0 %v3383
    %v4993 = vpop.f32.mrb[0].mxu0
    %v4994 = vadd.f32 %v4951, %v4993
    %v4995 = vpop.f32.mrb[0].mxu0
    %v4996 = vadd.f32 %v4953, %v4995
    %v4997 = vpop.f32.mrb[0].mxu0
    %v4998 = vadd.f32 %v4955, %v4997
    %v4999 = vpop.f32.mrb[0].mxu0
    %v5000 = vadd.f32 %v4957, %v4999
    %5001 = vdwg.mxu0
    %5002 = vmatprep.subr.bf16.mxu0 %v4387
    %5003 = vmatpush1.bf16.msra.mxu0 %v4386
    %5004 = vmatprep.subr.bf16.mxu0 %v4394
    %5005 = vmatpush1.bf16.msra.mxu0 %v4393
    %5006 = vmatprep.subr.bf16.mxu0 %v4401
    %5007 = vmatpush1.bf16.msra.mxu0 %v4400
    %5008 = vmatprep.subr.bf16.mxu0 %v4408
    %5009 = vmatpush1.bf16.msra.mxu0 %v4407
    %5010 = vmatprep.subr.bf16.mxu0 %v4415
    %5011 = vmatpush1.bf16.msra.mxu0 %v4414
    %5012 = vmatprep.subr.bf16.mxu0 %v4422
    %5013 = vmatpush1.bf16.msra.mxu0 %v4421
    %5014 = vmatprep.subr.bf16.mxu0 %v4429
    %5015 = vmatpush1.bf16.msra.mxu0 %v4428
    %5016 = vmatprep.subr.bf16.mxu0 %v4436
    %5017 = vmatpush1.bf16.msra.mxu0 %v4435
    %5018 = vmatprep.subr.bf16.mxu0 %v4443
    %5019 = vmatpush1.bf16.msra.mxu0 %v4442
    %5020 = vmatprep.subr.bf16.mxu0 %v4450
    %5021 = vmatpush1.bf16.msra.mxu0 %v4449
    %5022 = vmatprep.subr.bf16.mxu0 %v4457
    %5023 = vmatpush1.bf16.msra.mxu0 %v4456
    %5024 = vmatprep.subr.bf16.mxu0 %v4464
    %5025 = vmatpush1.bf16.msra.mxu0 %v4463
    %5026 = vmatprep.subr.bf16.mxu0 %v4471
    %5027 = vmatpush1.bf16.msra.mxu0 %v4470
    %5028 = vmatprep.subr.bf16.mxu0 %v4478
    %5029 = vmatpush1.bf16.msra.mxu0 %v4477
    %5030 = vmatprep.subr.bf16.mxu0 %v4485
    %5031 = vmatpush1.bf16.msra.mxu0 %v4484
    %5032 = vmatprep.subr.bf16.mxu0 %v4492
    %5033 = vmatpush1.bf16.msra.mxu0 %v4491
    %5034 = vmatprep.mubr.bf16.mxu0 %v3382
    %5035 = vmatmul.mubr.bf16.gmra.mrb[0].mxu0 %v3381
    %v5036 = vpop.f32.mrb[0].mxu0
    %v5037 = vadd.f32 %v3662, %v5036
    %v5038 = vpop.f32.mrb[0].mxu0
    %v5039 = vadd.f32 %v3666, %v5038
    %v5040 = vpop.f32.mrb[0].mxu0
    %v5041 = vadd.f32 %v3662, %v5040
    %v5042 = vpop.f32.mrb[0].mxu0
    %v5043 = vadd.f32 %v3666, %v5042
    %5044 = vdwg.mxu0
    %5045 = vmatprep.subr.bf16.mxu0 %v4499
    %5046 = vmatpush1.bf16.msra.mxu0 %v4498
    %5047 = vmatprep.subr.bf16.mxu0 %v4506
    %5048 = vmatpush1.bf16.msra.mxu0 %v4505
    %5049 = vmatprep.subr.bf16.mxu0 %v4513
    %5050 = vmatpush1.bf16.msra.mxu0 %v4512
    %5051 = vmatprep.subr.bf16.mxu0 %v4520
    %5052 = vmatpush1.bf16.msra.mxu0 %v4519
    %5053 = vmatprep.subr.bf16.mxu0 %v4527
    %5054 = vmatpush1.bf16.msra.mxu0 %v4526
    %5055 = vmatprep.subr.bf16.mxu0 %v4534
    %5056 = vmatpush1.bf16.msra.mxu0 %v4533
    %5057 = vmatprep.subr.bf16.mxu0 %v4541
    %5058 = vmatpush1.bf16.msra.mxu0 %v4540
    %5059 = vmatprep.subr.bf16.mxu0 %v4548
    %5060 = vmatpush1.bf16.msra.mxu0 %v4547
    %5061 = vmatprep.subr.bf16.mxu0 %v4555
    %5062 = vmatpush1.bf16.msra.mxu0 %v4554
    %5063 = vmatprep.subr.bf16.mxu0 %v4562
    %5064 = vmatpush1.bf16.msra.mxu0 %v4561
    %5065 = vmatprep.subr.bf16.mxu0 %v4569
    %5066 = vmatpush1.bf16.msra.mxu0 %v4568
    %5067 = vmatprep.subr.bf16.mxu0 %v4576
    %5068 = vmatpush1.bf16.msra.mxu0 %v4575
    %5069 = vmatprep.subr.bf16.mxu0 %v4583
    %5070 = vmatpush1.bf16.msra.mxu0 %v4582
    %5071 = vmatprep.subr.bf16.mxu0 %v4590
    %5072 = vmatpush1.bf16.msra.mxu0 %v4589
    %5073 = vmatprep.subr.bf16.mxu0 %v4597
    %5074 = vmatpush1.bf16.msra.mxu0 %v4596
    %5075 = vmatprep.subr.bf16.mxu0 %v4604
    %5076 = vmatpush1.bf16.msra.mxu0 %v4603
    %5077 = vmatprep.mubr.bf16.mxu0 %v3384
    %5078 = vmatmul.mubr.bf16.gmra.mrb[0].mxu0 %v3383
    %v5079 = vpop.f32.mrb[0].mxu0
    %v5080 = vadd.f32 %v5037, %v5079
    %v5081 = vpop.f32.mrb[0].mxu0
    %v5082 = vadd.f32 %v5039, %v5081
    %v5083 = vpop.f32.mrb[0].mxu0
    %v5084 = vadd.f32 %v5041, %v5083
    %v5085 = vpop.f32.mrb[0].mxu0
    %v5086 = vadd.f32 %v5043, %v5085
    %5087 = vdwg.mxu0
    %5088 = vmatprep.subr.bf16.mxu0 0
    %5089 = vmatpush1.bf16.msra.mxu0 %v4388
    %5090 = vmatprep.subr.bf16.mxu0 0
    %5091 = vmatpush1.bf16.msra.mxu0 %v4395
    %5092 = vmatprep.subr.bf16.mxu0 0
    %5093 = vmatpush1.bf16.msra.mxu0 %v4402
    %5094 = vmatprep.subr.bf16.mxu0 0
    %5095 = vmatpush1.bf16.msra.mxu0 %v4409
    %5096 = vmatprep.subr.bf16.mxu0 0
    %5097 = vmatpush1.bf16.msra.mxu0 %v4416
    %5098 = vmatprep.subr.bf16.mxu0 0
    %5099 = vmatpush1.bf16.msra.mxu0 %v4423
    %5100 = vmatprep.subr.bf16.mxu0 0
    %5101 = vmatpush1.bf16.msra.mxu0 %v4430
    %5102 = vmatprep.subr.bf16.mxu0 0
    %5103 = vmatpush1.bf16.msra.mxu0 %v4437
    %5104 = vmatprep.subr.bf16.mxu0 0
    %5105 = vmatpush1.bf16.msra.mxu0 %v4444
    %5106 = vmatprep.subr.bf16.mxu0 0
    %5107 = vmatpush1.bf16.msra.mxu0 %v4451
    %5108 = vmatprep.subr.bf16.mxu0 0
    %5109 = vmatpush1.bf16.msra.mxu0 %v4458
    %5110 = vmatprep.subr.bf16.mxu0 0
    %5111 = vmatpush1.bf16.msra.mxu0 %v4465
    %5112 = vmatprep.subr.bf16.mxu0 0
    %5113 = vmatpush1.bf16.msra.mxu0 %v4472
    %5114 = vmatprep.subr.bf16.mxu0 0
    %5115 = vmatpush1.bf16.msra.mxu0 %v4479
    %5116 = vmatprep.subr.bf16.mxu0 0
    %5117 = vmatpush1.bf16.msra.mxu0 %v4486
    %5118 = vmatprep.subr.bf16.mxu0 0
    %5119 = vmatpush1.bf16.msra.mxu0 %v4493
    %5120 = vmatprep.mubr.bf16.mxu0 %v3382
    %5121 = vmatmul.mubr.bf16.gmra.mrb[0].mxu0 %v3381
    %v5122 = vpop.f32.mrb[0].mxu0
    %v5123 = vadd.f32 %v3670, %v5122
    %v5124 = vpop.f32.mrb[0].mxu0
    %v5125 = vpop.f32.mrb[0].mxu0
    %v5126 = vadd.f32 %v3670, %v5125
    %v5127 = vpop.f32.mrb[0].mxu0
    %5128 = vdwg.mxu0
    %5129 = vmatprep.subr.bf16.mxu0 0
    %5130 = vmatpush1.bf16.msra.mxu0 %v4500
    %5131 = vmatprep.subr.bf16.mxu0 0
    %5132 = vmatpush1.bf16.msra.mxu0 %v4507
    %5133 = vmatprep.subr.bf16.mxu0 0
    %5134 = vmatpush1.bf16.msra.mxu0 %v4514
    %5135 = vmatprep.subr.bf16.mxu0 0
    %5136 = vmatpush1.bf16.msra.mxu0 %v4521
    %5137 = vmatprep.subr.bf16.mxu0 0
    %5138 = vmatpush1.bf16.msra.mxu0 %v4528
    %5139 = vmatprep.subr.bf16.mxu0 0
    %5140 = vmatpush1.bf16.msra.mxu0 %v4535
    %5141 = vmatprep.subr.bf16.mxu0 0
    %5142 = vmatpush1.bf16.msra.mxu0 %v4542
    %5143 = vmatprep.subr.bf16.mxu0 0
    %5144 = vmatpush1.bf16.msra.mxu0 %v4549
    %5145 = vmatprep.subr.bf16.mxu0 0
    %5146 = vmatpush1.bf16.msra.mxu0 %v4556
    %5147 = vmatprep.subr.bf16.mxu0 0
    %5148 = vmatpush1.bf16.msra.mxu0 %v4563
    %5149 = vmatprep.subr.bf16.mxu0 0
    %5150 = vmatpush1.bf16.msra.mxu0 %v4570
    %5151 = vmatprep.subr.bf16.mxu0 0
    %5152 = vmatpush1.bf16.msra.mxu0 %v4577
    %5153 = vmatprep.subr.bf16.mxu0 0
    %5154 = vmatpush1.bf16.msra.mxu0 %v4584
    %5155 = vmatprep.subr.bf16.mxu0 0
    %5156 = vmatpush1.bf16.msra.mxu0 %v4591
    %5157 = vmatprep.subr.bf16.mxu0 0
    %5158 = vmatpush1.bf16.msra.mxu0 %v4598
    %5159 = vmatprep.subr.bf16.mxu0 0
    %5160 = vmatpush1.bf16.msra.mxu0 %v4605
    %5161 = vmatprep.mubr.bf16.mxu0 %v3384
    %5162 = vmatmul.mubr.bf16.gmra.mrb[0].mxu0 %v3383
    %v5163 = vpop.f32.mrb[0].mxu0
    %v5164 = vadd.f32 %v5123, %v5163
    %v5165 = vpop.f32.mrb[0].mxu0
    %v5166 = vpop.f32.mrb[0].mxu0
    %v5167 = vadd.f32 %v5126, %v5166
    %v5168 = vpop.f32.mrb[0].mxu0
    %5169 = vdwg.mxu0
    %v5170 = vsub.f32 0.0, %v4908
    %v5171 = vsub.f32 0.0, %v4910
    %v5172 = vsub.f32 0.0, %v4994
    %v5173 = vsub.f32 0.0, %v4996
    %v5174 = vsub.f32 0.0, %v5080
    %v5175 = vsub.f32 0.0, %v5082
    %v5176 = vsub.f32 0.0, %v5164
    %v5177 = vsub.f32 0.0, %v4912
    %v5178 = vsub.f32 0.0, %v4914
    %v5179 = vsub.f32 0.0, %v4998
    %v5180 = vsub.f32 0.0, %v5000
    %v5181 = vsub.f32 0.0, %v5084
    %v5182 = vsub.f32 0.0, %v5086
    %v5183 = vsub.f32 0.0, %v5167
    %v5184 = vmul.f32 %v5170, 1.442695
    %v5185 = vpow.pop %v5184
    %v5186 = vmul.f32 %v5171, 1.442695
    %v5187 = vpow.pop %v5186
    %v5188 = vmul.f32 %v5172, 1.442695
    %v5189 = vpow.pop %v5188
    %v5190 = vmul.f32 %v5173, 1.442695
    %v5191 = vpow.pop %v5190
    %v5192 = vmul.f32 %v5174, 1.442695
    %v5193 = vpow.pop %v5192
    %v5194 = vmul.f32 %v5175, 1.442695
    %v5195 = vpow.pop %v5194
    %v5196 = vmul.f32 %v5176, 1.442695
    %v5197 = vpow.pop %v5196
    %v5198 = vmul.f32 %v5177, 1.442695
    %v5199 = vpow.pop %v5198
    %v5200 = vmul.f32 %v5178, 1.442695
    %v5201 = vpow.pop %v5200
    %v5202 = vmul.f32 %v5179, 1.442695
    %v5203 = vpow.pop %v5202
    %v5204 = vmul.f32 %v5180, 1.442695
    %v5205 = vpow.pop %v5204
    %v5206 = vmul.f32 %v5181, 1.442695
    %v5207 = vpow.pop %v5206
    %v5208 = vmul.f32 %v5182, 1.442695
    %v5209 = vpow.pop %v5208
    %v5210 = vmul.f32 %v5183, 1.442695
    %v5211 = vpow.pop %v5210
    %v5212 = vadd.f32 %v5185, 1.0
    %v5213 = vadd.f32 %v5187, 1.0
    %v5214 = vadd.f32 %v5189, 1.0
    %v5215 = vadd.f32 %v5191, 1.0
    %v5216 = vadd.f32 %v5193, 1.0
    %v5217 = vadd.f32 %v5195, 1.0
    %v5218 = vadd.f32 %v5197, 1.0
    %v5219 = vadd.f32 %v5199, 1.0
    %v5220 = vadd.f32 %v5201, 1.0
    %v5221 = vadd.f32 %v5203, 1.0
    %v5222 = vadd.f32 %v5205, 1.0
    %v5223 = vadd.f32 %v5207, 1.0
    %v5224 = vadd.f32 %v5209, 1.0
    %v5225 = vadd.f32 %v5211, 1.0
    %v5226 = vrcp.pop %v5212
    %v5227 = vrcp.pop %v5213
    %v5228 = vrcp.pop %v5214
    %v5229 = vrcp.pop %v5215
    %v5230 = vrcp.pop %v5216
    %v5231 = vrcp.pop %v5217
    %v5232 = vrcp.pop %v5218
    %v5233 = vrcp.pop %v5219
    %v5234 = vrcp.pop %v5220
    %v5235 = vrcp.pop %v5221
    %v5236 = vrcp.pop %v5222
    %v5237 = vrcp.pop %v5223
    %v5238 = vrcp.pop %v5224
    %v5239 = vrcp.pop %v5225
    %v5240 = vmin.f32 %v5226, 1.0
    %v5241 = vmin.f32 %v5227, 1.0
    %v5242 = vmin.f32 %v5228, 1.0
    %v5243 = vmin.f32 %v5229, 1.0
    %v5244 = vmin.f32 %v5230, 1.0
    %v5245 = vmin.f32 %v5231, 1.0
    %v5246 = vmin.f32 %v5232, 1.0
    %v5247 = vmin.f32 %v5233, 1.0
    %v5248 = vmin.f32 %v5234, 1.0
    %v5249 = vmin.f32 %v5235, 1.0
    %v5250 = vmin.f32 %v5236, 1.0
    %v5251 = vmin.f32 %v5237, 1.0
    %v5252 = vmin.f32 %v5238, 1.0
    %v5253 = vmin.f32 %v5239, 1.0
    %v5254 = vpack.c.bf16 %v5247, %v5240
    %v5255 = vpack.c.bf16 %v5248, %v5241
    %v5256 = vpack.c.bf16 %v5249, %v5242
    %v5257 = vpack.c.bf16 %v5250, %v5243
    %v5258 = vpack.c.bf16 %v5251, %v5244
    %v5259 = vpack.c.bf16 %v5252, %v5245
    %v5260 = vpack.c.bf16 %v5253, %v5246
    %v5268 = vunpack.c.l.b16 %v5254
    %v5269 = vunpack.c.l.b16 %v5255
    %v5270 = vunpack.c.l.b16 %v5256
    %v5271 = vunpack.c.l.b16 %v5257
    %v5272 = vunpack.c.l.b16 %v5258
    %v5273 = vunpack.c.l.b16 %v5259
    %v5274 = vunpack.c.l.b16 %v5260
    %v5275 = vunpack.c.h.b16 %v5254
    %v5276 = vunpack.c.h.b16 %v5255
    %v5277 = vunpack.c.h.b16 %v5256
    %v5278 = vunpack.c.h.b16 %v5257
    %v5279 = vunpack.c.h.b16 %v5258
    %v5280 = vunpack.c.h.b16 %v5259
    %v5281 = vunpack.c.h.b16 %v5260
    %v5282 = vpack.c.b16 %v5269, %v5268
    %v5283 = vpack.c.b16 %v5271, %v5270
    %v5284 = vpack.c.b16 %v5273, %v5272
    %v5285 = vpack.c.b16 %v5274, %v5274
    %v5286 = vpack.c.b16 %v5276, %v5275
    %v5287 = vpack.c.b16 %v5278, %v5277
    %v5288 = vpack.c.b16 %v5280, %v5279
    %v5289 = vpack.c.b16 %v5281, %v5281
    %5298 = vst [vmem:[#allocation16] sm:$0xff] %v5282
    %5299 = vst [vmem:[#allocation16 + $0x8] sm:$0xff] %v5283
    %5300 = vst [vmem:[#allocation16 + $0x10] sm:$0xff] %v5284
    %5301 = vst [vmem:[#allocation16 + $0x18] sm:$0xf] %v5285
    %5302 = vst [vmem:[#allocation16 + $0x1c] sm:$0xff] %v5286
    %5303 = vst [vmem:[#allocation16 + $0x24] sm:$0xff] %v5287
    %5304 = vst [vmem:[#allocation16 + $0x2c] sm:$0xff] %v5288
    %5305 = vst [vmem:[#allocation16 + $0x34] sm:$0xf] %v5289
    // Predicated region
    $region90: #{tpu_custom_call.1} parent=1 // pred_check
      _
    $region91: #{tpu_custom_call.1} parent=1 // pred_check_branch
      %5307 = sbr.rel (0) target = $region93
    $region92: #{tpu_custom_call.1} parent=1 // pred_region
      %s5309 = ssub.s32 896, 896
      %5310 = vsyncadd [#allocation4], %s5309
      %s5311 = sshll.u32 [#allocation16], 4
      %s5312 = int_to_ptr.vmem [resolvable:$true] %s5311
      %5317 = dma.vmem_to_hbm [thread:$0]  %s5312, 896, %s14, [#allocation4], 448, 448, 28
    $region93: #{tpu_custom_call.1} parent=1 // pred_fallthru
      _
    // Predicated region
    $region94: #{tpu_custom_call.1} parent=1 // pred_check
      _
    $region95: #{tpu_custom_call.1} parent=1 // pred_check_branch
      %5319 = sbr.rel (0) target = $region97
    $region96: #{tpu_custom_call.1} parent=1 // pred_region
      %s5321 = ssub.s32 256, 256
      %5322 = vsyncadd [#allocation18], %s5321
      %s5323 = sshll.u32 [#allocation17], 4
      %s5324 = int_to_ptr.vmem [resolvable:$true] %s5323
      %5329 = dma.vmem_to_hbm [thread:$0]  %s5324, 256, %s15, [#allocation18], 128, 128, 8
    $region97: #{tpu_custom_call.1} parent=1 // pred_fallthru
      _
    // Predicated region
    $region98: #{tpu_custom_call.1} parent=1 // pred_check
      _
    $region99: #{tpu_custom_call.1} parent=1 // pred_check_branch
      %5331 = sbr.rel (0) target = $region101
    $region100: #{tpu_custom_call.1} parent=1 // pred_region
      %5332 = dma.done [#allocation4], 896
    $region101: #{tpu_custom_call.1} parent=1 // pred_fallthru
      _
    // Predicated region
    $region102: #{tpu_custom_call.1} parent=1 // pred_check
      _
    $region103: #{tpu_custom_call.1} parent=1 // pred_check_branch
      %5334 = sbr.rel (0) target = $region105
    $region104: #{tpu_custom_call.1} parent=1 // pred_region
      %5335 = dma.done [#allocation18], 256
    $region105: #{tpu_custom_call.1} parent=1 // pred_fallthru
      _
    %5336 = vsyncpa [#allocation3], 1
    %5337 = vsyncpa [#allocation6], 1
    %5338 = vsyncpa [#allocation9], 1
    %5339 = vsyncpa [#allocation12], 1
    %5340 = vsyncpa [#allocation15], 1
    %5341 = vsyncpa [#allocation4], 1
    %5342 = vsyncpa [#allocation18], 1

</llo_original>
